<compile_context>
chip_gen: v7x
topology: tpu7x:2x2x1
jax: 0.10.0
libtpu: 0.0.40
codegen_flags: <defaults>
</compile_context>

<pallas_src>
import functools

import numpy as np
import jax
import jax.numpy as jnp
from jax.experimental import pallas as pl
from jax.experimental.pallas import tpu as pltpu

# TODO(synk): gvar.get_value('removed_ratio_s') is a mutable process-global in the
# torch code; it has no JAX equivalent, so it is a trace-time constant here
# (changing it re-specializes / recompiles the kernel).
REMOVED_RATIO_S = 0.5

# Lane width of one chunk of the pairwise-rank computation in the topk epilogue.
# Bounds the (b_blk, n, chunk) intermediates (VPU compares + one XLU lane-reduce
# per chunk) to ~2 MiB even for large spatial_out.  Multiple of the 128-lane vreg.
_TOPK_J_CHUNK = 256


def _stable_ascending_rank(a, j_chunk):
    """rank[b, i] = #{ j : a[b,j] < a[b,i] or (a[b,j] == a[b,i] and j < i) }.

    Equals the position of element i in a stable ascending argsort (index
    tie-break).  Pairwise counting, chunked along the j (lane) axis so the
    (b, n, j_chunk) booleans never blow up VMEM for big spatial_out.
    """
    bb, n = a.shape
    ai = a[:, :, None]                                            # (bb, n, 1)
    idx_i = jax.lax.broadcasted_iota(jnp.int32, (1, n, 1), 1)     # (1, n, 1)
    rank = jnp.zeros((bb, n), jnp.int32)
    for j0 in range(0, n, j_chunk):                               # static trace-time loop
        nj = min(j_chunk, n - j0)
        aj = a[:, None, j0:j0 + nj]                               # (bb, 1, nj)
        idx_j = j0 + jax.lax.broadcasted_iota(jnp.int32, (1, 1, nj), 2)
        before = (aj < ai) | ((aj == ai) & (idx_j < idx_i))       # (bb, n, nj)
        rank = rank + jnp.sum(before.astype(jnp.int32), axis=2)   # XLU lane-reduce
    return rank


def _dynamic_spatial_fc_kernel(x_ref, w1_ref, w2_ref, o_ref, acc_ref, *,
                               inv_c, saved_num, apply_topk):
    # x_ref  : (b_blk, c_blk, hw)   streamed activations (hw lane-dense)
    # w1_ref : (hw, hidden)         resident in VMEM across all grid steps
    # w2_ref : (hidden, n)          resident in VMEM   (n = out_d * out_d)
    # o_ref  : (b_blk, n)           gate output for this batch tile
    # acc_ref: (b_blk, hw) f32      channel-sum accumulator (VMEM scratch)
    k = pl.program_id(1)

    @pl.when(k == 0)
    def _init():
        acc_ref[...] = jnp.zeros_like(acc_ref)

    # Partial channel sum for this chunk.  Cheap VPU/XLU work that hides under
    # the x DMA (the kernel is HBM-bandwidth bound on streaming x).
    x = x_ref[...].astype(jnp.float32)
    acc_ref[...] += jnp.sum(x, axis=1)

    @pl.when(k == pl.num_programs(1) - 1)
    def _epilogue():
        y = acc_ref[...] * inv_c                                   # channel mean, (b_blk, hw)

        # fc: Linear -> ReLU -> Linear -> Sigmoid (no biases).  Tiny MXU work,
        # executed exactly once per batch tile.  Sigmoid's exp goes to the EUP.
        h = jnp.dot(y, w1_ref[...], preferred_element_type=jnp.float32)
        h = jnp.maximum(h, 0.0)
        z = jnp.dot(h, w2_ref[...], preferred_element_type=jnp.float32)
        z = jax.nn.sigmoid(z)                                      # (b_blk, n)

        if apply_topk:
            # spatialTopk: zero the (n - saved_num) LARGEST |z| entries per row,
            # i.e. keep rows whose stable ascending rank is < saved_num
            # (exactly temp.argsort()[:, saved_num:] in the torch code).
            # abs_ after sigmoid is the identity.
            rank = _stable_ascending_rank(z, _TOPK_J_CHUNK)
            z = jnp.where(rank < saved_num, z, 0.0)

        o_ref[...] = z.astype(o_ref.dtype)


def dynamic_spatial_fc_forward(x, w1, w2, *, planes, out_d,
                               removed_ratio=REMOVED_RATIO_S,
                               b_blk=None, c_blk=None):
    """x: (b, c, h, w) NCHW.  w1: (h*w, hidden).  w2: (hidden, out_d*out_d), both
    stored (in_features, out_features).  Returns (b, planes, out_d, out_d)."""
    b, c, h, w = x.shape
    hw = h * w
    spatial_in, hidden = w1.shape
    hidden2, spatial_out = w2.shape
    assert spatial_in == hw and hidden2 == hidden and spatial_out == out_d * out_d

    if removed_ratio == 0:
        saved_num = spatial_out
    else:
        removed_num = int(np.round(spatial_out * removed_ratio))
        saved_num = spatial_out - removed_num

    # --- tile sizes ---------------------------------------------------------
    # Batch tile: second-to-last dim of the 2-D output/scratch blocks must be a
    # multiple of 8 or the full batch.
    if b_blk is None:
        b_blk = 8 if (b % 8 == 0 and b > 8) else b
    assert b % b_blk == 0

    # Channel (reduction) tile: second-to-last dim of the 3-D x block must be a
    # multiple of 8 or the full channel count.  Cap the streamed block at ~2 MiB
    # so double-buffered inputs stay well inside scoped VMEM on v5e / v7x; bigger
    # blocks (v6e) just mean fewer grid steps.
    if c_blk is None:
        c_blk = c
        if c % 8 == 0:
            budget = 2 * 1024 * 1024
            while c_blk > 8 and c_blk % 16 == 0 and b_blk * c_blk * hw * 4 > budget:
                c_blk //= 2
    assert c % c_blk == 0

    x_flat = x.reshape(b, c, hw)

    kernel = functools.partial(
        _dynamic_spatial_fc_kernel,
        inv_c=1.0 / c,
        saved_num=saved_num,
        apply_topk=(removed_ratio != 0),
    )

    grid = (b // b_blk, c // c_blk)

    cost = pl.CostEstimate(
        flops=int(b * c * hw                              # channel mean
                  + 2 * b * hw * hidden                   # fc1
                  + 2 * b * hidden * spatial_out          # fc2
                  + b * spatial_out * spatial_out),       # pairwise rank count
        transcendentals=int(b * spatial_out),
        bytes_accessed=int(x_flat.size * x_flat.dtype.itemsize
                           + w1.size * w1.dtype.itemsize
                           + w2.size * w2.dtype.itemsize
                           + b * spatial_out * 4),
    )

    gate = pl.pallas_call(
        kernel,
        out_shape=jax.ShapeDtypeStruct((b, spatial_out), jnp.float32),
        grid_spec=pltpu.PrefetchScalarGridSpec(
            num_scalar_prefetch=0,
            grid=grid,
            in_specs=[
                pl.BlockSpec((b_blk, c_blk, hw), lambda i, k: (i, k, 0)),
                pl.BlockSpec((spatial_in, hidden), lambda i, k: (0, 0)),   # resident weights
                pl.BlockSpec((hidden, spatial_out), lambda i, k: (0, 0)),  # resident weights
            ],
            out_specs=pl.BlockSpec((b_blk, spatial_out), lambda i, k: (i, 0)),
            scratch_shapes=[pltpu.VMEM((b_blk, hw), jnp.float32)],
        ),
        compiler_params=pltpu.CompilerParams(
            dimension_semantics=("parallel", "arbitrary"),
        ),
        cost_estimate=cost,
    )(x_flat, w1, w2)

    # y.view(b, 1, out_d, out_d).expand(b, planes, out_d, out_d)
    return jnp.broadcast_to(gate.reshape(b, 1, out_d, out_d),
                            (b, planes, out_d, out_d))


if __name__ == "__main__":
    # DynamicSpatialFcModule(spatial=16, planes=4, reduction=4, downsample=None)
    batch, channels, H, W = 2, 16, 16, 16
    spatial = 16                       # in_d == out_d == 16
    planes = 4
    reduction = 4
    spatial_in = spatial * spatial     # 256
    spatial_out = spatial * spatial    # 256
    hidden = spatial_in // reduction   # 64

    key = jax.random.PRNGKey(0)
    kx, k1, k2 = jax.random.split(key, 3)
    x = jax.random.normal(kx, (batch, channels, H, W), dtype=jnp.float32)

    # nn.Linear default init U(-1/sqrt(fan_in), 1/sqrt(fan_in)), stored as (in, out).
    bound1 = 1.0 / np.sqrt(spatial_in)
    bound2 = 1.0 / np.sqrt(hidden)
    w1 = jax.random.uniform(k1, (spatial_in, hidden), jnp.float32, -bound1, bound1)
    w2 = jax.random.uniform(k2, (hidden, spatial_out), jnp.float32, -bound2, bound2)

    # c_blk=8 -> two pipelined channel-reduction grid steps at this small size
    # (exercises the accumulator init / epilogue paths).
    out = dynamic_spatial_fc_forward(x, w1, w2, planes=planes, out_d=spatial, c_blk=8)
    out = jax.block_until_ready(out)
    assert out.shape == (batch, planes, spatial, spatial)

    # Pure-JAX reference with identical semantics.
    y_ref = jnp.mean(x, axis=1).reshape(batch, spatial_in)
    y_ref = jax.nn.sigmoid(jnp.maximum(y_ref @ w1, 0.0) @ w2)
    removed_num = int(np.round(spatial_out * REMOVED_RATIO_S))
    saved_num = spatial_out - removed_num
    order = jnp.argsort(jnp.abs(y_ref), axis=1)            # ascending, stable
    removed_idx = order[:, saved_num:]
    rows = jnp.arange(batch)[:, None]
    y_ref = y_ref.at[rows, removed_idx].set(0.0)
    ref = jnp.broadcast_to(y_ref.reshape(batch, 1, spatial, spatial),
                           (batch, planes, spatial, spatial))
    np.testing.assert_allclose(np.asarray(out), np.asarray(ref), rtol=1e-5, atol=1e-5)

    print("KERNEL_OK")
</pallas_src>

<mosaic_0001>
module attributes {stable_mosaic.version = 11 : i64} {
  func.func @_dynamic_spatial_fc_kernel(%arg0: i32, %arg1: i32, %arg2: memref<2x8x256xf32, #tpu.memory_space<vmem>>, %arg3: memref<256x64xf32, #tpu.memory_space<vmem>>, %arg4: memref<64x256xf32, #tpu.memory_space<vmem>>, %arg5: memref<2x256xf32, #tpu.memory_space<vmem>>, %arg6: memref<2x256xf32, #tpu.memory_space<vmem>>) attributes {dimension_semantics = [#tpu.dimension_semantics<parallel>, #tpu.dimension_semantics<arbitrary>], iteration_bounds = array<i64: 1, 2>, scalar_prefetch = 0 : i64, scratch_operands = 1 : i64, tpu.core_type = #tpu.core_type<tc>, window_params = [{transform_indices = @transform_0, window_bounds = array<i64: 2, 8, 256>}, {pipeline_mode = #tpu.pipeline_mode<synchronous>, transform_indices = @transform_1, window_bounds = array<i64: 256, 64>}, {pipeline_mode = #tpu.pipeline_mode<synchronous>, transform_indices = @transform_2, window_bounds = array<i64: 64, 256>}, {transform_indices = @transform_3, window_bounds = array<i64: 2, 256>}]} {
    %c0_i32 = arith.constant 0 : i32
    %0 = arith.cmpi eq, %arg1, %c0_i32 : i32
    %1 = arith.extui %0 : i1 to i32
    %c0_i32_0 = arith.constant 0 : i32
    %2 = arith.cmpi ne, %1, %c0_i32_0 : i32
    scf.if %2 {
      %cst_8 = arith.constant 0.000000e+00 : f32
      %11 = vector.broadcast %cst_8 : f32 to vector<2x256xf32>
      %c0_9 = arith.constant 0 : index
      %c0_10 = arith.constant 0 : index
      %12 = vector.load %arg6[%c0_9, %c0_10] : memref<2x256xf32, #tpu.memory_space<vmem>>, vector<2x256xf32>
      tpu.vector_store %arg6[%c0_9, %c0_10], %11 {strides = array<i32>} : memref<2x256xf32, #tpu.memory_space<vmem>>, vector<2x256xf32>,
    } else {
    }
    %c0 = arith.constant 0 : index
    %c0_1 = arith.constant 0 : index
    %c0_2 = arith.constant 0 : index
    %3 = vector.load %arg2[%c0, %c0_1, %c0_2] : memref<2x8x256xf32, #tpu.memory_space<vmem>>, vector<2x8x256xf32>
    %c0_3 = arith.constant 0 : index
    %c0_4 = arith.constant 0 : index
    %4 = vector.load %arg6[%c0_3, %c0_4] : memref<2x256xf32, #tpu.memory_space<vmem>>, vector<2x256xf32>
    %cst = arith.constant dense<0.000000e+00> : vector<2x256xf32>
    %5 = vector.multi_reduction <add>, %3, %cst [1] : vector<2x8x256xf32> to vector<2x256xf32>
    %6 = arith.addf %4, %5 : vector<2x256xf32>
    %c0_5 = arith.constant 0 : index
    %c0_6 = arith.constant 0 : index
    %7 = vector.load %arg6[%c0_5, %c0_6] : memref<2x256xf32, #tpu.memory_space<vmem>>, vector<2x256xf32>
    tpu.vector_store %arg6[%c0_5, %c0_6], %6 {strides = array<i32>} : memref<2x256xf32, #tpu.memory_space<vmem>>, vector<2x256xf32>,
    %c1_i32 = arith.constant 1 : i32
    %8 = arith.cmpi eq, %arg1, %c1_i32 : i32
    %9 = arith.extui %8 : i1 to i32
    %c0_i32_7 = arith.constant 0 : i32
    %10 = arith.cmpi ne, %9, %c0_i32_7 : i32
    scf.if %10 {
      %c0_8 = arith.constant 0 : index
      %c0_9 = arith.constant 0 : index
      %11 = vector.load %arg6[%c0_8, %c0_9] : memref<2x256xf32, #tpu.memory_space<vmem>>, vector<2x256xf32>
      %cst_10 = arith.constant 6.250000e-02 : f32
      %12 = vector.broadcast %cst_10 : f32 to vector<2x256xf32>
      %13 = arith.mulf %11, %12 : vector<2x256xf32>
      %c0_11 = arith.constant 0 : index
      %c0_12 = arith.constant 0 : index
      %14 = vector.load %arg3[%c0_11, %c0_12] : memref<256x64xf32, #tpu.memory_space<vmem>>, vector<256x64xf32>
      %cst_13 = arith.constant dense<0.000000e+00> : vector<2x64xf32>
      %15 = tpu.matmul %13, %14, %cst_13 {dimension_numbers = #tpu.dot_dimension_numbers<[1], [0], [0], [1], [0, 0, 1, 1], [], []>} : vector<2x256xf32>, vector<256x64xf32>, vector<2x64xf32> -> vector<2x64xf32>
      %cst_14 = arith.constant 0.000000e+00 : f32
      %16 = vector.broadcast %cst_14 : f32 to vector<2x64xf32>
      %17 = arith.maximumf %15, %16 : vector<2x64xf32>
      %c0_15 = arith.constant 0 : index
      %c0_16 = arith.constant 0 : index
      %18 = vector.load %arg4[%c0_15, %c0_16] : memref<64x256xf32, #tpu.memory_space<vmem>>, vector<64x256xf32>
      %cst_17 = arith.constant dense<0.000000e+00> : vector<2x256xf32>
      %19 = tpu.matmul %17, %18, %cst_17 {dimension_numbers = #tpu.dot_dimension_numbers<[1], [0], [0], [1], [0, 0, 1, 1], [], []>} : vector<2x64xf32>, vector<64x256xf32>, vector<2x256xf32> -> vector<2x256xf32>
      %20 = arith.negf %19 : vector<2x256xf32>
      %21 = math.exp %20 : vector<2x256xf32>
      %cst_18 = arith.constant 1.000000e+00 : f32
      %22 = vector.broadcast %cst_18 : f32 to vector<2x256xf32>
      %23 = arith.addf %22, %21 : vector<2x256xf32>
      %24 = arith.divf %22, %23 : vector<2x256xf32>
      %25 = vector.shape_cast %24 : vector<2x256xf32> to vector<2x256x1xf32>
      %26 = tpu.iota {dimensions = array<i32: 1>} : vector<1x256x1xi32>
      %c0_i32_19 = arith.constant 0 : i32
      %27 = vector.broadcast %c0_i32_19 : i32 to vector<2x256xi32>
      %28 = vector.shape_cast %24 : vector<2x256xf32> to vector<2x1x256xf32>
      %29 = tpu.iota {dimensions = array<i32: 2>} : vector<1x1x256xi32>
      %c0_i32_20 = arith.constant 0 : i32
      %30 = vector.broadcast %c0_i32_20 : i32 to vector<1x1x256xi32>
      %31 = arith.addi %30, %29 : vector<1x1x256xi32>
      %32 = vector.broadcast %28 : vector<2x1x256xf32> to vector<2x256x256xf32>
      %33 = vector.broadcast %25 : vector<2x256x1xf32> to vector<2x256x256xf32>
      %34 = arith.cmpf olt, %32, %33 : vector<2x256x256xf32>
      %35 = vector.broadcast %28 : vector<2x1x256xf32> to vector<2x256x256xf32>
      %36 = vector.broadcast %25 : vector<2x256x1xf32> to vector<2x256x256xf32>
      %37 = arith.cmpf oeq, %35, %36 : vector<2x256x256xf32>
      %38 = vector.broadcast %31 : vector<1x1x256xi32> to vector<1x256x256xi32>
      %39 = vector.broadcast %26 : vector<1x256x1xi32> to vector<1x256x256xi32>
      %40 = arith.cmpi slt, %38, %39 : vector<1x256x256xi32>
      %41 = vector.broadcast %40 : vector<1x256x256xi1> to vector<2x256x256xi1>
      %42 = arith.andi %37, %41 : vector<2x256x256xi1>
      %43 = arith.ori %34, %42 : vector<2x256x256xi1>
      %44 = arith.extui %43 : vector<2x256x256xi1> to vector<2x256x256xi32>
      %cst_21 = arith.constant dense<0> : vector<2x256xi32>
      %45 = vector.multi_reduction <add>, %44, %cst_21 [2] : vector<2x256x256xi32> to vector<2x256xi32>
      %46 = arith.addi %27, %45 : vector<2x256xi32>
      %c128_i32 = arith.constant 128 : i32
      %47 = vector.broadcast %c128_i32 : i32 to vector<2x256xi32>
      %48 = arith.cmpi slt, %46, %47 : vector<2x256xi32>
      %cst_22 = arith.constant 0.000000e+00 : f32
      %49 = vector.broadcast %cst_22 : f32 to vector<2x256xf32>
      %50 = arith.select %48, %24, %49 : vector<2x256xi1>, vector<2x256xf32>
      %c0_23 = arith.constant 0 : index
      %c0_24 = arith.constant 0 : index
      %51 = vector.load %arg5[%c0_23, %c0_24] : memref<2x256xf32, #tpu.memory_space<vmem>>, vector<2x256xf32>
      tpu.vector_store %arg5[%c0_23, %c0_24], %50 {strides = array<i32>} : memref<2x256xf32, #tpu.memory_space<vmem>>, vector<2x256xf32>,
    } else {
    }
    return
  }
  func.func @transform_0(%arg0: i32, %arg1: i32) -> (i32, i32, i32) {
    %c0_i32 = arith.constant 0 : i32
    %c0_i32_0 = arith.constant 0 : i32
    return %arg0, %arg1, %c0_i32 : i32, i32, i32
  }
  func.func @transform_1(%arg0: i32, %arg1: i32) -> (i32, i32) {
    %c0_i32 = arith.constant 0 : i32
    %c0_i32_0 = arith.constant 0 : i32
    %c0_i32_1 = arith.constant 0 : i32
    return %c0_i32, %c0_i32_0 : i32, i32
  }
  func.func @transform_2(%arg0: i32, %arg1: i32) -> (i32, i32) {
    %c0_i32 = arith.constant 0 : i32
    %c0_i32_0 = arith.constant 0 : i32
    %c0_i32_1 = arith.constant 0 : i32
    return %c0_i32, %c0_i32_0 : i32, i32
  }
  func.func @transform_3(%arg0: i32, %arg1: i32) -> (i32, i32) {
    %c0_i32 = arith.constant 0 : i32
    %c0_i32_0 = arith.constant 0 : i32
    return %arg0, %c0_i32 : i32, i32
  }
}

</mosaic_0001>

<llo_original>
// kernel: tpu_custom_call.1
$region0: #{tpu_custom_call.1}
  #allocation0 [shape = 'u32[]', space=smem, size = 0x4, offset = 0x4, fixed_abs, tag = 'smem constant byte address 0x4 - core index']
  #allocation1 [shape = 'u32[144,128]{1,0:T(1,128)}', space=vmem, size = 0x12000, scoped, tag = 'internal scratch']
  #allocation2 [shape = 'f32[2,256]{1,0:T(2,128)}', space=vmem, size = 0x800, scoped, tag = 'scratch operand']
  %s0 = inlined_call_operand.vmem [shape: f32[2,16,256], index: 0, kind: input, shape index: {}]
  %s1 = inlined_call_operand.vmem [shape: f32[256,64], index: 1, kind: input, shape index: {}]
  %s2 = inlined_call_operand.vmem [shape: f32[64,256], index: 2, kind: input, shape index: {}]
  %s3 = inlined_call_operand.hbm [shape: f32[2,256], index: 3, kind: output, shape index: {}]
  %s4 = sld [smem:[#allocation0]]
  $region76: #{tpu_custom_call.1} parent=0
    _
  %s6 = ssub.s32 1, %s4
  %s7 = scalar_select 0, %s6, %s4
  $region1: #{tpu_custom_call.1} parent=0
    #allocation3 [shape = 'u8[32768]{0}', space=vmem, size = 0x8000, scoped, tag = 'input window, operand 0']
    #allocation4 [shape = 'u8[2048]{0}', space=vmem, size = 0x800, scoped, tag = 'output window, operand 0, single buffered']
    #allocation5 [shape = 's32[2]{0}', space=sflag, size = 0x8, scoped, tag = 'scoped memory for tpu_custom_call.1']
    %8 = vsyncpa [#allocation5], 0
    loop: start=0, step=1, limit=4
    $region2: #{tpu_custom_call.1} parent=1 // loop_pre_header
      _
    $region3: #{tpu_custom_call.1} parent=1 // loop_header
      %s10 = sphi 0, %s14
      %p11 = scmp.ge.s32.totalorder %s10, 4
      %s17 = sphi 0, %s29
      %s18 = sphi 0, %s25
      %s19 = sphi 0, %s17
      %s20 = sphi 0, %s18
      %s21 = sphi 0, %s19
      %s22 = sphi 0, %s20
      %s34 = sphi 0, %s36
      %s37 = sphi 0, %s34
      %s38 = sphi 0, %s37
      %s54 = sphi 0, %s38
      %s58 = sphi 0, %s58
      %s60 = sphi 0, %s58
      %s61 = sphi 0, %s60
      %s75 = sphi 0, %s61
      %s79 = sphi 0, %s79
      %s81 = sphi 0, %s79
      %s82 = sphi 0, %s81
      %s96 = sphi 0, %s82
      %s102 = sphi 0, %s104
      %s105 = sphi 0, %s102
      %s106 = sphi 0, %s105
      %s122 = sphi 0, %s106
    $region4: #{tpu_custom_call.1} parent=1 // loop_header_branch
      %13 = sbr.rel (%p11) target = $region8
    $region5: #{tpu_custom_call.1} parent=1 // loop_body
      %s15 = ssub.s32 %s10, 1
      %s16 = ssub.s32 %s10, 2
      %s23 = sadd.s32 1, %s18
      %p24 = scmp.ge.s32.totalorder %s23, 2
      %s25 = scalar_select %p24, 0, %s23
      %s26 = sadd.s32 1, %s17
      %s27 = scalar_select %p24, %s26, %s17
      %p28 = scmp.ge.s32.totalorder %s27, 1
      %s29 = scalar_select %p28, 0, %s27
      %s30 = ssub.s32 %s17, %s29
      %s31 = ssub.s32 %s18, %s25
      %s32 = sor.u32 %s30, %s31
      %p33 = scmp.eq.s32.totalorder %s32, 0
      %s35 = sadd.s32 %s34, 1
      %s36 = scalar_select %p33, %s34, %s35
      %p39 = pneg %p33
      %p40 = scmp.eq.s32.totalorder %s10, 1
      %p41 = por %p39, %p40
      %p42 = scmp.ne.s32.totalorder %s34, %s37
      %p43 = scmp.eq.s32.totalorder %s10, 0
      %p44 = por %p42, %p43
      %p45 = scmp.ne.s32.totalorder %s34, %s37
      %p46 = scmp.eq.s32.totalorder %s15, 1
      %p47 = por %p45, %p46
      %p48 = scmp.ne.s32.totalorder %s37, %s38
      %p49 = scmp.eq.s32.totalorder %s15, 0
      %p50 = por %p48, %p49
      %p51 = scmp.ne.s32.totalorder %s37, %s38
      %p52 = scmp.eq.s32.totalorder %s16, 1
      %p53 = por %p51, %p52
      %p55 = scmp.ne.s32.totalorder %s38, %s54
      %p56 = scmp.eq.s32.totalorder %s16, 0
      %p57 = por %p55, %p56
      %s59 = sadd.s32 %s58, 1
      %p62 = scmp.eq.s32.totalorder %s10, 1
      %p63 = scmp.ne.s32.totalorder %s58, %s60
      %p64 = scmp.eq.s32.totalorder %s10, 0
      %p65 = por %p63, %p64
      %p66 = scmp.ne.s32.totalorder %s58, %s60
      %p67 = scmp.eq.s32.totalorder %s15, 1
      %p68 = por %p66, %p67
      %p69 = scmp.ne.s32.totalorder %s60, %s61
      %p70 = scmp.eq.s32.totalorder %s15, 0
      %p71 = por %p69, %p70
      %p72 = scmp.ne.s32.totalorder %s60, %s61
      %p73 = scmp.eq.s32.totalorder %s16, 1
      %p74 = por %p72, %p73
      %p76 = scmp.ne.s32.totalorder %s61, %s75
      %p77 = scmp.eq.s32.totalorder %s16, 0
      %p78 = por %p76, %p77
      %s80 = sadd.s32 %s79, 1
      %p83 = scmp.eq.s32.totalorder %s10, 1
      %p84 = scmp.ne.s32.totalorder %s79, %s81
      %p85 = scmp.eq.s32.totalorder %s10, 0
      %p86 = por %p84, %p85
      %p87 = scmp.ne.s32.totalorder %s79, %s81
      %p88 = scmp.eq.s32.totalorder %s15, 1
      %p89 = por %p87, %p88
      %p90 = scmp.ne.s32.totalorder %s81, %s82
      %p91 = scmp.eq.s32.totalorder %s15, 0
      %p92 = por %p90, %p91
      %p93 = scmp.ne.s32.totalorder %s81, %s82
      %p94 = scmp.eq.s32.totalorder %s16, 1
      %p95 = por %p93, %p94
      %p97 = scmp.ne.s32.totalorder %s82, %s96
      %p98 = scmp.eq.s32.totalorder %s16, 0
      %p99 = por %p97, %p98
      %s100 = ssub.s32 %s17, %s29
      %p101 = scmp.eq.s32.totalorder %s100, 0
      %s103 = sadd.s32 %s102, 1
      %s104 = scalar_select %p101, %s102, %s103
      %p107 = pneg %p101
      %p108 = scmp.eq.s32.totalorder %s10, 1
      %p109 = por %p107, %p108
      %p110 = scmp.ne.s32.totalorder %s102, %s105
      %p111 = scmp.eq.s32.totalorder %s10, 0
      %p112 = por %p110, %p111
      %p113 = scmp.ne.s32.totalorder %s102, %s105
      %p114 = scmp.eq.s32.totalorder %s15, 1
      %p115 = por %p113, %p114
      %p116 = scmp.ne.s32.totalorder %s105, %s106
      %p117 = scmp.eq.s32.totalorder %s15, 0
      %p118 = por %p116, %p117
      %p119 = scmp.ne.s32.totalorder %s105, %s106
      %p120 = scmp.eq.s32.totalorder %s16, 1
      %p121 = por %p119, %p120
      %p123 = scmp.ne.s32.totalorder %s106, %s122
      %p124 = scmp.eq.s32.totalorder %s16, 0
      %p125 = por %p123, %p124
      %p126 = scmp.le.s32.totalorder 1, %s10
      %p127 = scmp.lt.s32.totalorder %s10, 3
      %p128 = pnand %p126, %p127
      %p129 = pneg %p128
      // Predicated region
      $region9: #{tpu_custom_call.1} parent=5 // pred_check
        _
      $region10: #{tpu_custom_call.1} parent=5 // pred_check_branch
        %131 = sbr.rel (%p128) target = $region12
      $region11: #{tpu_custom_call.1} parent=5 // pred_region
        %s132 = ssub.s32 %s10, 1
        // Predicated region
        $region13: #{tpu_custom_call.1} parent=11 // pred_check
          %p133 = pneg %p71
        $region14: #{tpu_custom_call.1} parent=11 // pred_check_branch
          %135 = sbr.rel (%p133) target = $region16
        $region15: #{tpu_custom_call.1} parent=11 // pred_region
          _
        $region16: #{tpu_custom_call.1} parent=11 // pred_fallthru
          _
        // Predicated region
        $region17: #{tpu_custom_call.1} parent=11 // pred_check
          %p136 = pneg %p92
        $region18: #{tpu_custom_call.1} parent=11 // pred_check_branch
          %138 = sbr.rel (%p136) target = $region20
        $region19: #{tpu_custom_call.1} parent=11 // pred_region
          _
        $region20: #{tpu_custom_call.1} parent=11 // pred_fallthru
          _
      $region12: #{tpu_custom_call.1} parent=5 // pred_fallthru
        _
      %p139 = scmp.lt.s32.totalorder %s10, 2
      // Predicated region
      $region21: #{tpu_custom_call.1} parent=5 // pred_check
        %p140 = pneg %p139
      $region22: #{tpu_custom_call.1} parent=5 // pred_check_branch
        %142 = sbr.rel (%p140) target = $region24
      $region23: #{tpu_custom_call.1} parent=5 // pred_region
        // Predicated region
        $region25: #{tpu_custom_call.1} parent=23 // pred_check
          %p143 = pneg %p44
        $region26: #{tpu_custom_call.1} parent=23 // pred_check_branch
          %145 = sbr.rel (%p143) target = $region28
        $region27: #{tpu_custom_call.1} parent=23 // pred_region
          %s146 = sand.u32 %s34, 1
          %s147 = sand.u32 %s34, 1
          %s148 = smul.addr %s147, 32
          %s149 = scalar_lea.vmem [#allocation3], %s148
          %s150 = smul.u32 2, %s17
          %s151 = smul.addr %s18, 2
          %s152 = smul.addr %s150, 4
          %s153 = sadd.s32 %s151, %s152
          %s154 = smul.addr %s153, 8
          %s155 = scalar_lea.vmem %s0, %s154
          // Predicated region
          $region29: #{tpu_custom_call.1} parent=27 // pred_check
            _
          $region30: #{tpu_custom_call.1} parent=27 // pred_check_branch
            %157 = sbr.rel (0) target = $region32
          $region31: #{tpu_custom_call.1} parent=27 // pred_region
            // Predicated region
            $region33: #{tpu_custom_call.1} parent=31 // pred_check
              _
            $region34: #{tpu_custom_call.1} parent=31 // pred_check_branch
              %159 = sbr.rel (0) target = $region36
            $region35: #{tpu_custom_call.1} parent=31 // pred_region
              loop: start=0, step=1, limit=1
              $region37: #{tpu_custom_call.1} parent=35 // loop_pre_header
                _
              $region38: #{tpu_custom_call.1} parent=35 // loop_header
                %s161 = sphi 0, %s165
                %p162 = scmp.ge.s32.totalorder %s161, 1
                %s166 = sphi %s155, %s155
                %s167 = sphi %s149, %s149
              $region39: #{tpu_custom_call.1} parent=35 // loop_header_branch
                %164 = sbr.rel (%p162) target = $region43
              $region40: #{tpu_custom_call.1} parent=35 // loop_body
                %v168 = vld [vmem:[%s166] sm:$0xff]
                %169 = vst [vmem:[%s167] sm:$0xff] %v168
                %v170 = vld [vmem:[%s166 + $0x8] sm:$0xff]
                %171 = vst [vmem:[%s167 + $0x8] sm:$0xff] %v170
                %v172 = vld [vmem:[%s166 + $0x20] sm:$0xff]
                %173 = vst [vmem:[%s167 + $0x10] sm:$0xff] %v172
                %v174 = vld [vmem:[%s166 + $0x28] sm:$0xff]
                %175 = vst [vmem:[%s167 + $0x18] sm:$0xff] %v174
              $region41: #{tpu_custom_call.1} parent=35 // loop_footer
                %s165 = sadd.s32 1, %s161
              $region42: #{tpu_custom_call.1} parent=35 // loop_footer_branch
                %160 = sbr.rel target = $region38
              $region43: #{tpu_custom_call.1} parent=35 // loop_exit
                _
            $region36: #{tpu_custom_call.1} parent=31 // pred_fallthru
              _
            // Predicated region
            $region44: #{tpu_custom_call.1} parent=31 // pred_check
              _
            $region45: #{tpu_custom_call.1} parent=31 // pred_check_branch
              %177 = sbr.rel target = $region47
            $region46: #{tpu_custom_call.1} parent=31 // pred_region
              _
            $region47: #{tpu_custom_call.1} parent=31 // pred_fallthru
              _
          $region32: #{tpu_custom_call.1} parent=27 // pred_fallthru
            _
          %178 = vnop
        $region28: #{tpu_custom_call.1} parent=23 // pred_fallthru
          _
      $region24: #{tpu_custom_call.1} parent=5 // pred_fallthru
        _
      %p179 = scmp.le.s32.totalorder 1, %s10
      %p180 = scmp.lt.s32.totalorder %s10, 3
      %p181 = pnand %p179, %p180
      %p182 = pneg %p181
      // Predicated region
      $region48: #{tpu_custom_call.1} parent=5 // pred_check
        _
      $region49: #{tpu_custom_call.1} parent=5 // pred_check_branch
        %184 = sbr.rel (%p181) target = $region51
      $region50: #{tpu_custom_call.1} parent=5 // pred_region
        %s185 = ssub.s32 %s10, 1
        %s186 = sand.u32 %s37, 1
        %s187 = sand.u32 %s37, 1
        %s188 = smul.addr %s187, 32
        %s189 = scalar_lea.vmem [#allocation3], %s188
        // Predicated region
        $region52: #{tpu_custom_call.1} parent=50 // pred_check
          %p190 = pneg %p50
        $region53: #{tpu_custom_call.1} parent=50 // pred_check_branch
          %192 = sbr.rel (%p190) target = $region55
        $region54: #{tpu_custom_call.1} parent=50 // pred_region
          _
        $region55: #{tpu_custom_call.1} parent=50 // pred_fallthru
          _
        %s193 = sand.u32 %s37, 1
        %s194 = sand.u32 %s37, 1
        %s195 = smul.addr %s194, 32
        %s196 = scalar_lea.vmem [#allocation3], %s195
        %p197 = pneg %p50
        %p198 = pneg %p47
        %p199 = pneg %p71
        %p200 = pneg %p68
        %p201 = pneg %p92
        %p202 = pneg %p89
        %p203 = pneg %p118
        %p204 = pneg %p115
        %s205 = smul.u32 2, %s19
        %p206 = scmp.eq.s32.totalorder %s20, 0
        // Predicated region
        $region56: #{tpu_custom_call.1} parent=50 // pred_check
          %p207 = pneg %p206
        $region57: #{tpu_custom_call.1} parent=50 // pred_check_branch
          %209 = sbr.rel (%p207) target = $region59
        $region58: #{tpu_custom_call.1} parent=50 // pred_region
          %210 = vst [vmem:[#allocation2] sm:$0xf] 0.0
        $region59: #{tpu_custom_call.1} parent=50 // pred_fallthru
          _
        %v211 = vld [vmem:[%s189] sm:$0xff]
        %v212 = vld [vmem:[%s189 + $0x8] sm:$0xff]
        %v213 = vld [vmem:[%s189 + $0x10] sm:$0xff]
        %v214 = vld [vmem:[%s189 + $0x18] sm:$0xff]
        %v215 = vld [vmem:[#allocation2] sm:$0xf]
        %v216 = vrot.slane %v211, 4
        %v217 = vadd.f32 %v211, %v216
        %v218 = vrot.slane %v217, 2
        %v219 = vadd.f32 %v217, %v218
        %v220 = vrot.slane %v219, 1
        %v221 = vadd.f32 %v219, %v220
        %v222 = vrot.slane %v212, 4
        %v223 = vadd.f32 %v212, %v222
        %v224 = vrot.slane %v223, 2
        %v225 = vadd.f32 %v223, %v224
        %v226 = vrot.slane %v225, 1
        %v227 = vadd.f32 %v225, %v226
        %v228 = vrot.slane %v213, 4
        %v229 = vadd.f32 %v213, %v228
        %v230 = vrot.slane %v229, 2
        %v231 = vadd.f32 %v229, %v230
        %v232 = vrot.slane %v231, 1
        %v233 = vadd.f32 %v231, %v232
        %v234 = vrot.slane %v214, 4
        %v235 = vadd.f32 %v214, %v234
        %v236 = vrot.slane %v235, 2
        %v237 = vadd.f32 %v235, %v236
        %v238 = vrot.slane %v237, 1
        %v239 = vadd.f32 %v237, %v238
        %v244 = vcombine.low %v221, %v227
        %v246 = vunpack.c.l.s4 1983009808
        %v247 = vunpack.c.0.s8 %v246
        %v248 = vlaneseq
        %v249 = vshrl.u32 %v248, 7
        %v250 = vsub.s32 %v247, %v249
        %v251 = vrot.slane %v244, %v250
        %v252 = vcombine.low %v233, %v239
        %v254 = vunpack.c.l.s4 1983009808
        %v255 = vunpack.c.0.s8 %v254
        %v256 = vlaneseq
        %v257 = vshrl.u32 %v256, 7
        %v258 = vsub.s32 %v255, %v257
        %v259 = vrot.slane %v252, %v258
        %vm260 = vcmask 1044484
        %v261 = vsel %vm260, %v251, %v251
        %vm262 = vcmask 1046534
        %v263 = vsel %vm262, %v251, %v261
        %v264 = vrot.slane %v259, 7
        %vm265 = vcmask 1041409
        %v266 = vsel %vm265, %v264, %v263
        %vm267 = vcmask 1043459
        %v268 = vsel %vm267, %v264, %v266
        %vm269 = vcmask 1045509
        %v270 = vsel %vm269, %v264, %v268
        %vm271 = vcmask 1047559
        %v272 = vsel %vm271, %v264, %v270
        %v274 = vadd.f32 %v215, %v272
        %275 = vst [vmem:[#allocation2] sm:$0xf] %v274
        %p276 = scmp.eq.s32.totalorder %s20, 1
        // Predicated region
        $region60: #{tpu_custom_call.1} parent=50 // pred_check
          %p277 = pneg %p276
        $region61: #{tpu_custom_call.1} parent=50 // pred_check_branch
          %279 = sbr.rel (%p277) target = $region63
        $region62: #{tpu_custom_call.1} parent=50 // pred_region
          %v280 = vld [vmem:[#allocation2] sm:$0xf]
          %v281 = vmul.f32 %v280, 0.0625
          %v282 = vld [vmem:[%s1] sm:$0xff]
          %v283 = vld [vmem:[%s1 + $0x8] sm:$0xff]
          %v284 = vld [vmem:[%s1 + $0x10] sm:$0xff]
          %v285 = vld [vmem:[%s1 + $0x18] sm:$0xff]
          %v286 = vld [vmem:[%s1 + $0x20] sm:$0xff]
          %v287 = vld [vmem:[%s1 + $0x28] sm:$0xff]
          %v288 = vld [vmem:[%s1 + $0x30] sm:$0xff]
          %v289 = vld [vmem:[%s1 + $0x38] sm:$0xff]
          %v290 = vld [vmem:[%s1 + $0x40] sm:$0xff]
          %v291 = vld [vmem:[%s1 + $0x48] sm:$0xff]
          %v292 = vld [vmem:[%s1 + $0x50] sm:$0xff]
          %v293 = vld [vmem:[%s1 + $0x58] sm:$0xff]
          %v294 = vld [vmem:[%s1 + $0x60] sm:$0xff]
          %v295 = vld [vmem:[%s1 + $0x68] sm:$0xff]
          %v296 = vld [vmem:[%s1 + $0x70] sm:$0xff]
          %v297 = vld [vmem:[%s1 + $0x78] sm:$0xff]
          %v298 = vld [vmem:[%s1 + $0x80] sm:$0xff]
          %v299 = vld [vmem:[%s1 + $0x88] sm:$0xff]
          %v300 = vld [vmem:[%s1 + $0x90] sm:$0xff]
          %v301 = vld [vmem:[%s1 + $0x98] sm:$0xff]
          %v302 = vld [vmem:[%s1 + $0xa0] sm:$0xff]
          %v303 = vld [vmem:[%s1 + $0xa8] sm:$0xff]
          %v304 = vld [vmem:[%s1 + $0xb0] sm:$0xff]
          %v305 = vld [vmem:[%s1 + $0xb8] sm:$0xff]
          %v306 = vld [vmem:[%s1 + $0xc0] sm:$0xff]
          %v307 = vld [vmem:[%s1 + $0xc8] sm:$0xff]
          %v308 = vld [vmem:[%s1 + $0xd0] sm:$0xff]
          %v309 = vld [vmem:[%s1 + $0xd8] sm:$0xff]
          %v310 = vld [vmem:[%s1 + $0xe0] sm:$0xff]
          %v311 = vld [vmem:[%s1 + $0xe8] sm:$0xff]
          %v312 = vld [vmem:[%s1 + $0xf0] sm:$0xff]
          %v313 = vld [vmem:[%s1 + $0xf8] sm:$0xff]
          %v316 = vunpack.c.l.s4 1983009808
          %v317 = vunpack.c.0.s8 %v316
          %v318 = vlaneseq
          %v319 = vshrl.u32 %v318, 7
          %v320 = vsub.s32 %v317, %v319
          %v321 = vrot.slane %v281, %v320
          %v322 = vcombine.high %v321, %v321
          %325 = vmatprep.subr.mxu0 0.0
          %326 = vmatpush1.msra.mxu0 %v282
          %327 = vmatprep.subr.mxu0 0.0
          %328 = vmatpush1.msra.mxu0 %v283
          %329 = vmatprep.subr.mxu0 0.0
          %330 = vmatpush1.msra.mxu0 %v284
          %331 = vmatprep.subr.mxu0 0.0
          %332 = vmatpush1.msra.mxu0 %v285
          %333 = vmatprep.subr.mxu0 0.0
          %334 = vmatpush1.msra.mxu0 %v286
          %335 = vmatprep.subr.mxu0 0.0
          %336 = vmatpush1.msra.mxu0 %v287
          %337 = vmatprep.subr.mxu0 0.0
          %338 = vmatpush1.msra.mxu0 %v288
          %339 = vmatprep.subr.mxu0 0.0
          %340 = vmatpush1.msra.mxu0 %v289
          %341 = vmatprep.subr.mxu0 0.0
          %342 = vmatpush1.msra.mxu0 %v290
          %343 = vmatprep.subr.mxu0 0.0
          %344 = vmatpush1.msra.mxu0 %v291
          %345 = vmatprep.subr.mxu0 0.0
          %346 = vmatpush1.msra.mxu0 %v292
          %347 = vmatprep.subr.mxu0 0.0
          %348 = vmatpush1.msra.mxu0 %v293
          %349 = vmatprep.subr.mxu0 0.0
          %350 = vmatpush1.msra.mxu0 %v294
          %351 = vmatprep.subr.mxu0 0.0
          %352 = vmatpush1.msra.mxu0 %v295
          %353 = vmatprep.subr.mxu0 0.0
          %354 = vmatpush1.msra.mxu0 %v296
          %355 = vmatprep.subr.mxu0 0.0
          %356 = vmatpush1.msra.mxu0 %v297
          %357 = vmatprep.subr.mxu0 0.0
          %358 = vmatpush1.msra.mxu0 %v298
          %359 = vmatprep.subr.mxu0 0.0
          %360 = vmatpush1.msra.mxu0 %v299
          %361 = vmatprep.subr.mxu0 0.0
          %362 = vmatpush1.msra.mxu0 %v300
          %363 = vmatprep.subr.mxu0 0.0
          %364 = vmatpush1.msra.mxu0 %v301
          %365 = vmatprep.subr.mxu0 0.0
          %366 = vmatpush1.msra.mxu0 %v302
          %367 = vmatprep.subr.mxu0 0.0
          %368 = vmatpush1.msra.mxu0 %v303
          %369 = vmatprep.subr.mxu0 0.0
          %370 = vmatpush1.msra.mxu0 %v304
          %371 = vmatprep.subr.mxu0 0.0
          %372 = vmatpush1.msra.mxu0 %v305
          %373 = vmatprep.subr.mxu0 0.0
          %374 = vmatpush1.msra.mxu0 %v306
          %375 = vmatprep.subr.mxu0 0.0
          %376 = vmatpush1.msra.mxu0 %v307
          %377 = vmatprep.subr.mxu0 0.0
          %378 = vmatpush1.msra.mxu0 %v308
          %379 = vmatprep.subr.mxu0 0.0
          %380 = vmatpush1.msra.mxu0 %v309
          %381 = vmatprep.subr.mxu0 0.0
          %382 = vmatpush1.msra.mxu0 %v310
          %383 = vmatprep.subr.mxu0 0.0
          %384 = vmatpush1.msra.mxu0 %v311
          %385 = vmatprep.subr.mxu0 0.0
          %386 = vmatpush1.msra.mxu0 %v312
          %387 = vmatprep.subr.mxu0 0.0
          %388 = vmatpush1.msra.mxu0 %v313
          %389 = vmatprep.mubr.f32.mxu0 %v322
          %390 = vmatmul.mubr.f32.gmra.mrb[0].mxu0 %v321
          %v391 = vpop.f32.mrb[0].mxu0
          %v392 = vadd.f32 0.0, %v391
          %v393 = vpop.f32.mrb[0].mxu0
          %394 = vdwg.mxu0
          %v395 = vmax.f32 %v392, 0.0
          %v396 = vld [vmem:[%s2] sm:$0xff]
          %v397 = vld [vmem:[%s2 + $0x8] sm:$0xff]
          %v398 = vld [vmem:[%s2 + $0x10] sm:$0xff]
          %v399 = vld [vmem:[%s2 + $0x18] sm:$0xff]
          %v400 = vld [vmem:[%s2 + $0x20] sm:$0xff]
          %v401 = vld [vmem:[%s2 + $0x28] sm:$0xff]
          %v402 = vld [vmem:[%s2 + $0x30] sm:$0xff]
          %v403 = vld [vmem:[%s2 + $0x38] sm:$0xff]
          %v404 = vld [vmem:[%s2 + $0x40] sm:$0xff]
          %v405 = vld [vmem:[%s2 + $0x48] sm:$0xff]
          %v406 = vld [vmem:[%s2 + $0x50] sm:$0xff]
          %v407 = vld [vmem:[%s2 + $0x58] sm:$0xff]
          %v408 = vld [vmem:[%s2 + $0x60] sm:$0xff]
          %v409 = vld [vmem:[%s2 + $0x68] sm:$0xff]
          %v410 = vld [vmem:[%s2 + $0x70] sm:$0xff]
          %v411 = vld [vmem:[%s2 + $0x78] sm:$0xff]
          %vm412 = vcmask 523264
          %v414 = vsel %vm412, %v395, 0
          %416 = vmatprep.subr.mxu0 %v397
          %417 = vmatpush1.msra.mxu0 %v396
          %418 = vmatprep.subr.mxu0 %v399
          %419 = vmatpush1.msra.mxu0 %v398
          %420 = vmatprep.subr.mxu0 %v401
          %421 = vmatpush1.msra.mxu0 %v400
          %422 = vmatprep.subr.mxu0 %v403
          %423 = vmatpush1.msra.mxu0 %v402
          %424 = vmatprep.subr.mxu0 %v405
          %425 = vmatpush1.msra.mxu0 %v404
          %426 = vmatprep.subr.mxu0 %v407
          %427 = vmatpush1.msra.mxu0 %v406
          %428 = vmatprep.subr.mxu0 %v409
          %429 = vmatpush1.msra.mxu0 %v408
          %430 = vmatprep.subr.mxu0 %v411
          %431 = vmatpush1.msra.mxu0 %v410
          %432 = vmatprep.subr.mxu0 0.0
          %433 = vmatpush1.msra.mxu0 0.0
          %434 = vmatprep.subr.mxu0 0.0
          %435 = vmatpush1.msra.mxu0 0.0
          %436 = vmatprep.subr.mxu0 0.0
          %437 = vmatpush1.msra.mxu0 0.0
          %438 = vmatprep.subr.mxu0 0.0
          %439 = vmatpush1.msra.mxu0 0.0
          %440 = vmatprep.subr.mxu0 0.0
          %441 = vmatpush1.msra.mxu0 0.0
          %442 = vmatprep.subr.mxu0 0.0
          %443 = vmatpush1.msra.mxu0 0.0
          %444 = vmatprep.subr.mxu0 0.0
          %445 = vmatpush1.msra.mxu0 0.0
          %446 = vmatprep.subr.mxu0 0.0
          %447 = vmatpush1.msra.mxu0 0.0
          %448 = vmatprep.subr.mxu0 0.0
          %449 = vmatpush1.msra.mxu0 0.0
          %450 = vmatprep.subr.mxu0 0.0
          %451 = vmatpush1.msra.mxu0 0.0
          %452 = vmatprep.subr.mxu0 0.0
          %453 = vmatpush1.msra.mxu0 0.0
          %454 = vmatprep.subr.mxu0 0.0
          %455 = vmatpush1.msra.mxu0 0.0
          %456 = vmatprep.subr.mxu0 0.0
          %457 = vmatpush1.msra.mxu0 0.0
          %458 = vmatprep.subr.mxu0 0.0
          %459 = vmatpush1.msra.mxu0 0.0
          %460 = vmatprep.subr.mxu0 0.0
          %461 = vmatpush1.msra.mxu0 0.0
          %462 = vmatprep.subr.mxu0 0.0
          %463 = vmatpush1.msra.mxu0 0.0
          %464 = vmatprep.subr.mxu0 0.0
          %465 = vmatpush1.msra.mxu0 0.0
          %466 = vmatprep.subr.mxu0 0.0
          %467 = vmatpush1.msra.mxu0 0.0
          %468 = vmatprep.subr.mxu0 0.0
          %469 = vmatpush1.msra.mxu0 0.0
          %470 = vmatprep.subr.mxu0 0.0
          %471 = vmatpush1.msra.mxu0 0.0
          %472 = vmatprep.subr.mxu0 0.0
          %473 = vmatpush1.msra.mxu0 0.0
          %474 = vmatprep.subr.mxu0 0.0
          %475 = vmatpush1.msra.mxu0 0.0
          %476 = vmatprep.subr.mxu0 0.0
          %477 = vmatpush1.msra.mxu0 0.0
          %478 = vmatprep.subr.mxu0 0.0
          %479 = vmatpush1.msra.mxu0 0.0
          %480 = vmatprep.mubr.f32.mxu0 0.0
          %481 = vmatmul.mubr.f32.gmra.mrb[0].mxu0 %v414
          %v482 = vpop.f32.mrb[0].mxu0
          %v483 = vadd.f32 0.0, %v482
          %v484 = vpop.f32.mrb[0].mxu0
          %v485 = vadd.f32 0.0, %v484
          %486 = vdwg.mxu0
          %v487 = vxor.u32 %v483, 2147483648
          %v488 = vxor.u32 %v485, 2147483648
          %v489 = vmul.f32 %v487, 1.442695
          %v490 = vpow.pop %v489
          %v491 = vmul.f32 %v488, 1.442695
          %v492 = vpow.pop %v491
          %v493 = vadd.f32 %v490, 1.0
          %v494 = vadd.f32 %v492, 1.0
          %v495 = vrcp.pop %v493
          %v496 = vmul.f32 1.0, %v495
          %v497 = vrcp.pop %v494
          %v498 = vmul.f32 1.0, %v497
          %v499 = vlaneseq
          %v500 = vshrl.u32 %v499, 7
          %v501 = vsub.s32 0, %v500
          %v502 = vrot.slane %v496, %v501
          %504 = vbcast.lane.b32.xlu0 %v502, 256
          %v505 = vpop.permute.xlu0 %504
          %s507 = sor.u32 256, 8
          %508 = vbcast.lane.b32.xlu0 %v502, %s507
          %v509 = vpop.permute.xlu0 %508
          %s511 = sor.u32 256, 16
          %512 = vbcast.lane.b32.xlu0 %v502, %s511
          %v513 = vpop.permute.xlu0 %512
          %s515 = sor.u32 256, 24
          %516 = vbcast.lane.b32.xlu0 %v502, %s515
          %v517 = vpop.permute.xlu0 %516
          %s519 = sor.u32 256, 32
          %520 = vbcast.lane.b32.xlu0 %v502, %s519
          %v521 = vpop.permute.xlu0 %520
          %s523 = sor.u32 256, 40
          %524 = vbcast.lane.b32.xlu0 %v502, %s523
          %v525 = vpop.permute.xlu0 %524
          %s527 = sor.u32 256, 48
          %528 = vbcast.lane.b32.xlu0 %v502, %s527
          %v529 = vpop.permute.xlu0 %528
          %s531 = sor.u32 256, 56
          %532 = vbcast.lane.b32.xlu0 %v502, %s531
          %v533 = vpop.permute.xlu0 %532
          %s535 = sor.u32 256, 64
          %536 = vbcast.lane.b32.xlu0 %v502, %s535
          %v537 = vpop.permute.xlu0 %536
          %s539 = sor.u32 256, 72
          %540 = vbcast.lane.b32.xlu0 %v502, %s539
          %v541 = vpop.permute.xlu0 %540
          %s543 = sor.u32 256, 80
          %544 = vbcast.lane.b32.xlu0 %v502, %s543
          %v545 = vpop.permute.xlu0 %544
          %s547 = sor.u32 256, 88
          %548 = vbcast.lane.b32.xlu0 %v502, %s547
          %v549 = vpop.permute.xlu0 %548
          %s551 = sor.u32 256, 96
          %552 = vbcast.lane.b32.xlu0 %v502, %s551
          %v553 = vpop.permute.xlu0 %552
          %s555 = sor.u32 256, 104
          %556 = vbcast.lane.b32.xlu0 %v502, %s555
          %v557 = vpop.permute.xlu0 %556
          %s559 = sor.u32 256, 112
          %560 = vbcast.lane.b32.xlu0 %v502, %s559
          %v561 = vpop.permute.xlu0 %560
          %s563 = sor.u32 256, 120
          %564 = vbcast.lane.b32.xlu0 %v502, %s563
          %v565 = vpop.permute.xlu0 %564
          %v566 = vlaneseq
          %v567 = vshrl.u32 %v566, 7
          %v568 = vsub.s32 0, %v567
          %v569 = vrot.slane %v498, %v568
          %571 = vbcast.lane.b32.xlu0 %v569, 256
          %v572 = vpop.permute.xlu0 %571
          %s574 = sor.u32 256, 8
          %575 = vbcast.lane.b32.xlu0 %v569, %s574
          %v576 = vpop.permute.xlu0 %575
          %s578 = sor.u32 256, 16
          %579 = vbcast.lane.b32.xlu0 %v569, %s578
          %v580 = vpop.permute.xlu0 %579
          %s582 = sor.u32 256, 24
          %583 = vbcast.lane.b32.xlu0 %v569, %s582
          %v584 = vpop.permute.xlu0 %583
          %s586 = sor.u32 256, 32
          %587 = vbcast.lane.b32.xlu0 %v569, %s586
          %v588 = vpop.permute.xlu0 %587
          %s590 = sor.u32 256, 40
          %591 = vbcast.lane.b32.xlu0 %v569, %s590
          %v592 = vpop.permute.xlu0 %591
          %s594 = sor.u32 256, 48
          %595 = vbcast.lane.b32.xlu0 %v569, %s594
          %v596 = vpop.permute.xlu0 %595
          %s598 = sor.u32 256, 56
          %599 = vbcast.lane.b32.xlu0 %v569, %s598
          %v600 = vpop.permute.xlu0 %599
          %s602 = sor.u32 256, 64
          %603 = vbcast.lane.b32.xlu0 %v569, %s602
          %v604 = vpop.permute.xlu0 %603
          %s606 = sor.u32 256, 72
          %607 = vbcast.lane.b32.xlu0 %v569, %s606
          %v608 = vpop.permute.xlu0 %607
          %s610 = sor.u32 256, 80
          %611 = vbcast.lane.b32.xlu0 %v569, %s610
          %v612 = vpop.permute.xlu0 %611
          %s614 = sor.u32 256, 88
          %615 = vbcast.lane.b32.xlu0 %v569, %s614
          %v616 = vpop.permute.xlu0 %615
          %s618 = sor.u32 256, 96
          %619 = vbcast.lane.b32.xlu0 %v569, %s618
          %v620 = vpop.permute.xlu0 %619
          %s622 = sor.u32 256, 104
          %623 = vbcast.lane.b32.xlu0 %v569, %s622
          %v624 = vpop.permute.xlu0 %623
          %s626 = sor.u32 256, 112
          %627 = vbcast.lane.b32.xlu0 %v569, %s626
          %v628 = vpop.permute.xlu0 %627
          %s630 = sor.u32 256, 120
          %631 = vbcast.lane.b32.xlu0 %v569, %s630
          %v632 = vpop.permute.xlu0 %631
          %v633 = vlaneseq
          %v634 = vshrl.u32 %v633, 7
          %v635 = vsub.s32 1, %v634
          %v636 = vrot.slane %v496, %v635
          %638 = vbcast.lane.b32.xlu0 %v636, 256
          %v639 = vpop.permute.xlu0 %638
          %s641 = sor.u32 256, 8
          %642 = vbcast.lane.b32.xlu0 %v636, %s641
          %v643 = vpop.permute.xlu0 %642
          %s645 = sor.u32 256, 16
          %646 = vbcast.lane.b32.xlu0 %v636, %s645
          %v647 = vpop.permute.xlu0 %646
          %s649 = sor.u32 256, 24
          %650 = vbcast.lane.b32.xlu0 %v636, %s649
          %v651 = vpop.permute.xlu0 %650
          %s653 = sor.u32 256, 32
          %654 = vbcast.lane.b32.xlu0 %v636, %s653
          %v655 = vpop.permute.xlu0 %654
          %s657 = sor.u32 256, 40
          %658 = vbcast.lane.b32.xlu0 %v636, %s657
          %v659 = vpop.permute.xlu0 %658
          %s661 = sor.u32 256, 48
          %662 = vbcast.lane.b32.xlu0 %v636, %s661
          %v663 = vpop.permute.xlu0 %662
          %s665 = sor.u32 256, 56
          %666 = vbcast.lane.b32.xlu0 %v636, %s665
          %v667 = vpop.permute.xlu0 %666
          %s669 = sor.u32 256, 64
          %670 = vbcast.lane.b32.xlu0 %v636, %s669
          %v671 = vpop.permute.xlu0 %670
          %s673 = sor.u32 256, 72
          %674 = vbcast.lane.b32.xlu0 %v636, %s673
          %v675 = vpop.permute.xlu0 %674
          %s677 = sor.u32 256, 80
          %678 = vbcast.lane.b32.xlu0 %v636, %s677
          %v679 = vpop.permute.xlu0 %678
          %s681 = sor.u32 256, 88
          %682 = vbcast.lane.b32.xlu0 %v636, %s681
          %v683 = vpop.permute.xlu0 %682
          %s685 = sor.u32 256, 96
          %686 = vbcast.lane.b32.xlu0 %v636, %s685
          %v687 = vpop.permute.xlu0 %686
          %s689 = sor.u32 256, 104
          %690 = vbcast.lane.b32.xlu0 %v636, %s689
          %v691 = vpop.permute.xlu0 %690
          %s693 = sor.u32 256, 112
          %694 = vbcast.lane.b32.xlu0 %v636, %s693
          %v695 = vpop.permute.xlu0 %694
          %s697 = sor.u32 256, 120
          %698 = vbcast.lane.b32.xlu0 %v636, %s697
          %v699 = vpop.permute.xlu0 %698
          %v700 = vlaneseq
          %v701 = vshrl.u32 %v700, 7
          %v702 = vsub.s32 1, %v701
          %v703 = vrot.slane %v498, %v702
          %705 = vbcast.lane.b32.xlu0 %v703, 256
          %v706 = vpop.permute.xlu0 %705
          %s708 = sor.u32 256, 8
          %709 = vbcast.lane.b32.xlu0 %v703, %s708
          %v710 = vpop.permute.xlu0 %709
          %s712 = sor.u32 256, 16
          %713 = vbcast.lane.b32.xlu0 %v703, %s712
          %v714 = vpop.permute.xlu0 %713
          %s716 = sor.u32 256, 24
          %717 = vbcast.lane.b32.xlu0 %v703, %s716
          %v718 = vpop.permute.xlu0 %717
          %s720 = sor.u32 256, 32
          %721 = vbcast.lane.b32.xlu0 %v703, %s720
          %v722 = vpop.permute.xlu0 %721
          %s724 = sor.u32 256, 40
          %725 = vbcast.lane.b32.xlu0 %v703, %s724
          %v726 = vpop.permute.xlu0 %725
          %s728 = sor.u32 256, 48
          %729 = vbcast.lane.b32.xlu0 %v703, %s728
          %v730 = vpop.permute.xlu0 %729
          %s732 = sor.u32 256, 56
          %733 = vbcast.lane.b32.xlu0 %v703, %s732
          %v734 = vpop.permute.xlu0 %733
          %s736 = sor.u32 256, 64
          %737 = vbcast.lane.b32.xlu0 %v703, %s736
          %v738 = vpop.permute.xlu0 %737
          %s740 = sor.u32 256, 72
          %741 = vbcast.lane.b32.xlu0 %v703, %s740
          %v742 = vpop.permute.xlu0 %741
          %s744 = sor.u32 256, 80
          %745 = vbcast.lane.b32.xlu0 %v703, %s744
          %v746 = vpop.permute.xlu0 %745
          %s748 = sor.u32 256, 88
          %749 = vbcast.lane.b32.xlu0 %v703, %s748
          %v750 = vpop.permute.xlu0 %749
          %s752 = sor.u32 256, 96
          %753 = vbcast.lane.b32.xlu0 %v703, %s752
          %v754 = vpop.permute.xlu0 %753
          %s756 = sor.u32 256, 104
          %757 = vbcast.lane.b32.xlu0 %v703, %s756
          %v758 = vpop.permute.xlu0 %757
          %s760 = sor.u32 256, 112
          %761 = vbcast.lane.b32.xlu0 %v703, %s760
          %v762 = vpop.permute.xlu0 %761
          %s764 = sor.u32 256, 120
          %765 = vbcast.lane.b32.xlu0 %v703, %s764
          %v766 = vpop.permute.xlu0 %765
          %v767 = vlaneseq
          %v768 = vshrl.u32 %v767, 7
          %v769 = vadd.s32 %v768, 8
          %v770 = vadd.s32 %v768, 16
          %v771 = vadd.s32 %v768, 24
          %v772 = vadd.s32 %v768, 32
          %v773 = vadd.s32 %v768, 40
          %v774 = vadd.s32 %v768, 48
          %v775 = vadd.s32 %v768, 56
          %v776 = vadd.s32 %v768, 64
          %v777 = vadd.s32 %v768, 72
          %v778 = vadd.s32 %v768, 80
          %v779 = vadd.s32 %v768, 88
          %v780 = vadd.s32 %v768, 96
          %v781 = vadd.s32 %v768, 104
          %v782 = vadd.s32 %v768, 112
          %v783 = vadd.s32 %v768, 120
          %v784 = vadd.s32 %v768, 128
          %v785 = vadd.s32 %v768, 136
          %v786 = vadd.s32 %v768, 144
          %v787 = vadd.s32 %v768, 152
          %v788 = vadd.s32 %v768, 160
          %v789 = vadd.s32 %v768, 168
          %v790 = vadd.s32 %v768, 176
          %v791 = vadd.s32 %v768, 184
          %v792 = vadd.s32 %v768, 192
          %v793 = vadd.s32 %v768, 200
          %v794 = vadd.s32 %v768, 208
          %v795 = vadd.s32 %v768, 216
          %v796 = vadd.s32 %v768, 224
          %v797 = vadd.s32 %v768, 232
          %v798 = vadd.s32 %v768, 240
          %v799 = vadd.s32 %v768, 248
          %v802 = vcombine.low %v496, %v498
          %v804 = vunpack.c.l.s4 1966171168
          %v805 = vunpack.c.0.s8 %v804
          %v806 = vlaneseq
          %v807 = vshrl.u32 %v806, 7
          %v808 = vsub.s32 %v805, %v807
          %v809 = vrot.slane %v802, %v808
          %v810 = vcombine.high %v809, %v809
          %v812 = vunpack.c.l.s4 1966171168
          %v813 = vunpack.c.0.s8 %v812
          %v814 = vlaneseq
          %v815 = vshrl.u32 %v814, 7
          %v816 = vsub.s32 %v813, %v815
          %v817 = vrot.slane %v809, %v816
          %v819 = vunpack.c.l.s4 1966171168
          %v820 = vunpack.c.0.s8 %v819
          %v821 = vlaneseq
          %v822 = vshrl.u32 %v821, 7
          %v823 = vsub.s32 %v820, %v822
          %v824 = vrot.slane %v810, %v823
          %v825 = vlaneseq
          %v826 = vand.u32 %v825, 127
          %v827 = vadd.s32 %v826, 128
          %v828 = vlaneseq
          %v829 = vshrl.u32 %v828, 7
          %v830 = vsub.s32 0, %v829
          %v831 = vrot.slane %v817, %v830
          %v832 = vlaneseq
          %v833 = vshrl.u32 %v832, 7
          %v834 = vsub.s32 1, %v833
          %v835 = vrot.slane %v817, %v834
          %v836 = vlaneseq
          %v837 = vshrl.u32 %v836, 7
          %v838 = vsub.s32 0, %v837
          %v839 = vrot.slane %v824, %v838
          %v840 = vlaneseq
          %v841 = vshrl.u32 %v840, 7
          %v842 = vsub.s32 1, %v841
          %v843 = vrot.slane %v824, %v842
          %vm848 = vcmp.lt.f32.partialorder %v831, %v505
          %vm849 = vcmp.lt.f32.partialorder %v835, %v505
          %vm850 = vcmp.lt.f32.partialorder %v831, %v509
          %vm851 = vcmp.lt.f32.partialorder %v835, %v509
          %vm852 = vcmp.lt.f32.partialorder %v831, %v513
          %vm853 = vcmp.lt.f32.partialorder %v835, %v513
          %vm854 = vcmp.lt.f32.partialorder %v831, %v517
          %vm855 = vcmp.lt.f32.partialorder %v835, %v517
          %vm856 = vcmp.lt.f32.partialorder %v831, %v521
          %vm857 = vcmp.lt.f32.partialorder %v835, %v521
          %vm858 = vcmp.lt.f32.partialorder %v831, %v525
          %vm859 = vcmp.lt.f32.partialorder %v835, %v525
          %vm860 = vcmp.lt.f32.partialorder %v831, %v529
          %vm861 = vcmp.lt.f32.partialorder %v835, %v529
          %vm862 = vcmp.lt.f32.partialorder %v831, %v533
          %vm863 = vcmp.lt.f32.partialorder %v835, %v533
          %vm864 = vcmp.lt.f32.partialorder %v831, %v537
          %vm865 = vcmp.lt.f32.partialorder %v835, %v537
          %vm866 = vcmp.lt.f32.partialorder %v831, %v541
          %vm867 = vcmp.lt.f32.partialorder %v835, %v541
          %vm868 = vcmp.lt.f32.partialorder %v831, %v545
          %vm869 = vcmp.lt.f32.partialorder %v835, %v545
          %vm870 = vcmp.lt.f32.partialorder %v831, %v549
          %vm871 = vcmp.lt.f32.partialorder %v835, %v549
          %vm872 = vcmp.lt.f32.partialorder %v831, %v553
          %vm873 = vcmp.lt.f32.partialorder %v835, %v553
          %vm874 = vcmp.lt.f32.partialorder %v831, %v557
          %vm875 = vcmp.lt.f32.partialorder %v835, %v557
          %vm876 = vcmp.lt.f32.partialorder %v831, %v561
          %vm877 = vcmp.lt.f32.partialorder %v835, %v561
          %vm878 = vcmp.lt.f32.partialorder %v831, %v565
          %vm879 = vcmp.lt.f32.partialorder %v835, %v565
          %vm880 = vcmp.lt.f32.partialorder %v831, %v572
          %vm881 = vcmp.lt.f32.partialorder %v835, %v572
          %vm882 = vcmp.lt.f32.partialorder %v831, %v576
          %vm883 = vcmp.lt.f32.partialorder %v835, %v576
          %vm884 = vcmp.lt.f32.partialorder %v831, %v580
          %vm885 = vcmp.lt.f32.partialorder %v835, %v580
          %vm886 = vcmp.lt.f32.partialorder %v831, %v584
          %vm887 = vcmp.lt.f32.partialorder %v835, %v584
          %vm888 = vcmp.lt.f32.partialorder %v831, %v588
          %vm889 = vcmp.lt.f32.partialorder %v835, %v588
          %vm890 = vcmp.lt.f32.partialorder %v831, %v592
          %vm891 = vcmp.lt.f32.partialorder %v835, %v592
          %vm892 = vcmp.lt.f32.partialorder %v831, %v596
          %vm893 = vcmp.lt.f32.partialorder %v835, %v596
          %vm894 = vcmp.lt.f32.partialorder %v831, %v600
          %vm895 = vcmp.lt.f32.partialorder %v835, %v600
          %vm896 = vcmp.lt.f32.partialorder %v831, %v604
          %vm897 = vcmp.lt.f32.partialorder %v835, %v604
          %vm898 = vcmp.lt.f32.partialorder %v831, %v608
          %vm899 = vcmp.lt.f32.partialorder %v835, %v608
          %vm900 = vcmp.lt.f32.partialorder %v831, %v612
          %vm901 = vcmp.lt.f32.partialorder %v835, %v612
          %vm902 = vcmp.lt.f32.partialorder %v831, %v616
          %vm903 = vcmp.lt.f32.partialorder %v835, %v616
          %vm904 = vcmp.lt.f32.partialorder %v831, %v620
          %vm905 = vcmp.lt.f32.partialorder %v835, %v620
          %vm906 = vcmp.lt.f32.partialorder %v831, %v624
          %vm907 = vcmp.lt.f32.partialorder %v835, %v624
          %vm908 = vcmp.lt.f32.partialorder %v831, %v628
          %vm909 = vcmp.lt.f32.partialorder %v835, %v628
          %vm910 = vcmp.lt.f32.partialorder %v831, %v632
          %vm911 = vcmp.lt.f32.partialorder %v835, %v632
          %vm912 = vcmp.lt.f32.partialorder %v839, %v639
          %vm913 = vcmp.lt.f32.partialorder %v843, %v639
          %vm914 = vcmp.lt.f32.partialorder %v839, %v643
          %vm915 = vcmp.lt.f32.partialorder %v843, %v643
          %vm916 = vcmp.lt.f32.partialorder %v839, %v647
          %vm917 = vcmp.lt.f32.partialorder %v843, %v647
          %vm918 = vcmp.lt.f32.partialorder %v839, %v651
          %vm919 = vcmp.lt.f32.partialorder %v843, %v651
          %vm920 = vcmp.lt.f32.partialorder %v839, %v655
          %vm921 = vcmp.lt.f32.partialorder %v843, %v655
          %vm922 = vcmp.lt.f32.partialorder %v839, %v659
          %vm923 = vcmp.lt.f32.partialorder %v843, %v659
          %vm924 = vcmp.lt.f32.partialorder %v839, %v663
          %vm925 = vcmp.lt.f32.partialorder %v843, %v663
          %vm926 = vcmp.lt.f32.partialorder %v839, %v667
          %vm927 = vcmp.lt.f32.partialorder %v843, %v667
          %vm928 = vcmp.lt.f32.partialorder %v839, %v671
          %vm929 = vcmp.lt.f32.partialorder %v843, %v671
          %vm930 = vcmp.lt.f32.partialorder %v839, %v675
          %vm931 = vcmp.lt.f32.partialorder %v843, %v675
          %vm932 = vcmp.lt.f32.partialorder %v839, %v679
          %vm933 = vcmp.lt.f32.partialorder %v843, %v679
          %vm934 = vcmp.lt.f32.partialorder %v839, %v683
          %vm935 = vcmp.lt.f32.partialorder %v843, %v683
          %vm936 = vcmp.lt.f32.partialorder %v839, %v687
          %vm937 = vcmp.lt.f32.partialorder %v843, %v687
          %vm938 = vcmp.lt.f32.partialorder %v839, %v691
          %vm939 = vcmp.lt.f32.partialorder %v843, %v691
          %vm940 = vcmp.lt.f32.partialorder %v839, %v695
          %vm941 = vcmp.lt.f32.partialorder %v843, %v695
          %vm942 = vcmp.lt.f32.partialorder %v839, %v699
          %vm943 = vcmp.lt.f32.partialorder %v843, %v699
          %vm944 = vcmp.lt.f32.partialorder %v839, %v706
          %vm945 = vcmp.lt.f32.partialorder %v843, %v706
          %vm946 = vcmp.lt.f32.partialorder %v839, %v710
          %vm947 = vcmp.lt.f32.partialorder %v843, %v710
          %vm948 = vcmp.lt.f32.partialorder %v839, %v714
          %vm949 = vcmp.lt.f32.partialorder %v843, %v714
          %vm950 = vcmp.lt.f32.partialorder %v839, %v718
          %vm951 = vcmp.lt.f32.partialorder %v843, %v718
          %vm952 = vcmp.lt.f32.partialorder %v839, %v722
          %vm953 = vcmp.lt.f32.partialorder %v843, %v722
          %vm954 = vcmp.lt.f32.partialorder %v839, %v726
          %vm955 = vcmp.lt.f32.partialorder %v843, %v726
          %vm956 = vcmp.lt.f32.partialorder %v839, %v730
          %vm957 = vcmp.lt.f32.partialorder %v843, %v730
          %vm958 = vcmp.lt.f32.partialorder %v839, %v734
          %vm959 = vcmp.lt.f32.partialorder %v843, %v734
          %vm960 = vcmp.lt.f32.partialorder %v839, %v738
          %vm961 = vcmp.lt.f32.partialorder %v843, %v738
          %vm962 = vcmp.lt.f32.partialorder %v839, %v742
          %vm963 = vcmp.lt.f32.partialorder %v843, %v742
          %vm964 = vcmp.lt.f32.partialorder %v839, %v746
          %vm965 = vcmp.lt.f32.partialorder %v843, %v746
          %vm966 = vcmp.lt.f32.partialorder %v839, %v750
          %vm967 = vcmp.lt.f32.partialorder %v843, %v750
          %vm968 = vcmp.lt.f32.partialorder %v839, %v754
          %vm969 = vcmp.lt.f32.partialorder %v843, %v754
          %vm970 = vcmp.lt.f32.partialorder %v839, %v758
          %vm971 = vcmp.lt.f32.partialorder %v843, %v758
          %vm972 = vcmp.lt.f32.partialorder %v839, %v762
          %vm973 = vcmp.lt.f32.partialorder %v843, %v762
          %vm974 = vcmp.lt.f32.partialorder %v839, %v766
          %vm975 = vcmp.lt.f32.partialorder %v843, %v766
          %vm976 = vcmp.eq.f32.partialorder %v831, %v505
          %vm977 = vcmp.eq.f32.partialorder %v835, %v505
          %vm978 = vcmp.eq.f32.partialorder %v831, %v509
          %vm979 = vcmp.eq.f32.partialorder %v835, %v509
          %vm980 = vcmp.eq.f32.partialorder %v831, %v513
          %vm981 = vcmp.eq.f32.partialorder %v835, %v513
          %vm982 = vcmp.eq.f32.partialorder %v831, %v517
          %vm983 = vcmp.eq.f32.partialorder %v835, %v517
          %vm984 = vcmp.eq.f32.partialorder %v831, %v521
          %vm985 = vcmp.eq.f32.partialorder %v835, %v521
          %vm986 = vcmp.eq.f32.partialorder %v831, %v525
          %vm987 = vcmp.eq.f32.partialorder %v835, %v525
          %vm988 = vcmp.eq.f32.partialorder %v831, %v529
          %vm989 = vcmp.eq.f32.partialorder %v835, %v529
          %vm990 = vcmp.eq.f32.partialorder %v831, %v533
          %vm991 = vcmp.eq.f32.partialorder %v835, %v533
          %vm992 = vcmp.eq.f32.partialorder %v831, %v537
          %vm993 = vcmp.eq.f32.partialorder %v835, %v537
          %vm994 = vcmp.eq.f32.partialorder %v831, %v541
          %vm995 = vcmp.eq.f32.partialorder %v835, %v541
          %vm996 = vcmp.eq.f32.partialorder %v831, %v545
          %vm997 = vcmp.eq.f32.partialorder %v835, %v545
          %vm998 = vcmp.eq.f32.partialorder %v831, %v549
          %vm999 = vcmp.eq.f32.partialorder %v835, %v549
          %vm1000 = vcmp.eq.f32.partialorder %v831, %v553
          %vm1001 = vcmp.eq.f32.partialorder %v835, %v553
          %vm1002 = vcmp.eq.f32.partialorder %v831, %v557
          %vm1003 = vcmp.eq.f32.partialorder %v835, %v557
          %vm1004 = vcmp.eq.f32.partialorder %v831, %v561
          %vm1005 = vcmp.eq.f32.partialorder %v835, %v561
          %vm1006 = vcmp.eq.f32.partialorder %v831, %v565
          %vm1007 = vcmp.eq.f32.partialorder %v835, %v565
          %vm1008 = vcmp.eq.f32.partialorder %v831, %v572
          %vm1009 = vcmp.eq.f32.partialorder %v835, %v572
          %vm1010 = vcmp.eq.f32.partialorder %v831, %v576
          %vm1011 = vcmp.eq.f32.partialorder %v835, %v576
          %vm1012 = vcmp.eq.f32.partialorder %v831, %v580
          %vm1013 = vcmp.eq.f32.partialorder %v835, %v580
          %vm1014 = vcmp.eq.f32.partialorder %v831, %v584
          %vm1015 = vcmp.eq.f32.partialorder %v835, %v584
          %vm1016 = vcmp.eq.f32.partialorder %v831, %v588
          %vm1017 = vcmp.eq.f32.partialorder %v835, %v588
          %vm1018 = vcmp.eq.f32.partialorder %v831, %v592
          %vm1019 = vcmp.eq.f32.partialorder %v835, %v592
          %vm1020 = vcmp.eq.f32.partialorder %v831, %v596
          %vm1021 = vcmp.eq.f32.partialorder %v835, %v596
          %vm1022 = vcmp.eq.f32.partialorder %v831, %v600
          %vm1023 = vcmp.eq.f32.partialorder %v835, %v600
          %vm1024 = vcmp.eq.f32.partialorder %v831, %v604
          %vm1025 = vcmp.eq.f32.partialorder %v835, %v604
          %vm1026 = vcmp.eq.f32.partialorder %v831, %v608
          %vm1027 = vcmp.eq.f32.partialorder %v835, %v608
          %vm1028 = vcmp.eq.f32.partialorder %v831, %v612
          %vm1029 = vcmp.eq.f32.partialorder %v835, %v612
          %vm1030 = vcmp.eq.f32.partialorder %v831, %v616
          %vm1031 = vcmp.eq.f32.partialorder %v835, %v616
          %vm1032 = vcmp.eq.f32.partialorder %v831, %v620
          %vm1033 = vcmp.eq.f32.partialorder %v835, %v620
          %vm1034 = vcmp.eq.f32.partialorder %v831, %v624
          %vm1035 = vcmp.eq.f32.partialorder %v835, %v624
          %vm1036 = vcmp.eq.f32.partialorder %v831, %v628
          %vm1037 = vcmp.eq.f32.partialorder %v835, %v628
          %vm1038 = vcmp.eq.f32.partialorder %v831, %v632
          %vm1039 = vcmp.eq.f32.partialorder %v835, %v632
          %vm1040 = vcmp.eq.f32.partialorder %v839, %v639
          %vm1041 = vcmp.eq.f32.partialorder %v843, %v639
          %vm1042 = vcmp.eq.f32.partialorder %v839, %v643
          %vm1043 = vcmp.eq.f32.partialorder %v843, %v643
          %vm1044 = vcmp.eq.f32.partialorder %v839, %v647
          %vm1045 = vcmp.eq.f32.partialorder %v843, %v647
          %vm1046 = vcmp.eq.f32.partialorder %v839, %v651
          %vm1047 = vcmp.eq.f32.partialorder %v843, %v651
          %vm1048 = vcmp.eq.f32.partialorder %v839, %v655
          %vm1049 = vcmp.eq.f32.partialorder %v843, %v655
          %vm1050 = vcmp.eq.f32.partialorder %v839, %v659
          %vm1051 = vcmp.eq.f32.partialorder %v843, %v659
          %vm1052 = vcmp.eq.f32.partialorder %v839, %v663
          %vm1053 = vcmp.eq.f32.partialorder %v843, %v663
          %vm1054 = vcmp.eq.f32.partialorder %v839, %v667
          %vm1055 = vcmp.eq.f32.partialorder %v843, %v667
          %vm1056 = vcmp.eq.f32.partialorder %v839, %v671
          %vm1057 = vcmp.eq.f32.partialorder %v843, %v671
          %vm1058 = vcmp.eq.f32.partialorder %v839, %v675
          %vm1059 = vcmp.eq.f32.partialorder %v843, %v675
          %vm1060 = vcmp.eq.f32.partialorder %v839, %v679
          %vm1061 = vcmp.eq.f32.partialorder %v843, %v679
          %vm1062 = vcmp.eq.f32.partialorder %v839, %v683
          %vm1063 = vcmp.eq.f32.partialorder %v843, %v683
          %vm1064 = vcmp.eq.f32.partialorder %v839, %v687
          %vm1065 = vcmp.eq.f32.partialorder %v843, %v687
          %vm1066 = vcmp.eq.f32.partialorder %v839, %v691
          %vm1067 = vcmp.eq.f32.partialorder %v843, %v691
          %vm1068 = vcmp.eq.f32.partialorder %v839, %v695
          %vm1069 = vcmp.eq.f32.partialorder %v843, %v695
          %vm1070 = vcmp.eq.f32.partialorder %v839, %v699
          %vm1071 = vcmp.eq.f32.partialorder %v843, %v699
          %vm1072 = vcmp.eq.f32.partialorder %v839, %v706
          %vm1073 = vcmp.eq.f32.partialorder %v843, %v706
          %vm1074 = vcmp.eq.f32.partialorder %v839, %v710
          %vm1075 = vcmp.eq.f32.partialorder %v843, %v710
          %vm1076 = vcmp.eq.f32.partialorder %v839, %v714
          %vm1077 = vcmp.eq.f32.partialorder %v843, %v714
          %vm1078 = vcmp.eq.f32.partialorder %v839, %v718
          %vm1079 = vcmp.eq.f32.partialorder %v843, %v718
          %vm1080 = vcmp.eq.f32.partialorder %v839, %v722
          %vm1081 = vcmp.eq.f32.partialorder %v843, %v722
          %vm1082 = vcmp.eq.f32.partialorder %v839, %v726
          %vm1083 = vcmp.eq.f32.partialorder %v843, %v726
          %vm1084 = vcmp.eq.f32.partialorder %v839, %v730
          %vm1085 = vcmp.eq.f32.partialorder %v843, %v730
          %vm1086 = vcmp.eq.f32.partialorder %v839, %v734
          %vm1087 = vcmp.eq.f32.partialorder %v843, %v734
          %vm1088 = vcmp.eq.f32.partialorder %v839, %v738
          %vm1089 = vcmp.eq.f32.partialorder %v843, %v738
          %vm1090 = vcmp.eq.f32.partialorder %v839, %v742
          %vm1091 = vcmp.eq.f32.partialorder %v843, %v742
          %vm1092 = vcmp.eq.f32.partialorder %v839, %v746
          %vm1093 = vcmp.eq.f32.partialorder %v843, %v746
          %vm1094 = vcmp.eq.f32.partialorder %v839, %v750
          %vm1095 = vcmp.eq.f32.partialorder %v843, %v750
          %vm1096 = vcmp.eq.f32.partialorder %v839, %v754
          %vm1097 = vcmp.eq.f32.partialorder %v843, %v754
          %vm1098 = vcmp.eq.f32.partialorder %v839, %v758
          %vm1099 = vcmp.eq.f32.partialorder %v843, %v758
          %vm1100 = vcmp.eq.f32.partialorder %v839, %v762
          %vm1101 = vcmp.eq.f32.partialorder %v843, %v762
          %vm1102 = vcmp.eq.f32.partialorder %v839, %v766
          %vm1103 = vcmp.eq.f32.partialorder %v843, %v766
          %vm1104 = vcmp.lt.s32.totalorder %v826, %v768
          %vm1105 = vcmp.lt.s32.totalorder %v827, %v768
          %vm1106 = vcmp.lt.s32.totalorder %v826, %v769
          %vm1107 = vcmp.lt.s32.totalorder %v827, %v769
          %vm1108 = vcmp.lt.s32.totalorder %v826, %v770
          %vm1109 = vcmp.lt.s32.totalorder %v827, %v770
          %vm1110 = vcmp.lt.s32.totalorder %v826, %v771
          %vm1111 = vcmp.lt.s32.totalorder %v827, %v771
          %vm1112 = vcmp.lt.s32.totalorder %v826, %v772
          %vm1113 = vcmp.lt.s32.totalorder %v827, %v772
          %vm1114 = vcmp.lt.s32.totalorder %v826, %v773
          %vm1115 = vcmp.lt.s32.totalorder %v827, %v773
          %vm1116 = vcmp.lt.s32.totalorder %v826, %v774
          %vm1117 = vcmp.lt.s32.totalorder %v827, %v774
          %vm1118 = vcmp.lt.s32.totalorder %v826, %v775
          %vm1119 = vcmp.lt.s32.totalorder %v827, %v775
          %vm1120 = vcmp.lt.s32.totalorder %v826, %v776
          %vm1121 = vcmp.lt.s32.totalorder %v827, %v776
          %vm1122 = vcmp.lt.s32.totalorder %v826, %v777
          %vm1123 = vcmp.lt.s32.totalorder %v827, %v777
          %vm1124 = vcmp.lt.s32.totalorder %v826, %v778
          %vm1125 = vcmp.lt.s32.totalorder %v827, %v778
          %vm1126 = vcmp.lt.s32.totalorder %v826, %v779
          %vm1127 = vcmp.lt.s32.totalorder %v827, %v779
          %vm1128 = vcmp.lt.s32.totalorder %v826, %v780
          %vm1129 = vcmp.lt.s32.totalorder %v827, %v780
          %vm1130 = vcmp.lt.s32.totalorder %v826, %v781
          %vm1131 = vcmp.lt.s32.totalorder %v827, %v781
          %vm1132 = vcmp.lt.s32.totalorder %v826, %v782
          %vm1133 = vcmp.lt.s32.totalorder %v827, %v782
          %vm1134 = vcmp.lt.s32.totalorder %v826, %v783
          %vm1135 = vcmp.lt.s32.totalorder %v827, %v783
          %vm1136 = vcmp.lt.s32.totalorder %v826, %v784
          %vm1137 = vcmp.lt.s32.totalorder %v827, %v784
          %vm1138 = vcmp.lt.s32.totalorder %v826, %v785
          %vm1139 = vcmp.lt.s32.totalorder %v827, %v785
          %vm1140 = vcmp.lt.s32.totalorder %v826, %v786
          %vm1141 = vcmp.lt.s32.totalorder %v827, %v786
          %vm1142 = vcmp.lt.s32.totalorder %v826, %v787
          %vm1143 = vcmp.lt.s32.totalorder %v827, %v787
          %vm1144 = vcmp.lt.s32.totalorder %v826, %v788
          %vm1145 = vcmp.lt.s32.totalorder %v827, %v788
          %vm1146 = vcmp.lt.s32.totalorder %v826, %v789
          %vm1147 = vcmp.lt.s32.totalorder %v827, %v789
          %vm1148 = vcmp.lt.s32.totalorder %v826, %v790
          %vm1149 = vcmp.lt.s32.totalorder %v827, %v790
          %vm1150 = vcmp.lt.s32.totalorder %v826, %v791
          %vm1151 = vcmp.lt.s32.totalorder %v827, %v791
          %vm1152 = vcmp.lt.s32.totalorder %v826, %v792
          %vm1153 = vcmp.lt.s32.totalorder %v827, %v792
          %vm1154 = vcmp.lt.s32.totalorder %v826, %v793
          %vm1155 = vcmp.lt.s32.totalorder %v827, %v793
          %vm1156 = vcmp.lt.s32.totalorder %v826, %v794
          %vm1157 = vcmp.lt.s32.totalorder %v827, %v794
          %vm1158 = vcmp.lt.s32.totalorder %v826, %v795
          %vm1159 = vcmp.lt.s32.totalorder %v827, %v795
          %vm1160 = vcmp.lt.s32.totalorder %v826, %v796
          %vm1161 = vcmp.lt.s32.totalorder %v827, %v796
          %vm1162 = vcmp.lt.s32.totalorder %v826, %v797
          %vm1163 = vcmp.lt.s32.totalorder %v827, %v797
          %vm1164 = vcmp.lt.s32.totalorder %v826, %v798
          %vm1165 = vcmp.lt.s32.totalorder %v827, %v798
          %vm1166 = vcmp.lt.s32.totalorder %v826, %v799
          %vm1167 = vcmp.lt.s32.totalorder %v827, %v799
          %v1168 = vsel %vm1104, 1, 0
          %v1169 = vsel %vm1105, 1, 0
          %v1170 = vsel %vm1106, 1, 0
          %v1171 = vsel %vm1107, 1, 0
          %v1172 = vsel %vm1108, 1, 0
          %v1173 = vsel %vm1109, 1, 0
          %v1174 = vsel %vm1110, 1, 0
          %v1175 = vsel %vm1111, 1, 0
          %v1176 = vsel %vm1112, 1, 0
          %v1177 = vsel %vm1113, 1, 0
          %v1178 = vsel %vm1114, 1, 0
          %v1179 = vsel %vm1115, 1, 0
          %v1180 = vsel %vm1116, 1, 0
          %v1181 = vsel %vm1117, 1, 0
          %v1182 = vsel %vm1118, 1, 0
          %v1183 = vsel %vm1119, 1, 0
          %v1184 = vsel %vm1120, 1, 0
          %v1185 = vsel %vm1121, 1, 0
          %v1186 = vsel %vm1122, 1, 0
          %v1187 = vsel %vm1123, 1, 0
          %v1188 = vsel %vm1124, 1, 0
          %v1189 = vsel %vm1125, 1, 0
          %v1190 = vsel %vm1126, 1, 0
          %v1191 = vsel %vm1127, 1, 0
          %v1192 = vsel %vm1128, 1, 0
          %v1193 = vsel %vm1129, 1, 0
          %v1194 = vsel %vm1130, 1, 0
          %v1195 = vsel %vm1131, 1, 0
          %v1196 = vsel %vm1132, 1, 0
          %v1197 = vsel %vm1133, 1, 0
          %v1198 = vsel %vm1134, 1, 0
          %v1199 = vsel %vm1135, 1, 0
          %v1200 = vsel %vm1136, 1, 0
          %v1201 = vsel %vm1137, 1, 0
          %v1202 = vsel %vm1138, 1, 0
          %v1203 = vsel %vm1139, 1, 0
          %v1204 = vsel %vm1140, 1, 0
          %v1205 = vsel %vm1141, 1, 0
          %v1206 = vsel %vm1142, 1, 0
          %v1207 = vsel %vm1143, 1, 0
          %v1208 = vsel %vm1144, 1, 0
          %v1209 = vsel %vm1145, 1, 0
          %v1210 = vsel %vm1146, 1, 0
          %v1211 = vsel %vm1147, 1, 0
          %v1212 = vsel %vm1148, 1, 0
          %v1213 = vsel %vm1149, 1, 0
          %v1214 = vsel %vm1150, 1, 0
          %v1215 = vsel %vm1151, 1, 0
          %v1216 = vsel %vm1152, 1, 0
          %v1217 = vsel %vm1153, 1, 0
          %v1218 = vsel %vm1154, 1, 0
          %v1219 = vsel %vm1155, 1, 0
          %v1220 = vsel %vm1156, 1, 0
          %v1221 = vsel %vm1157, 1, 0
          %v1222 = vsel %vm1158, 1, 0
          %v1223 = vsel %vm1159, 1, 0
          %v1224 = vsel %vm1160, 1, 0
          %v1225 = vsel %vm1161, 1, 0
          %v1226 = vsel %vm1162, 1, 0
          %v1227 = vsel %vm1163, 1, 0
          %v1228 = vsel %vm1164, 1, 0
          %v1229 = vsel %vm1165, 1, 0
          %v1230 = vsel %vm1166, 1, 0
          %v1231 = vsel %vm1167, 1, 0
          %vm1232 = vcmp.eq.s32.totalorder %v1168, 1
          %vm1233 = vcmp.eq.s32.totalorder %v1169, 1
          %vm1234 = vcmp.eq.s32.totalorder %v1170, 1
          %vm1235 = vcmp.eq.s32.totalorder %v1171, 1
          %vm1236 = vcmp.eq.s32.totalorder %v1172, 1
          %vm1237 = vcmp.eq.s32.totalorder %v1173, 1
          %vm1238 = vcmp.eq.s32.totalorder %v1174, 1
          %vm1239 = vcmp.eq.s32.totalorder %v1175, 1
          %vm1240 = vcmp.eq.s32.totalorder %v1176, 1
          %vm1241 = vcmp.eq.s32.totalorder %v1177, 1
          %vm1242 = vcmp.eq.s32.totalorder %v1178, 1
          %vm1243 = vcmp.eq.s32.totalorder %v1179, 1
          %vm1244 = vcmp.eq.s32.totalorder %v1180, 1
          %vm1245 = vcmp.eq.s32.totalorder %v1181, 1
          %vm1246 = vcmp.eq.s32.totalorder %v1182, 1
          %vm1247 = vcmp.eq.s32.totalorder %v1183, 1
          %vm1248 = vcmp.eq.s32.totalorder %v1184, 1
          %vm1249 = vcmp.eq.s32.totalorder %v1185, 1
          %vm1250 = vcmp.eq.s32.totalorder %v1186, 1
          %vm1251 = vcmp.eq.s32.totalorder %v1187, 1
          %vm1252 = vcmp.eq.s32.totalorder %v1188, 1
          %vm1253 = vcmp.eq.s32.totalorder %v1189, 1
          %vm1254 = vcmp.eq.s32.totalorder %v1190, 1
          %vm1255 = vcmp.eq.s32.totalorder %v1191, 1
          %vm1256 = vcmp.eq.s32.totalorder %v1192, 1
          %vm1257 = vcmp.eq.s32.totalorder %v1193, 1
          %vm1258 = vcmp.eq.s32.totalorder %v1194, 1
          %vm1259 = vcmp.eq.s32.totalorder %v1195, 1
          %vm1260 = vcmp.eq.s32.totalorder %v1196, 1
          %vm1261 = vcmp.eq.s32.totalorder %v1197, 1
          %vm1262 = vcmp.eq.s32.totalorder %v1198, 1
          %vm1263 = vcmp.eq.s32.totalorder %v1199, 1
          %vm1264 = vcmp.eq.s32.totalorder %v1200, 1
          %vm1265 = vcmp.eq.s32.totalorder %v1201, 1
          %vm1266 = vcmp.eq.s32.totalorder %v1202, 1
          %vm1267 = vcmp.eq.s32.totalorder %v1203, 1
          %vm1268 = vcmp.eq.s32.totalorder %v1204, 1
          %vm1269 = vcmp.eq.s32.totalorder %v1205, 1
          %vm1270 = vcmp.eq.s32.totalorder %v1206, 1
          %vm1271 = vcmp.eq.s32.totalorder %v1207, 1
          %vm1272 = vcmp.eq.s32.totalorder %v1208, 1
          %vm1273 = vcmp.eq.s32.totalorder %v1209, 1
          %vm1274 = vcmp.eq.s32.totalorder %v1210, 1
          %vm1275 = vcmp.eq.s32.totalorder %v1211, 1
          %vm1276 = vcmp.eq.s32.totalorder %v1212, 1
          %vm1277 = vcmp.eq.s32.totalorder %v1213, 1
          %vm1278 = vcmp.eq.s32.totalorder %v1214, 1
          %vm1279 = vcmp.eq.s32.totalorder %v1215, 1
          %vm1280 = vcmp.eq.s32.totalorder %v1216, 1
          %vm1281 = vcmp.eq.s32.totalorder %v1217, 1
          %vm1282 = vcmp.eq.s32.totalorder %v1218, 1
          %vm1283 = vcmp.eq.s32.totalorder %v1219, 1
          %vm1284 = vcmp.eq.s32.totalorder %v1220, 1
          %vm1285 = vcmp.eq.s32.totalorder %v1221, 1
          %vm1286 = vcmp.eq.s32.totalorder %v1222, 1
          %vm1287 = vcmp.eq.s32.totalorder %v1223, 1
          %vm1288 = vcmp.eq.s32.totalorder %v1224, 1
          %vm1289 = vcmp.eq.s32.totalorder %v1225, 1
          %vm1290 = vcmp.eq.s32.totalorder %v1226, 1
          %vm1291 = vcmp.eq.s32.totalorder %v1227, 1
          %vm1292 = vcmp.eq.s32.totalorder %v1228, 1
          %vm1293 = vcmp.eq.s32.totalorder %v1229, 1
          %vm1294 = vcmp.eq.s32.totalorder %v1230, 1
          %vm1295 = vcmp.eq.s32.totalorder %v1231, 1
          %vm1296 = vmand %vm976, %vm1232
          %vm1297 = vmand %vm977, %vm1233
          %vm1298 = vmand %vm978, %vm1234
          %vm1299 = vmand %vm979, %vm1235
          %vm1300 = vmand %vm980, %vm1236
          %vm1301 = vmand %vm981, %vm1237
          %vm1302 = vmand %vm982, %vm1238
          %vm1303 = vmand %vm983, %vm1239
          %vm1304 = vmand %vm984, %vm1240
          %vm1305 = vmand %vm985, %vm1241
          %vm1306 = vmand %vm986, %vm1242
          %vm1307 = vmand %vm987, %vm1243
          %vm1308 = vmand %vm988, %vm1244
          %vm1309 = vmand %vm989, %vm1245
          %vm1310 = vmand %vm990, %vm1246
          %vm1311 = vmand %vm991, %vm1247
          %vm1312 = vmand %vm992, %vm1248
          %vm1313 = vmand %vm993, %vm1249
          %vm1314 = vmand %vm994, %vm1250
          %vm1315 = vmand %vm995, %vm1251
          %vm1316 = vmand %vm996, %vm1252
          %vm1317 = vmand %vm997, %vm1253
          %vm1318 = vmand %vm998, %vm1254
          %vm1319 = vmand %vm999, %vm1255
          %vm1320 = vmand %vm1000, %vm1256
          %vm1321 = vmand %vm1001, %vm1257
          %vm1322 = vmand %vm1002, %vm1258
          %vm1323 = vmand %vm1003, %vm1259
          %vm1324 = vmand %vm1004, %vm1260
          %vm1325 = vmand %vm1005, %vm1261
          %vm1326 = vmand %vm1006, %vm1262
          %vm1327 = vmand %vm1007, %vm1263
          %vm1328 = vmand %vm1008, %vm1264
          %vm1329 = vmand %vm1009, %vm1265
          %vm1330 = vmand %vm1010, %vm1266
          %vm1331 = vmand %vm1011, %vm1267
          %vm1332 = vmand %vm1012, %vm1268
          %vm1333 = vmand %vm1013, %vm1269
          %vm1334 = vmand %vm1014, %vm1270
          %vm1335 = vmand %vm1015, %vm1271
          %vm1336 = vmand %vm1016, %vm1272
          %vm1337 = vmand %vm1017, %vm1273
          %vm1338 = vmand %vm1018, %vm1274
          %vm1339 = vmand %vm1019, %vm1275
          %vm1340 = vmand %vm1020, %vm1276
          %vm1341 = vmand %vm1021, %vm1277
          %vm1342 = vmand %vm1022, %vm1278
          %vm1343 = vmand %vm1023, %vm1279
          %vm1344 = vmand %vm1024, %vm1280
          %vm1345 = vmand %vm1025, %vm1281
          %vm1346 = vmand %vm1026, %vm1282
          %vm1347 = vmand %vm1027, %vm1283
          %vm1348 = vmand %vm1028, %vm1284
          %vm1349 = vmand %vm1029, %vm1285
          %vm1350 = vmand %vm1030, %vm1286
          %vm1351 = vmand %vm1031, %vm1287
          %vm1352 = vmand %vm1032, %vm1288
          %vm1353 = vmand %vm1033, %vm1289
          %vm1354 = vmand %vm1034, %vm1290
          %vm1355 = vmand %vm1035, %vm1291
          %vm1356 = vmand %vm1036, %vm1292
          %vm1357 = vmand %vm1037, %vm1293
          %vm1358 = vmand %vm1038, %vm1294
          %vm1359 = vmand %vm1039, %vm1295
          %vm1360 = vmand %vm1040, %vm1232
          %vm1361 = vmand %vm1041, %vm1233
          %vm1362 = vmand %vm1042, %vm1234
          %vm1363 = vmand %vm1043, %vm1235
          %vm1364 = vmand %vm1044, %vm1236
          %vm1365 = vmand %vm1045, %vm1237
          %vm1366 = vmand %vm1046, %vm1238
          %vm1367 = vmand %vm1047, %vm1239
          %vm1368 = vmand %vm1048, %vm1240
          %vm1369 = vmand %vm1049, %vm1241
          %vm1370 = vmand %vm1050, %vm1242
          %vm1371 = vmand %vm1051, %vm1243
          %vm1372 = vmand %vm1052, %vm1244
          %vm1373 = vmand %vm1053, %vm1245
          %vm1374 = vmand %vm1054, %vm1246
          %vm1375 = vmand %vm1055, %vm1247
          %vm1376 = vmand %vm1056, %vm1248
          %vm1377 = vmand %vm1057, %vm1249
          %vm1378 = vmand %vm1058, %vm1250
          %vm1379 = vmand %vm1059, %vm1251
          %vm1380 = vmand %vm1060, %vm1252
          %vm1381 = vmand %vm1061, %vm1253
          %vm1382 = vmand %vm1062, %vm1254
          %vm1383 = vmand %vm1063, %vm1255
          %vm1384 = vmand %vm1064, %vm1256
          %vm1385 = vmand %vm1065, %vm1257
          %vm1386 = vmand %vm1066, %vm1258
          %vm1387 = vmand %vm1067, %vm1259
          %vm1388 = vmand %vm1068, %vm1260
          %vm1389 = vmand %vm1069, %vm1261
          %vm1390 = vmand %vm1070, %vm1262
          %vm1391 = vmand %vm1071, %vm1263
          %vm1392 = vmand %vm1072, %vm1264
          %vm1393 = vmand %vm1073, %vm1265
          %vm1394 = vmand %vm1074, %vm1266
          %vm1395 = vmand %vm1075, %vm1267
          %vm1396 = vmand %vm1076, %vm1268
          %vm1397 = vmand %vm1077, %vm1269
          %vm1398 = vmand %vm1078, %vm1270
          %vm1399 = vmand %vm1079, %vm1271
          %vm1400 = vmand %vm1080, %vm1272
          %vm1401 = vmand %vm1081, %vm1273
          %vm1402 = vmand %vm1082, %vm1274
          %vm1403 = vmand %vm1083, %vm1275
          %vm1404 = vmand %vm1084, %vm1276
          %vm1405 = vmand %vm1085, %vm1277
          %vm1406 = vmand %vm1086, %vm1278
          %vm1407 = vmand %vm1087, %vm1279
          %vm1408 = vmand %vm1088, %vm1280
          %vm1409 = vmand %vm1089, %vm1281
          %vm1410 = vmand %vm1090, %vm1282
          %vm1411 = vmand %vm1091, %vm1283
          %vm1412 = vmand %vm1092, %vm1284
          %vm1413 = vmand %vm1093, %vm1285
          %vm1414 = vmand %vm1094, %vm1286
          %vm1415 = vmand %vm1095, %vm1287
          %vm1416 = vmand %vm1096, %vm1288
          %vm1417 = vmand %vm1097, %vm1289
          %vm1418 = vmand %vm1098, %vm1290
          %vm1419 = vmand %vm1099, %vm1291
          %vm1420 = vmand %vm1100, %vm1292
          %vm1421 = vmand %vm1101, %vm1293
          %vm1422 = vmand %vm1102, %vm1294
          %vm1423 = vmand %vm1103, %vm1295
          %vm1424 = vmor %vm848, %vm1296
          %vm1425 = vmor %vm849, %vm1297
          %vm1426 = vmor %vm850, %vm1298
          %vm1427 = vmor %vm851, %vm1299
          %vm1428 = vmor %vm852, %vm1300
          %vm1429 = vmor %vm853, %vm1301
          %vm1430 = vmor %vm854, %vm1302
          %vm1431 = vmor %vm855, %vm1303
          %vm1432 = vmor %vm856, %vm1304
          %vm1433 = vmor %vm857, %vm1305
          %vm1434 = vmor %vm858, %vm1306
          %vm1435 = vmor %vm859, %vm1307
          %vm1436 = vmor %vm860, %vm1308
          %vm1437 = vmor %vm861, %vm1309
          %vm1438 = vmor %vm862, %vm1310
          %vm1439 = vmor %vm863, %vm1311
          %vm1440 = vmor %vm864, %vm1312
          %vm1441 = vmor %vm865, %vm1313
          %vm1442 = vmor %vm866, %vm1314
          %vm1443 = vmor %vm867, %vm1315
          %vm1444 = vmor %vm868, %vm1316
          %vm1445 = vmor %vm869, %vm1317
          %vm1446 = vmor %vm870, %vm1318
          %vm1447 = vmor %vm871, %vm1319
          %vm1448 = vmor %vm872, %vm1320
          %vm1449 = vmor %vm873, %vm1321
          %vm1450 = vmor %vm874, %vm1322
          %vm1451 = vmor %vm875, %vm1323
          %vm1452 = vmor %vm876, %vm1324
          %vm1453 = vmor %vm877, %vm1325
          %vm1454 = vmor %vm878, %vm1326
          %vm1455 = vmor %vm879, %vm1327
          %vm1456 = vmor %vm880, %vm1328
          %vm1457 = vmor %vm881, %vm1329
          %vm1458 = vmor %vm882, %vm1330
          %vm1459 = vmor %vm883, %vm1331
          %vm1460 = vmor %vm884, %vm1332
          %vm1461 = vmor %vm885, %vm1333
          %vm1462 = vmor %vm886, %vm1334
          %vm1463 = vmor %vm887, %vm1335
          %vm1464 = vmor %vm888, %vm1336
          %vm1465 = vmor %vm889, %vm1337
          %vm1466 = vmor %vm890, %vm1338
          %vm1467 = vmor %vm891, %vm1339
          %vm1468 = vmor %vm892, %vm1340
          %vm1469 = vmor %vm893, %vm1341
          %vm1470 = vmor %vm894, %vm1342
          %vm1471 = vmor %vm895, %vm1343
          %vm1472 = vmor %vm896, %vm1344
          %vm1473 = vmor %vm897, %vm1345
          %vm1474 = vmor %vm898, %vm1346
          %vm1475 = vmor %vm899, %vm1347
          %vm1476 = vmor %vm900, %vm1348
          %vm1477 = vmor %vm901, %vm1349
          %vm1478 = vmor %vm902, %vm1350
          %vm1479 = vmor %vm903, %vm1351
          %vm1480 = vmor %vm904, %vm1352
          %vm1481 = vmor %vm905, %vm1353
          %vm1482 = vmor %vm906, %vm1354
          %vm1483 = vmor %vm907, %vm1355
          %vm1484 = vmor %vm908, %vm1356
          %vm1485 = vmor %vm909, %vm1357
          %vm1486 = vmor %vm910, %vm1358
          %vm1487 = vmor %vm911, %vm1359
          %vm1488 = vmor %vm912, %vm1360
          %vm1489 = vmor %vm913, %vm1361
          %vm1490 = vmor %vm914, %vm1362
          %vm1491 = vmor %vm915, %vm1363
          %vm1492 = vmor %vm916, %vm1364
          %vm1493 = vmor %vm917, %vm1365
          %vm1494 = vmor %vm918, %vm1366
          %vm1495 = vmor %vm919, %vm1367
          %vm1496 = vmor %vm920, %vm1368
          %vm1497 = vmor %vm921, %vm1369
          %vm1498 = vmor %vm922, %vm1370
          %vm1499 = vmor %vm923, %vm1371
          %vm1500 = vmor %vm924, %vm1372
          %vm1501 = vmor %vm925, %vm1373
          %vm1502 = vmor %vm926, %vm1374
          %vm1503 = vmor %vm927, %vm1375
          %vm1504 = vmor %vm928, %vm1376
          %vm1505 = vmor %vm929, %vm1377
          %vm1506 = vmor %vm930, %vm1378
          %vm1507 = vmor %vm931, %vm1379
          %vm1508 = vmor %vm932, %vm1380
          %vm1509 = vmor %vm933, %vm1381
          %vm1510 = vmor %vm934, %vm1382
          %vm1511 = vmor %vm935, %vm1383
          %vm1512 = vmor %vm936, %vm1384
          %vm1513 = vmor %vm937, %vm1385
          %vm1514 = vmor %vm938, %vm1386
          %vm1515 = vmor %vm939, %vm1387
          %vm1516 = vmor %vm940, %vm1388
          %vm1517 = vmor %vm941, %vm1389
          %vm1518 = vmor %vm942, %vm1390
          %vm1519 = vmor %vm943, %vm1391
          %vm1520 = vmor %vm944, %vm1392
          %vm1521 = vmor %vm945, %vm1393
          %vm1522 = vmor %vm946, %vm1394
          %vm1523 = vmor %vm947, %vm1395
          %vm1524 = vmor %vm948, %vm1396
          %vm1525 = vmor %vm949, %vm1397
          %vm1526 = vmor %vm950, %vm1398
          %vm1527 = vmor %vm951, %vm1399
          %vm1528 = vmor %vm952, %vm1400
          %vm1529 = vmor %vm953, %vm1401
          %vm1530 = vmor %vm954, %vm1402
          %vm1531 = vmor %vm955, %vm1403
          %vm1532 = vmor %vm956, %vm1404
          %vm1533 = vmor %vm957, %vm1405
          %vm1534 = vmor %vm958, %vm1406
          %vm1535 = vmor %vm959, %vm1407
          %vm1536 = vmor %vm960, %vm1408
          %vm1537 = vmor %vm961, %vm1409
          %vm1538 = vmor %vm962, %vm1410
          %vm1539 = vmor %vm963, %vm1411
          %vm1540 = vmor %vm964, %vm1412
          %vm1541 = vmor %vm965, %vm1413
          %vm1542 = vmor %vm966, %vm1414
          %vm1543 = vmor %vm967, %vm1415
          %vm1544 = vmor %vm968, %vm1416
          %vm1545 = vmor %vm969, %vm1417
          %vm1546 = vmor %vm970, %vm1418
          %vm1547 = vmor %vm971, %vm1419
          %vm1548 = vmor %vm972, %vm1420
          %vm1549 = vmor %vm973, %vm1421
          %vm1550 = vmor %vm974, %vm1422
          %vm1551 = vmor %vm975, %vm1423
          %v1552 = vsel %vm1424, 1, 0
          %v1553 = vsel %vm1425, 1, 0
          %v1554 = vsel %vm1426, 1, 0
          %v1555 = vsel %vm1427, 1, 0
          %v1556 = vsel %vm1428, 1, 0
          %v1557 = vsel %vm1429, 1, 0
          %v1558 = vsel %vm1430, 1, 0
          %v1559 = vsel %vm1431, 1, 0
          %v1560 = vsel %vm1432, 1, 0
          %v1561 = vsel %vm1433, 1, 0
          %v1562 = vsel %vm1434, 1, 0
          %v1563 = vsel %vm1435, 1, 0
          %v1564 = vsel %vm1436, 1, 0
          %v1565 = vsel %vm1437, 1, 0
          %v1566 = vsel %vm1438, 1, 0
          %v1567 = vsel %vm1439, 1, 0
          %v1568 = vsel %vm1440, 1, 0
          %v1569 = vsel %vm1441, 1, 0
          %v1570 = vsel %vm1442, 1, 0
          %v1571 = vsel %vm1443, 1, 0
          %v1572 = vsel %vm1444, 1, 0
          %v1573 = vsel %vm1445, 1, 0
          %v1574 = vsel %vm1446, 1, 0
          %v1575 = vsel %vm1447, 1, 0
          %v1576 = vsel %vm1448, 1, 0
          %v1577 = vsel %vm1449, 1, 0
          %v1578 = vsel %vm1450, 1, 0
          %v1579 = vsel %vm1451, 1, 0
          %v1580 = vsel %vm1452, 1, 0
          %v1581 = vsel %vm1453, 1, 0
          %v1582 = vsel %vm1454, 1, 0
          %v1583 = vsel %vm1455, 1, 0
          %v1584 = vsel %vm1456, 1, 0
          %v1585 = vsel %vm1457, 1, 0
          %v1586 = vsel %vm1458, 1, 0
          %v1587 = vsel %vm1459, 1, 0
          %v1588 = vsel %vm1460, 1, 0
          %v1589 = vsel %vm1461, 1, 0
          %v1590 = vsel %vm1462, 1, 0
          %v1591 = vsel %vm1463, 1, 0
          %v1592 = vsel %vm1464, 1, 0
          %v1593 = vsel %vm1465, 1, 0
          %v1594 = vsel %vm1466, 1, 0
          %v1595 = vsel %vm1467, 1, 0
          %v1596 = vsel %vm1468, 1, 0
          %v1597 = vsel %vm1469, 1, 0
          %v1598 = vsel %vm1470, 1, 0
          %v1599 = vsel %vm1471, 1, 0
          %v1600 = vsel %vm1472, 1, 0
          %v1601 = vsel %vm1473, 1, 0
          %v1602 = vsel %vm1474, 1, 0
          %v1603 = vsel %vm1475, 1, 0
          %v1604 = vsel %vm1476, 1, 0
          %v1605 = vsel %vm1477, 1, 0
          %v1606 = vsel %vm1478, 1, 0
          %v1607 = vsel %vm1479, 1, 0
          %v1608 = vsel %vm1480, 1, 0
          %v1609 = vsel %vm1481, 1, 0
          %v1610 = vsel %vm1482, 1, 0
          %v1611 = vsel %vm1483, 1, 0
          %v1612 = vsel %vm1484, 1, 0
          %v1613 = vsel %vm1485, 1, 0
          %v1614 = vsel %vm1486, 1, 0
          %v1615 = vsel %vm1487, 1, 0
          %v1616 = vsel %vm1488, 1, 0
          %v1617 = vsel %vm1489, 1, 0
          %v1618 = vsel %vm1490, 1, 0
          %v1619 = vsel %vm1491, 1, 0
          %v1620 = vsel %vm1492, 1, 0
          %v1621 = vsel %vm1493, 1, 0
          %v1622 = vsel %vm1494, 1, 0
          %v1623 = vsel %vm1495, 1, 0
          %v1624 = vsel %vm1496, 1, 0
          %v1625 = vsel %vm1497, 1, 0
          %v1626 = vsel %vm1498, 1, 0
          %v1627 = vsel %vm1499, 1, 0
          %v1628 = vsel %vm1500, 1, 0
          %v1629 = vsel %vm1501, 1, 0
          %v1630 = vsel %vm1502, 1, 0
          %v1631 = vsel %vm1503, 1, 0
          %v1632 = vsel %vm1504, 1, 0
          %v1633 = vsel %vm1505, 1, 0
          %v1634 = vsel %vm1506, 1, 0
          %v1635 = vsel %vm1507, 1, 0
          %v1636 = vsel %vm1508, 1, 0
          %v1637 = vsel %vm1509, 1, 0
          %v1638 = vsel %vm1510, 1, 0
          %v1639 = vsel %vm1511, 1, 0
          %v1640 = vsel %vm1512, 1, 0
          %v1641 = vsel %vm1513, 1, 0
          %v1642 = vsel %vm1514, 1, 0
          %v1643 = vsel %vm1515, 1, 0
          %v1644 = vsel %vm1516, 1, 0
          %v1645 = vsel %vm1517, 1, 0
          %v1646 = vsel %vm1518, 1, 0
          %v1647 = vsel %vm1519, 1, 0
          %v1648 = vsel %vm1520, 1, 0
          %v1649 = vsel %vm1521, 1, 0
          %v1650 = vsel %vm1522, 1, 0
          %v1651 = vsel %vm1523, 1, 0
          %v1652 = vsel %vm1524, 1, 0
          %v1653 = vsel %vm1525, 1, 0
          %v1654 = vsel %vm1526, 1, 0
          %v1655 = vsel %vm1527, 1, 0
          %v1656 = vsel %vm1528, 1, 0
          %v1657 = vsel %vm1529, 1, 0
          %v1658 = vsel %vm1530, 1, 0
          %v1659 = vsel %vm1531, 1, 0
          %v1660 = vsel %vm1532, 1, 0
          %v1661 = vsel %vm1533, 1, 0
          %v1662 = vsel %vm1534, 1, 0
          %v1663 = vsel %vm1535, 1, 0
          %v1664 = vsel %vm1536, 1, 0
          %v1665 = vsel %vm1537, 1, 0
          %v1666 = vsel %vm1538, 1, 0
          %v1667 = vsel %vm1539, 1, 0
          %v1668 = vsel %vm1540, 1, 0
          %v1669 = vsel %vm1541, 1, 0
          %v1670 = vsel %vm1542, 1, 0
          %v1671 = vsel %vm1543, 1, 0
          %v1672 = vsel %vm1544, 1, 0
          %v1673 = vsel %vm1545, 1, 0
          %v1674 = vsel %vm1546, 1, 0
          %v1675 = vsel %vm1547, 1, 0
          %v1676 = vsel %vm1548, 1, 0
          %v1677 = vsel %vm1549, 1, 0
          %v1678 = vsel %vm1550, 1, 0
          %v1679 = vsel %vm1551, 1, 0
          %v1680 = vadd.s32 %v1552, %v1553
          %v1681 = vand.u32 %v1680, 65535
          %v1682 = vshrl.u32 %v1680, 16
          %v1683 = vcvt.s32.f32 %v1681
          %v1684 = vcvt.s32.f32 %v1682
          %1685 = vadd.xlane.f32.xlu0 %v1683
          %v1686 = vpop.xlane.xlu0 %1685
          %1687 = vadd.xlane.f32.xlu0 %v1684
          %v1688 = vpop.xlane.xlu0 %1687
          %v1689 = vcvt.f32.s32 %v1686
          %v1690 = vcvt.f32.s32 %v1688
          %v1691 = vshll.u32 %v1690, 16
          %v1692 = vadd.s32 %v1691, %v1689
          %v1693 = vadd.s32 %v1554, %v1555
          %v1694 = vand.u32 %v1693, 65535
          %v1695 = vshrl.u32 %v1693, 16
          %v1696 = vcvt.s32.f32 %v1694
          %v1697 = vcvt.s32.f32 %v1695
          %1698 = vadd.xlane.f32.xlu0 %v1696
          %v1699 = vpop.xlane.xlu0 %1698
          %1700 = vadd.xlane.f32.xlu0 %v1697
          %v1701 = vpop.xlane.xlu0 %1700
          %v1702 = vcvt.f32.s32 %v1699
          %v1703 = vcvt.f32.s32 %v1701
          %v1704 = vshll.u32 %v1703, 16
          %v1705 = vadd.s32 %v1704, %v1702
          %v1706 = vadd.s32 %v1556, %v1557
          %v1707 = vand.u32 %v1706, 65535
          %v1708 = vshrl.u32 %v1706, 16
          %v1709 = vcvt.s32.f32 %v1707
          %v1710 = vcvt.s32.f32 %v1708
          %1711 = vadd.xlane.f32.xlu0 %v1709
          %v1712 = vpop.xlane.xlu0 %1711
          %1713 = vadd.xlane.f32.xlu0 %v1710
          %v1714 = vpop.xlane.xlu0 %1713
          %v1715 = vcvt.f32.s32 %v1712
          %v1716 = vcvt.f32.s32 %v1714
          %v1717 = vshll.u32 %v1716, 16
          %v1718 = vadd.s32 %v1717, %v1715
          %v1719 = vadd.s32 %v1558, %v1559
          %v1720 = vand.u32 %v1719, 65535
          %v1721 = vshrl.u32 %v1719, 16
          %v1722 = vcvt.s32.f32 %v1720
          %v1723 = vcvt.s32.f32 %v1721
          %1724 = vadd.xlane.f32.xlu0 %v1722
          %v1725 = vpop.xlane.xlu0 %1724
          %1726 = vadd.xlane.f32.xlu0 %v1723
          %v1727 = vpop.xlane.xlu0 %1726
          %v1728 = vcvt.f32.s32 %v1725
          %v1729 = vcvt.f32.s32 %v1727
          %v1730 = vshll.u32 %v1729, 16
          %v1731 = vadd.s32 %v1730, %v1728
          %v1732 = vadd.s32 %v1560, %v1561
          %v1733 = vand.u32 %v1732, 65535
          %v1734 = vshrl.u32 %v1732, 16
          %v1735 = vcvt.s32.f32 %v1733
          %v1736 = vcvt.s32.f32 %v1734
          %1737 = vadd.xlane.f32.xlu0 %v1735
          %v1738 = vpop.xlane.xlu0 %1737
          %1739 = vadd.xlane.f32.xlu0 %v1736
          %v1740 = vpop.xlane.xlu0 %1739
          %v1741 = vcvt.f32.s32 %v1738
          %v1742 = vcvt.f32.s32 %v1740
          %v1743 = vshll.u32 %v1742, 16
          %v1744 = vadd.s32 %v1743, %v1741
          %v1745 = vadd.s32 %v1562, %v1563
          %v1746 = vand.u32 %v1745, 65535
          %v1747 = vshrl.u32 %v1745, 16
          %v1748 = vcvt.s32.f32 %v1746
          %v1749 = vcvt.s32.f32 %v1747
          %1750 = vadd.xlane.f32.xlu0 %v1748
          %v1751 = vpop.xlane.xlu0 %1750
          %1752 = vadd.xlane.f32.xlu0 %v1749
          %v1753 = vpop.xlane.xlu0 %1752
          %v1754 = vcvt.f32.s32 %v1751
          %v1755 = vcvt.f32.s32 %v1753
          %v1756 = vshll.u32 %v1755, 16
          %v1757 = vadd.s32 %v1756, %v1754
          %v1758 = vadd.s32 %v1564, %v1565
          %v1759 = vand.u32 %v1758, 65535
          %v1760 = vshrl.u32 %v1758, 16
          %v1761 = vcvt.s32.f32 %v1759
          %v1762 = vcvt.s32.f32 %v1760
          %1763 = vadd.xlane.f32.xlu0 %v1761
          %v1764 = vpop.xlane.xlu0 %1763
          %1765 = vadd.xlane.f32.xlu0 %v1762
          %v1766 = vpop.xlane.xlu0 %1765
          %v1767 = vcvt.f32.s32 %v1764
          %v1768 = vcvt.f32.s32 %v1766
          %v1769 = vshll.u32 %v1768, 16
          %v1770 = vadd.s32 %v1769, %v1767
          %v1771 = vadd.s32 %v1566, %v1567
          %v1772 = vand.u32 %v1771, 65535
          %v1773 = vshrl.u32 %v1771, 16
          %v1774 = vcvt.s32.f32 %v1772
          %v1775 = vcvt.s32.f32 %v1773
          %1776 = vadd.xlane.f32.xlu0 %v1774
          %v1777 = vpop.xlane.xlu0 %1776
          %1778 = vadd.xlane.f32.xlu0 %v1775
          %v1779 = vpop.xlane.xlu0 %1778
          %v1780 = vcvt.f32.s32 %v1777
          %v1781 = vcvt.f32.s32 %v1779
          %v1782 = vshll.u32 %v1781, 16
          %v1783 = vadd.s32 %v1782, %v1780
          %v1784 = vadd.s32 %v1568, %v1569
          %v1785 = vand.u32 %v1784, 65535
          %v1786 = vshrl.u32 %v1784, 16
          %v1787 = vcvt.s32.f32 %v1785
          %v1788 = vcvt.s32.f32 %v1786
          %1789 = vadd.xlane.f32.xlu0 %v1787
          %v1790 = vpop.xlane.xlu0 %1789
          %1791 = vadd.xlane.f32.xlu0 %v1788
          %v1792 = vpop.xlane.xlu0 %1791
          %v1793 = vcvt.f32.s32 %v1790
          %v1794 = vcvt.f32.s32 %v1792
          %v1795 = vshll.u32 %v1794, 16
          %v1796 = vadd.s32 %v1795, %v1793
          %v1797 = vadd.s32 %v1570, %v1571
          %v1798 = vand.u32 %v1797, 65535
          %v1799 = vshrl.u32 %v1797, 16
          %v1800 = vcvt.s32.f32 %v1798
          %v1801 = vcvt.s32.f32 %v1799
          %1802 = vadd.xlane.f32.xlu0 %v1800
          %v1803 = vpop.xlane.xlu0 %1802
          %1804 = vadd.xlane.f32.xlu0 %v1801
          %v1805 = vpop.xlane.xlu0 %1804
          %v1806 = vcvt.f32.s32 %v1803
          %v1807 = vcvt.f32.s32 %v1805
          %v1808 = vshll.u32 %v1807, 16
          %v1809 = vadd.s32 %v1808, %v1806
          %v1810 = vadd.s32 %v1572, %v1573
          %v1811 = vand.u32 %v1810, 65535
          %v1812 = vshrl.u32 %v1810, 16
          %v1813 = vcvt.s32.f32 %v1811
          %v1814 = vcvt.s32.f32 %v1812
          %1815 = vadd.xlane.f32.xlu0 %v1813
          %v1816 = vpop.xlane.xlu0 %1815
          %1817 = vadd.xlane.f32.xlu0 %v1814
          %v1818 = vpop.xlane.xlu0 %1817
          %v1819 = vcvt.f32.s32 %v1816
          %v1820 = vcvt.f32.s32 %v1818
          %v1821 = vshll.u32 %v1820, 16
          %v1822 = vadd.s32 %v1821, %v1819
          %v1823 = vadd.s32 %v1574, %v1575
          %v1824 = vand.u32 %v1823, 65535
          %v1825 = vshrl.u32 %v1823, 16
          %v1826 = vcvt.s32.f32 %v1824
          %v1827 = vcvt.s32.f32 %v1825
          %1828 = vadd.xlane.f32.xlu0 %v1826
          %v1829 = vpop.xlane.xlu0 %1828
          %1830 = vadd.xlane.f32.xlu0 %v1827
          %v1831 = vpop.xlane.xlu0 %1830
          %v1832 = vcvt.f32.s32 %v1829
          %v1833 = vcvt.f32.s32 %v1831
          %v1834 = vshll.u32 %v1833, 16
          %v1835 = vadd.s32 %v1834, %v1832
          %v1836 = vadd.s32 %v1576, %v1577
          %v1837 = vand.u32 %v1836, 65535
          %v1838 = vshrl.u32 %v1836, 16
          %v1839 = vcvt.s32.f32 %v1837
          %v1840 = vcvt.s32.f32 %v1838
          %1841 = vadd.xlane.f32.xlu0 %v1839
          %v1842 = vpop.xlane.xlu0 %1841
          %1843 = vadd.xlane.f32.xlu0 %v1840
          %v1844 = vpop.xlane.xlu0 %1843
          %v1845 = vcvt.f32.s32 %v1842
          %v1846 = vcvt.f32.s32 %v1844
          %v1847 = vshll.u32 %v1846, 16
          %v1848 = vadd.s32 %v1847, %v1845
          %v1849 = vadd.s32 %v1578, %v1579
          %v1850 = vand.u32 %v1849, 65535
          %v1851 = vshrl.u32 %v1849, 16
          %v1852 = vcvt.s32.f32 %v1850
          %v1853 = vcvt.s32.f32 %v1851
          %1854 = vadd.xlane.f32.xlu0 %v1852
          %v1855 = vpop.xlane.xlu0 %1854
          %1856 = vadd.xlane.f32.xlu0 %v1853
          %v1857 = vpop.xlane.xlu0 %1856
          %v1858 = vcvt.f32.s32 %v1855
          %v1859 = vcvt.f32.s32 %v1857
          %v1860 = vshll.u32 %v1859, 16
          %v1861 = vadd.s32 %v1860, %v1858
          %v1862 = vadd.s32 %v1580, %v1581
          %v1863 = vand.u32 %v1862, 65535
          %v1864 = vshrl.u32 %v1862, 16
          %v1865 = vcvt.s32.f32 %v1863
          %v1866 = vcvt.s32.f32 %v1864
          %1867 = vadd.xlane.f32.xlu0 %v1865
          %v1868 = vpop.xlane.xlu0 %1867
          %1869 = vadd.xlane.f32.xlu0 %v1866
          %v1870 = vpop.xlane.xlu0 %1869
          %v1871 = vcvt.f32.s32 %v1868
          %v1872 = vcvt.f32.s32 %v1870
          %v1873 = vshll.u32 %v1872, 16
          %v1874 = vadd.s32 %v1873, %v1871
          %v1875 = vadd.s32 %v1582, %v1583
          %v1876 = vand.u32 %v1875, 65535
          %v1877 = vshrl.u32 %v1875, 16
          %v1878 = vcvt.s32.f32 %v1876
          %v1879 = vcvt.s32.f32 %v1877
          %1880 = vadd.xlane.f32.xlu0 %v1878
          %v1881 = vpop.xlane.xlu0 %1880
          %1882 = vadd.xlane.f32.xlu0 %v1879
          %v1883 = vpop.xlane.xlu0 %1882
          %v1884 = vcvt.f32.s32 %v1881
          %v1885 = vcvt.f32.s32 %v1883
          %v1886 = vshll.u32 %v1885, 16
          %v1887 = vadd.s32 %v1886, %v1884
          %v1888 = vadd.s32 %v1584, %v1585
          %v1889 = vand.u32 %v1888, 65535
          %v1890 = vshrl.u32 %v1888, 16
          %v1891 = vcvt.s32.f32 %v1889
          %v1892 = vcvt.s32.f32 %v1890
          %1893 = vadd.xlane.f32.xlu0 %v1891
          %v1894 = vpop.xlane.xlu0 %1893
          %1895 = vadd.xlane.f32.xlu0 %v1892
          %v1896 = vpop.xlane.xlu0 %1895
          %v1897 = vcvt.f32.s32 %v1894
          %v1898 = vcvt.f32.s32 %v1896
          %v1899 = vshll.u32 %v1898, 16
          %v1900 = vadd.s32 %v1899, %v1897
          %v1901 = vadd.s32 %v1586, %v1587
          %v1902 = vand.u32 %v1901, 65535
          %v1903 = vshrl.u32 %v1901, 16
          %v1904 = vcvt.s32.f32 %v1902
          %v1905 = vcvt.s32.f32 %v1903
          %1906 = vadd.xlane.f32.xlu0 %v1904
          %v1907 = vpop.xlane.xlu0 %1906
          %1908 = vadd.xlane.f32.xlu0 %v1905
          %v1909 = vpop.xlane.xlu0 %1908
          %v1910 = vcvt.f32.s32 %v1907
          %v1911 = vcvt.f32.s32 %v1909
          %v1912 = vshll.u32 %v1911, 16
          %v1913 = vadd.s32 %v1912, %v1910
          %v1914 = vadd.s32 %v1588, %v1589
          %v1915 = vand.u32 %v1914, 65535
          %v1916 = vshrl.u32 %v1914, 16
          %v1917 = vcvt.s32.f32 %v1915
          %v1918 = vcvt.s32.f32 %v1916
          %1919 = vadd.xlane.f32.xlu0 %v1917
          %v1920 = vpop.xlane.xlu0 %1919
          %1921 = vadd.xlane.f32.xlu0 %v1918
          %v1922 = vpop.xlane.xlu0 %1921
          %v1923 = vcvt.f32.s32 %v1920
          %v1924 = vcvt.f32.s32 %v1922
          %v1925 = vshll.u32 %v1924, 16
          %v1926 = vadd.s32 %v1925, %v1923
          %v1927 = vadd.s32 %v1590, %v1591
          %v1928 = vand.u32 %v1927, 65535
          %v1929 = vshrl.u32 %v1927, 16
          %v1930 = vcvt.s32.f32 %v1928
          %v1931 = vcvt.s32.f32 %v1929
          %1932 = vadd.xlane.f32.xlu0 %v1930
          %v1933 = vpop.xlane.xlu0 %1932
          %1934 = vadd.xlane.f32.xlu0 %v1931
          %v1935 = vpop.xlane.xlu0 %1934
          %v1936 = vcvt.f32.s32 %v1933
          %v1937 = vcvt.f32.s32 %v1935
          %v1938 = vshll.u32 %v1937, 16
          %v1939 = vadd.s32 %v1938, %v1936
          %v1940 = vadd.s32 %v1592, %v1593
          %v1941 = vand.u32 %v1940, 65535
          %v1942 = vshrl.u32 %v1940, 16
          %v1943 = vcvt.s32.f32 %v1941
          %v1944 = vcvt.s32.f32 %v1942
          %1945 = vadd.xlane.f32.xlu0 %v1943
          %v1946 = vpop.xlane.xlu0 %1945
          %1947 = vadd.xlane.f32.xlu0 %v1944
          %v1948 = vpop.xlane.xlu0 %1947
          %v1949 = vcvt.f32.s32 %v1946
          %v1950 = vcvt.f32.s32 %v1948
          %v1951 = vshll.u32 %v1950, 16
          %v1952 = vadd.s32 %v1951, %v1949
          %v1953 = vadd.s32 %v1594, %v1595
          %v1954 = vand.u32 %v1953, 65535
          %v1955 = vshrl.u32 %v1953, 16
          %v1956 = vcvt.s32.f32 %v1954
          %v1957 = vcvt.s32.f32 %v1955
          %1958 = vadd.xlane.f32.xlu0 %v1956
          %v1959 = vpop.xlane.xlu0 %1958
          %1960 = vadd.xlane.f32.xlu0 %v1957
          %v1961 = vpop.xlane.xlu0 %1960
          %v1962 = vcvt.f32.s32 %v1959
          %v1963 = vcvt.f32.s32 %v1961
          %v1964 = vshll.u32 %v1963, 16
          %v1965 = vadd.s32 %v1964, %v1962
          %v1966 = vadd.s32 %v1596, %v1597
          %v1967 = vand.u32 %v1966, 65535
          %v1968 = vshrl.u32 %v1966, 16
          %v1969 = vcvt.s32.f32 %v1967
          %v1970 = vcvt.s32.f32 %v1968
          %1971 = vadd.xlane.f32.xlu0 %v1969
          %v1972 = vpop.xlane.xlu0 %1971
          %1973 = vadd.xlane.f32.xlu0 %v1970
          %v1974 = vpop.xlane.xlu0 %1973
          %v1975 = vcvt.f32.s32 %v1972
          %v1976 = vcvt.f32.s32 %v1974
          %v1977 = vshll.u32 %v1976, 16
          %v1978 = vadd.s32 %v1977, %v1975
          %v1979 = vadd.s32 %v1598, %v1599
          %v1980 = vand.u32 %v1979, 65535
          %v1981 = vshrl.u32 %v1979, 16
          %v1982 = vcvt.s32.f32 %v1980
          %v1983 = vcvt.s32.f32 %v1981
          %1984 = vadd.xlane.f32.xlu0 %v1982
          %v1985 = vpop.xlane.xlu0 %1984
          %1986 = vadd.xlane.f32.xlu0 %v1983
          %v1987 = vpop.xlane.xlu0 %1986
          %v1988 = vcvt.f32.s32 %v1985
          %v1989 = vcvt.f32.s32 %v1987
          %v1990 = vshll.u32 %v1989, 16
          %v1991 = vadd.s32 %v1990, %v1988
          %v1992 = vadd.s32 %v1600, %v1601
          %v1993 = vand.u32 %v1992, 65535
          %v1994 = vshrl.u32 %v1992, 16
          %v1995 = vcvt.s32.f32 %v1993
          %v1996 = vcvt.s32.f32 %v1994
          %1997 = vadd.xlane.f32.xlu0 %v1995
          %v1998 = vpop.xlane.xlu0 %1997
          %1999 = vadd.xlane.f32.xlu0 %v1996
          %v2000 = vpop.xlane.xlu0 %1999
          %v2001 = vcvt.f32.s32 %v1998
          %v2002 = vcvt.f32.s32 %v2000
          %v2003 = vshll.u32 %v2002, 16
          %v2004 = vadd.s32 %v2003, %v2001
          %v2005 = vadd.s32 %v1602, %v1603
          %v2006 = vand.u32 %v2005, 65535
          %v2007 = vshrl.u32 %v2005, 16
          %v2008 = vcvt.s32.f32 %v2006
          %v2009 = vcvt.s32.f32 %v2007
          %2010 = vadd.xlane.f32.xlu0 %v2008
          %v2011 = vpop.xlane.xlu0 %2010
          %2012 = vadd.xlane.f32.xlu0 %v2009
          %v2013 = vpop.xlane.xlu0 %2012
          %v2014 = vcvt.f32.s32 %v2011
          %v2015 = vcvt.f32.s32 %v2013
          %v2016 = vshll.u32 %v2015, 16
          %v2017 = vadd.s32 %v2016, %v2014
          %v2018 = vadd.s32 %v1604, %v1605
          %v2019 = vand.u32 %v2018, 65535
          %v2020 = vshrl.u32 %v2018, 16
          %v2021 = vcvt.s32.f32 %v2019
          %v2022 = vcvt.s32.f32 %v2020
          %2023 = vadd.xlane.f32.xlu0 %v2021
          %v2024 = vpop.xlane.xlu0 %2023
          %2025 = vadd.xlane.f32.xlu0 %v2022
          %v2026 = vpop.xlane.xlu0 %2025
          %v2027 = vcvt.f32.s32 %v2024
          %v2028 = vcvt.f32.s32 %v2026
          %v2029 = vshll.u32 %v2028, 16
          %v2030 = vadd.s32 %v2029, %v2027
          %v2031 = vadd.s32 %v1606, %v1607
          %v2032 = vand.u32 %v2031, 65535
          %v2033 = vshrl.u32 %v2031, 16
          %v2034 = vcvt.s32.f32 %v2032
          %v2035 = vcvt.s32.f32 %v2033
          %2036 = vadd.xlane.f32.xlu0 %v2034
          %v2037 = vpop.xlane.xlu0 %2036
          %2038 = vadd.xlane.f32.xlu0 %v2035
          %v2039 = vpop.xlane.xlu0 %2038
          %v2040 = vcvt.f32.s32 %v2037
          %v2041 = vcvt.f32.s32 %v2039
          %v2042 = vshll.u32 %v2041, 16
          %v2043 = vadd.s32 %v2042, %v2040
          %v2044 = vadd.s32 %v1608, %v1609
          %v2045 = vand.u32 %v2044, 65535
          %v2046 = vshrl.u32 %v2044, 16
          %v2047 = vcvt.s32.f32 %v2045
          %v2048 = vcvt.s32.f32 %v2046
          %2049 = vadd.xlane.f32.xlu0 %v2047
          %v2050 = vpop.xlane.xlu0 %2049
          %2051 = vadd.xlane.f32.xlu0 %v2048
          %v2052 = vpop.xlane.xlu0 %2051
          %v2053 = vcvt.f32.s32 %v2050
          %v2054 = vcvt.f32.s32 %v2052
          %v2055 = vshll.u32 %v2054, 16
          %v2056 = vadd.s32 %v2055, %v2053
          %v2057 = vadd.s32 %v1610, %v1611
          %v2058 = vand.u32 %v2057, 65535
          %v2059 = vshrl.u32 %v2057, 16
          %v2060 = vcvt.s32.f32 %v2058
          %v2061 = vcvt.s32.f32 %v2059
          %2062 = vadd.xlane.f32.xlu0 %v2060
          %v2063 = vpop.xlane.xlu0 %2062
          %2064 = vadd.xlane.f32.xlu0 %v2061
          %v2065 = vpop.xlane.xlu0 %2064
          %v2066 = vcvt.f32.s32 %v2063
          %v2067 = vcvt.f32.s32 %v2065
          %v2068 = vshll.u32 %v2067, 16
          %v2069 = vadd.s32 %v2068, %v2066
          %v2070 = vadd.s32 %v1612, %v1613
          %v2071 = vand.u32 %v2070, 65535
          %v2072 = vshrl.u32 %v2070, 16
          %v2073 = vcvt.s32.f32 %v2071
          %v2074 = vcvt.s32.f32 %v2072
          %2075 = vadd.xlane.f32.xlu0 %v2073
          %v2076 = vpop.xlane.xlu0 %2075
          %2077 = vadd.xlane.f32.xlu0 %v2074
          %v2078 = vpop.xlane.xlu0 %2077
          %v2079 = vcvt.f32.s32 %v2076
          %v2080 = vcvt.f32.s32 %v2078
          %v2081 = vshll.u32 %v2080, 16
          %v2082 = vadd.s32 %v2081, %v2079
          %v2083 = vadd.s32 %v1614, %v1615
          %v2084 = vand.u32 %v2083, 65535
          %v2085 = vshrl.u32 %v2083, 16
          %v2086 = vcvt.s32.f32 %v2084
          %v2087 = vcvt.s32.f32 %v2085
          %2088 = vadd.xlane.f32.xlu0 %v2086
          %v2089 = vpop.xlane.xlu0 %2088
          %2090 = vadd.xlane.f32.xlu0 %v2087
          %v2091 = vpop.xlane.xlu0 %2090
          %v2092 = vcvt.f32.s32 %v2089
          %v2093 = vcvt.f32.s32 %v2091
          %v2094 = vshll.u32 %v2093, 16
          %v2095 = vadd.s32 %v2094, %v2092
          %v2096 = vadd.s32 %v1616, %v1617
          %v2097 = vand.u32 %v2096, 65535
          %v2098 = vshrl.u32 %v2096, 16
          %v2099 = vcvt.s32.f32 %v2097
          %v2100 = vcvt.s32.f32 %v2098
          %2101 = vadd.xlane.f32.xlu0 %v2099
          %v2102 = vpop.xlane.xlu0 %2101
          %2103 = vadd.xlane.f32.xlu0 %v2100
          %v2104 = vpop.xlane.xlu0 %2103
          %v2105 = vcvt.f32.s32 %v2102
          %v2106 = vcvt.f32.s32 %v2104
          %v2107 = vshll.u32 %v2106, 16
          %v2108 = vadd.s32 %v2107, %v2105
          %v2109 = vadd.s32 %v1618, %v1619
          %v2110 = vand.u32 %v2109, 65535
          %v2111 = vshrl.u32 %v2109, 16
          %v2112 = vcvt.s32.f32 %v2110
          %v2113 = vcvt.s32.f32 %v2111
          %2114 = vadd.xlane.f32.xlu0 %v2112
          %v2115 = vpop.xlane.xlu0 %2114
          %2116 = vadd.xlane.f32.xlu0 %v2113
          %v2117 = vpop.xlane.xlu0 %2116
          %v2118 = vcvt.f32.s32 %v2115
          %v2119 = vcvt.f32.s32 %v2117
          %v2120 = vshll.u32 %v2119, 16
          %v2121 = vadd.s32 %v2120, %v2118
          %v2122 = vadd.s32 %v1620, %v1621
          %v2123 = vand.u32 %v2122, 65535
          %v2124 = vshrl.u32 %v2122, 16
          %v2125 = vcvt.s32.f32 %v2123
          %v2126 = vcvt.s32.f32 %v2124
          %2127 = vadd.xlane.f32.xlu0 %v2125
          %v2128 = vpop.xlane.xlu0 %2127
          %2129 = vadd.xlane.f32.xlu0 %v2126
          %v2130 = vpop.xlane.xlu0 %2129
          %v2131 = vcvt.f32.s32 %v2128
          %v2132 = vcvt.f32.s32 %v2130
          %v2133 = vshll.u32 %v2132, 16
          %v2134 = vadd.s32 %v2133, %v2131
          %v2135 = vadd.s32 %v1622, %v1623
          %v2136 = vand.u32 %v2135, 65535
          %v2137 = vshrl.u32 %v2135, 16
          %v2138 = vcvt.s32.f32 %v2136
          %v2139 = vcvt.s32.f32 %v2137
          %2140 = vadd.xlane.f32.xlu0 %v2138
          %v2141 = vpop.xlane.xlu0 %2140
          %2142 = vadd.xlane.f32.xlu0 %v2139
          %v2143 = vpop.xlane.xlu0 %2142
          %v2144 = vcvt.f32.s32 %v2141
          %v2145 = vcvt.f32.s32 %v2143
          %v2146 = vshll.u32 %v2145, 16
          %v2147 = vadd.s32 %v2146, %v2144
          %v2148 = vadd.s32 %v1624, %v1625
          %v2149 = vand.u32 %v2148, 65535
          %v2150 = vshrl.u32 %v2148, 16
          %v2151 = vcvt.s32.f32 %v2149
          %v2152 = vcvt.s32.f32 %v2150
          %2153 = vadd.xlane.f32.xlu0 %v2151
          %v2154 = vpop.xlane.xlu0 %2153
          %2155 = vadd.xlane.f32.xlu0 %v2152
          %v2156 = vpop.xlane.xlu0 %2155
          %v2157 = vcvt.f32.s32 %v2154
          %v2158 = vcvt.f32.s32 %v2156
          %v2159 = vshll.u32 %v2158, 16
          %v2160 = vadd.s32 %v2159, %v2157
          %v2161 = vadd.s32 %v1626, %v1627
          %v2162 = vand.u32 %v2161, 65535
          %v2163 = vshrl.u32 %v2161, 16
          %v2164 = vcvt.s32.f32 %v2162
          %v2165 = vcvt.s32.f32 %v2163
          %2166 = vadd.xlane.f32.xlu0 %v2164
          %v2167 = vpop.xlane.xlu0 %2166
          %2168 = vadd.xlane.f32.xlu0 %v2165
          %v2169 = vpop.xlane.xlu0 %2168
          %v2170 = vcvt.f32.s32 %v2167
          %v2171 = vcvt.f32.s32 %v2169
          %v2172 = vshll.u32 %v2171, 16
          %v2173 = vadd.s32 %v2172, %v2170
          %v2174 = vadd.s32 %v1628, %v1629
          %v2175 = vand.u32 %v2174, 65535
          %v2176 = vshrl.u32 %v2174, 16
          %v2177 = vcvt.s32.f32 %v2175
          %v2178 = vcvt.s32.f32 %v2176
          %2179 = vadd.xlane.f32.xlu0 %v2177
          %v2180 = vpop.xlane.xlu0 %2179
          %2181 = vadd.xlane.f32.xlu0 %v2178
          %v2182 = vpop.xlane.xlu0 %2181
          %v2183 = vcvt.f32.s32 %v2180
          %v2184 = vcvt.f32.s32 %v2182
          %v2185 = vshll.u32 %v2184, 16
          %v2186 = vadd.s32 %v2185, %v2183
          %v2187 = vadd.s32 %v1630, %v1631
          %v2188 = vand.u32 %v2187, 65535
          %v2189 = vshrl.u32 %v2187, 16
          %v2190 = vcvt.s32.f32 %v2188
          %v2191 = vcvt.s32.f32 %v2189
          %2192 = vadd.xlane.f32.xlu0 %v2190
          %v2193 = vpop.xlane.xlu0 %2192
          %2194 = vadd.xlane.f32.xlu0 %v2191
          %v2195 = vpop.xlane.xlu0 %2194
          %v2196 = vcvt.f32.s32 %v2193
          %v2197 = vcvt.f32.s32 %v2195
          %v2198 = vshll.u32 %v2197, 16
          %v2199 = vadd.s32 %v2198, %v2196
          %v2200 = vadd.s32 %v1632, %v1633
          %v2201 = vand.u32 %v2200, 65535
          %v2202 = vshrl.u32 %v2200, 16
          %v2203 = vcvt.s32.f32 %v2201
          %v2204 = vcvt.s32.f32 %v2202
          %2205 = vadd.xlane.f32.xlu0 %v2203
          %v2206 = vpop.xlane.xlu0 %2205
          %2207 = vadd.xlane.f32.xlu0 %v2204
          %v2208 = vpop.xlane.xlu0 %2207
          %v2209 = vcvt.f32.s32 %v2206
          %v2210 = vcvt.f32.s32 %v2208
          %v2211 = vshll.u32 %v2210, 16
          %v2212 = vadd.s32 %v2211, %v2209
          %v2213 = vadd.s32 %v1634, %v1635
          %v2214 = vand.u32 %v2213, 65535
          %v2215 = vshrl.u32 %v2213, 16
          %v2216 = vcvt.s32.f32 %v2214
          %v2217 = vcvt.s32.f32 %v2215
          %2218 = vadd.xlane.f32.xlu0 %v2216
          %v2219 = vpop.xlane.xlu0 %2218
          %2220 = vadd.xlane.f32.xlu0 %v2217
          %v2221 = vpop.xlane.xlu0 %2220
          %v2222 = vcvt.f32.s32 %v2219
          %v2223 = vcvt.f32.s32 %v2221
          %v2224 = vshll.u32 %v2223, 16
          %v2225 = vadd.s32 %v2224, %v2222
          %v2226 = vadd.s32 %v1636, %v1637
          %v2227 = vand.u32 %v2226, 65535
          %v2228 = vshrl.u32 %v2226, 16
          %v2229 = vcvt.s32.f32 %v2227
          %v2230 = vcvt.s32.f32 %v2228
          %2231 = vadd.xlane.f32.xlu0 %v2229
          %v2232 = vpop.xlane.xlu0 %2231
          %2233 = vadd.xlane.f32.xlu0 %v2230
          %v2234 = vpop.xlane.xlu0 %2233
          %v2235 = vcvt.f32.s32 %v2232
          %v2236 = vcvt.f32.s32 %v2234
          %v2237 = vshll.u32 %v2236, 16
          %v2238 = vadd.s32 %v2237, %v2235
          %v2239 = vadd.s32 %v1638, %v1639
          %v2240 = vand.u32 %v2239, 65535
          %v2241 = vshrl.u32 %v2239, 16
          %v2242 = vcvt.s32.f32 %v2240
          %v2243 = vcvt.s32.f32 %v2241
          %2244 = vadd.xlane.f32.xlu0 %v2242
          %v2245 = vpop.xlane.xlu0 %2244
          %2246 = vadd.xlane.f32.xlu0 %v2243
          %v2247 = vpop.xlane.xlu0 %2246
          %v2248 = vcvt.f32.s32 %v2245
          %v2249 = vcvt.f32.s32 %v2247
          %v2250 = vshll.u32 %v2249, 16
          %v2251 = vadd.s32 %v2250, %v2248
          %v2252 = vadd.s32 %v1640, %v1641
          %v2253 = vand.u32 %v2252, 65535
          %v2254 = vshrl.u32 %v2252, 16
          %v2255 = vcvt.s32.f32 %v2253
          %v2256 = vcvt.s32.f32 %v2254
          %2257 = vadd.xlane.f32.xlu0 %v2255
          %v2258 = vpop.xlane.xlu0 %2257
          %2259 = vadd.xlane.f32.xlu0 %v2256
          %v2260 = vpop.xlane.xlu0 %2259
          %v2261 = vcvt.f32.s32 %v2258
          %v2262 = vcvt.f32.s32 %v2260
          %v2263 = vshll.u32 %v2262, 16
          %v2264 = vadd.s32 %v2263, %v2261
          %v2265 = vadd.s32 %v1642, %v1643
          %v2266 = vand.u32 %v2265, 65535
          %v2267 = vshrl.u32 %v2265, 16
          %v2268 = vcvt.s32.f32 %v2266
          %v2269 = vcvt.s32.f32 %v2267
          %2270 = vadd.xlane.f32.xlu0 %v2268
          %v2271 = vpop.xlane.xlu0 %2270
          %2272 = vadd.xlane.f32.xlu0 %v2269
          %v2273 = vpop.xlane.xlu0 %2272
          %v2274 = vcvt.f32.s32 %v2271
          %v2275 = vcvt.f32.s32 %v2273
          %v2276 = vshll.u32 %v2275, 16
          %v2277 = vadd.s32 %v2276, %v2274
          %v2278 = vadd.s32 %v1644, %v1645
          %v2279 = vand.u32 %v2278, 65535
          %v2280 = vshrl.u32 %v2278, 16
          %v2281 = vcvt.s32.f32 %v2279
          %v2282 = vcvt.s32.f32 %v2280
          %2283 = vadd.xlane.f32.xlu0 %v2281
          %v2284 = vpop.xlane.xlu0 %2283
          %2285 = vadd.xlane.f32.xlu0 %v2282
          %v2286 = vpop.xlane.xlu0 %2285
          %v2287 = vcvt.f32.s32 %v2284
          %v2288 = vcvt.f32.s32 %v2286
          %v2289 = vshll.u32 %v2288, 16
          %v2290 = vadd.s32 %v2289, %v2287
          %v2291 = vadd.s32 %v1646, %v1647
          %v2292 = vand.u32 %v2291, 65535
          %v2293 = vshrl.u32 %v2291, 16
          %v2294 = vcvt.s32.f32 %v2292
          %v2295 = vcvt.s32.f32 %v2293
          %2296 = vadd.xlane.f32.xlu0 %v2294
          %v2297 = vpop.xlane.xlu0 %2296
          %2298 = vadd.xlane.f32.xlu0 %v2295
          %v2299 = vpop.xlane.xlu0 %2298
          %v2300 = vcvt.f32.s32 %v2297
          %v2301 = vcvt.f32.s32 %v2299
          %v2302 = vshll.u32 %v2301, 16
          %v2303 = vadd.s32 %v2302, %v2300
          %v2304 = vadd.s32 %v1648, %v1649
          %v2305 = vand.u32 %v2304, 65535
          %v2306 = vshrl.u32 %v2304, 16
          %v2307 = vcvt.s32.f32 %v2305
          %v2308 = vcvt.s32.f32 %v2306
          %2309 = vadd.xlane.f32.xlu0 %v2307
          %v2310 = vpop.xlane.xlu0 %2309
          %2311 = vadd.xlane.f32.xlu0 %v2308
          %v2312 = vpop.xlane.xlu0 %2311
          %v2313 = vcvt.f32.s32 %v2310
          %v2314 = vcvt.f32.s32 %v2312
          %v2315 = vshll.u32 %v2314, 16
          %v2316 = vadd.s32 %v2315, %v2313
          %v2317 = vadd.s32 %v1650, %v1651
          %v2318 = vand.u32 %v2317, 65535
          %v2319 = vshrl.u32 %v2317, 16
          %v2320 = vcvt.s32.f32 %v2318
          %v2321 = vcvt.s32.f32 %v2319
          %2322 = vadd.xlane.f32.xlu0 %v2320
          %v2323 = vpop.xlane.xlu0 %2322
          %2324 = vadd.xlane.f32.xlu0 %v2321
          %v2325 = vpop.xlane.xlu0 %2324
          %v2326 = vcvt.f32.s32 %v2323
          %v2327 = vcvt.f32.s32 %v2325
          %v2328 = vshll.u32 %v2327, 16
          %v2329 = vadd.s32 %v2328, %v2326
          %v2330 = vadd.s32 %v1652, %v1653
          %v2331 = vand.u32 %v2330, 65535
          %v2332 = vshrl.u32 %v2330, 16
          %v2333 = vcvt.s32.f32 %v2331
          %v2334 = vcvt.s32.f32 %v2332
          %2335 = vadd.xlane.f32.xlu0 %v2333
          %v2336 = vpop.xlane.xlu0 %2335
          %2337 = vadd.xlane.f32.xlu0 %v2334
          %v2338 = vpop.xlane.xlu0 %2337
          %v2339 = vcvt.f32.s32 %v2336
          %v2340 = vcvt.f32.s32 %v2338
          %v2341 = vshll.u32 %v2340, 16
          %v2342 = vadd.s32 %v2341, %v2339
          %v2343 = vadd.s32 %v1654, %v1655
          %v2344 = vand.u32 %v2343, 65535
          %v2345 = vshrl.u32 %v2343, 16
          %v2346 = vcvt.s32.f32 %v2344
          %v2347 = vcvt.s32.f32 %v2345
          %2348 = vadd.xlane.f32.xlu0 %v2346
          %v2349 = vpop.xlane.xlu0 %2348
          %2350 = vadd.xlane.f32.xlu0 %v2347
          %v2351 = vpop.xlane.xlu0 %2350
          %v2352 = vcvt.f32.s32 %v2349
          %v2353 = vcvt.f32.s32 %v2351
          %v2354 = vshll.u32 %v2353, 16
          %v2355 = vadd.s32 %v2354, %v2352
          %v2356 = vadd.s32 %v1656, %v1657
          %v2357 = vand.u32 %v2356, 65535
          %v2358 = vshrl.u32 %v2356, 16
          %v2359 = vcvt.s32.f32 %v2357
          %v2360 = vcvt.s32.f32 %v2358
          %2361 = vadd.xlane.f32.xlu0 %v2359
          %v2362 = vpop.xlane.xlu0 %2361
          %2363 = vadd.xlane.f32.xlu0 %v2360
          %v2364 = vpop.xlane.xlu0 %2363
          %v2365 = vcvt.f32.s32 %v2362
          %v2366 = vcvt.f32.s32 %v2364
          %v2367 = vshll.u32 %v2366, 16
          %v2368 = vadd.s32 %v2367, %v2365
          %v2369 = vadd.s32 %v1658, %v1659
          %v2370 = vand.u32 %v2369, 65535
          %v2371 = vshrl.u32 %v2369, 16
          %v2372 = vcvt.s32.f32 %v2370
          %v2373 = vcvt.s32.f32 %v2371
          %2374 = vadd.xlane.f32.xlu0 %v2372
          %v2375 = vpop.xlane.xlu0 %2374
          %2376 = vadd.xlane.f32.xlu0 %v2373
          %v2377 = vpop.xlane.xlu0 %2376
          %v2378 = vcvt.f32.s32 %v2375
          %v2379 = vcvt.f32.s32 %v2377
          %v2380 = vshll.u32 %v2379, 16
          %v2381 = vadd.s32 %v2380, %v2378
          %v2382 = vadd.s32 %v1660, %v1661
          %v2383 = vand.u32 %v2382, 65535
          %v2384 = vshrl.u32 %v2382, 16
          %v2385 = vcvt.s32.f32 %v2383
          %v2386 = vcvt.s32.f32 %v2384
          %2387 = vadd.xlane.f32.xlu0 %v2385
          %v2388 = vpop.xlane.xlu0 %2387
          %2389 = vadd.xlane.f32.xlu0 %v2386
          %v2390 = vpop.xlane.xlu0 %2389
          %v2391 = vcvt.f32.s32 %v2388
          %v2392 = vcvt.f32.s32 %v2390
          %v2393 = vshll.u32 %v2392, 16
          %v2394 = vadd.s32 %v2393, %v2391
          %v2395 = vadd.s32 %v1662, %v1663
          %v2396 = vand.u32 %v2395, 65535
          %v2397 = vshrl.u32 %v2395, 16
          %v2398 = vcvt.s32.f32 %v2396
          %v2399 = vcvt.s32.f32 %v2397
          %2400 = vadd.xlane.f32.xlu0 %v2398
          %v2401 = vpop.xlane.xlu0 %2400
          %2402 = vadd.xlane.f32.xlu0 %v2399
          %v2403 = vpop.xlane.xlu0 %2402
          %v2404 = vcvt.f32.s32 %v2401
          %v2405 = vcvt.f32.s32 %v2403
          %v2406 = vshll.u32 %v2405, 16
          %v2407 = vadd.s32 %v2406, %v2404
          %v2408 = vadd.s32 %v1664, %v1665
          %v2409 = vand.u32 %v2408, 65535
          %v2410 = vshrl.u32 %v2408, 16
          %v2411 = vcvt.s32.f32 %v2409
          %v2412 = vcvt.s32.f32 %v2410
          %2413 = vadd.xlane.f32.xlu0 %v2411
          %v2414 = vpop.xlane.xlu0 %2413
          %2415 = vadd.xlane.f32.xlu0 %v2412
          %v2416 = vpop.xlane.xlu0 %2415
          %v2417 = vcvt.f32.s32 %v2414
          %v2418 = vcvt.f32.s32 %v2416
          %v2419 = vshll.u32 %v2418, 16
          %v2420 = vadd.s32 %v2419, %v2417
          %v2421 = vadd.s32 %v1666, %v1667
          %v2422 = vand.u32 %v2421, 65535
          %v2423 = vshrl.u32 %v2421, 16
          %v2424 = vcvt.s32.f32 %v2422
          %v2425 = vcvt.s32.f32 %v2423
          %2426 = vadd.xlane.f32.xlu0 %v2424
          %v2427 = vpop.xlane.xlu0 %2426
          %2428 = vadd.xlane.f32.xlu0 %v2425
          %v2429 = vpop.xlane.xlu0 %2428
          %v2430 = vcvt.f32.s32 %v2427
          %v2431 = vcvt.f32.s32 %v2429
          %v2432 = vshll.u32 %v2431, 16
          %v2433 = vadd.s32 %v2432, %v2430
          %v2434 = vadd.s32 %v1668, %v1669
          %v2435 = vand.u32 %v2434, 65535
          %v2436 = vshrl.u32 %v2434, 16
          %v2437 = vcvt.s32.f32 %v2435
          %v2438 = vcvt.s32.f32 %v2436
          %2439 = vadd.xlane.f32.xlu0 %v2437
          %v2440 = vpop.xlane.xlu0 %2439
          %2441 = vadd.xlane.f32.xlu0 %v2438
          %v2442 = vpop.xlane.xlu0 %2441
          %v2443 = vcvt.f32.s32 %v2440
          %v2444 = vcvt.f32.s32 %v2442
          %v2445 = vshll.u32 %v2444, 16
          %v2446 = vadd.s32 %v2445, %v2443
          %v2447 = vadd.s32 %v1670, %v1671
          %v2448 = vand.u32 %v2447, 65535
          %v2449 = vshrl.u32 %v2447, 16
          %v2450 = vcvt.s32.f32 %v2448
          %v2451 = vcvt.s32.f32 %v2449
          %2452 = vadd.xlane.f32.xlu0 %v2450
          %v2453 = vpop.xlane.xlu0 %2452
          %2454 = vadd.xlane.f32.xlu0 %v2451
          %v2455 = vpop.xlane.xlu0 %2454
          %v2456 = vcvt.f32.s32 %v2453
          %v2457 = vcvt.f32.s32 %v2455
          %v2458 = vshll.u32 %v2457, 16
          %v2459 = vadd.s32 %v2458, %v2456
          %v2460 = vadd.s32 %v1672, %v1673
          %v2461 = vand.u32 %v2460, 65535
          %v2462 = vshrl.u32 %v2460, 16
          %v2463 = vcvt.s32.f32 %v2461
          %v2464 = vcvt.s32.f32 %v2462
          %2465 = vadd.xlane.f32.xlu0 %v2463
          %v2466 = vpop.xlane.xlu0 %2465
          %2467 = vadd.xlane.f32.xlu0 %v2464
          %v2468 = vpop.xlane.xlu0 %2467
          %v2469 = vcvt.f32.s32 %v2466
          %v2470 = vcvt.f32.s32 %v2468
          %v2471 = vshll.u32 %v2470, 16
          %v2472 = vadd.s32 %v2471, %v2469
          %v2473 = vadd.s32 %v1674, %v1675
          %v2474 = vand.u32 %v2473, 65535
          %v2475 = vshrl.u32 %v2473, 16
          %v2476 = vcvt.s32.f32 %v2474
          %v2477 = vcvt.s32.f32 %v2475
          %2478 = vadd.xlane.f32.xlu0 %v2476
          %v2479 = vpop.xlane.xlu0 %2478
          %2480 = vadd.xlane.f32.xlu0 %v2477
          %v2481 = vpop.xlane.xlu0 %2480
          %v2482 = vcvt.f32.s32 %v2479
          %v2483 = vcvt.f32.s32 %v2481
          %v2484 = vshll.u32 %v2483, 16
          %v2485 = vadd.s32 %v2484, %v2482
          %v2486 = vadd.s32 %v1676, %v1677
          %v2487 = vand.u32 %v2486, 65535
          %v2488 = vshrl.u32 %v2486, 16
          %v2489 = vcvt.s32.f32 %v2487
          %v2490 = vcvt.s32.f32 %v2488
          %2491 = vadd.xlane.f32.xlu0 %v2489
          %v2492 = vpop.xlane.xlu0 %2491
          %2493 = vadd.xlane.f32.xlu0 %v2490
          %v2494 = vpop.xlane.xlu0 %2493
          %v2495 = vcvt.f32.s32 %v2492
          %v2496 = vcvt.f32.s32 %v2494
          %v2497 = vshll.u32 %v2496, 16
          %v2498 = vadd.s32 %v2497, %v2495
          %v2499 = vadd.s32 %v1678, %v1679
          %v2500 = vand.u32 %v2499, 65535
          %v2501 = vshrl.u32 %v2499, 16
          %v2502 = vcvt.s32.f32 %v2500
          %v2503 = vcvt.s32.f32 %v2501
          %2504 = vadd.xlane.f32.xlu0 %v2502
          %v2505 = vpop.xlane.xlu0 %2504
          %2506 = vadd.xlane.f32.xlu0 %v2503
          %v2507 = vpop.xlane.xlu0 %2506
          %v2508 = vcvt.f32.s32 %v2505
          %v2509 = vcvt.f32.s32 %v2507
          %v2510 = vshll.u32 %v2509, 16
          %v2511 = vadd.s32 %v2510, %v2508
          %vm2512 = vcmp.lt.s32.totalorder %v1692, 128
          %vm2513 = vcmp.lt.s32.totalorder %v1705, 128
          %vm2514 = vcmp.lt.s32.totalorder %v1718, 128
          %vm2515 = vcmp.lt.s32.totalorder %v1731, 128
          %vm2516 = vcmp.lt.s32.totalorder %v1744, 128
          %vm2517 = vcmp.lt.s32.totalorder %v1757, 128
          %vm2518 = vcmp.lt.s32.totalorder %v1770, 128
          %vm2519 = vcmp.lt.s32.totalorder %v1783, 128
          %vm2520 = vcmp.lt.s32.totalorder %v1796, 128
          %vm2521 = vcmp.lt.s32.totalorder %v1809, 128
          %vm2522 = vcmp.lt.s32.totalorder %v1822, 128
          %vm2523 = vcmp.lt.s32.totalorder %v1835, 128
          %vm2524 = vcmp.lt.s32.totalorder %v1848, 128
          %vm2525 = vcmp.lt.s32.totalorder %v1861, 128
          %vm2526 = vcmp.lt.s32.totalorder %v1874, 128
          %vm2527 = vcmp.lt.s32.totalorder %v1887, 128
          %vm2528 = vcmp.lt.s32.totalorder %v1900, 128
          %vm2529 = vcmp.lt.s32.totalorder %v1913, 128
          %vm2530 = vcmp.lt.s32.totalorder %v1926, 128
          %vm2531 = vcmp.lt.s32.totalorder %v1939, 128
          %vm2532 = vcmp.lt.s32.totalorder %v1952, 128
          %vm2533 = vcmp.lt.s32.totalorder %v1965, 128
          %vm2534 = vcmp.lt.s32.totalorder %v1978, 128
          %vm2535 = vcmp.lt.s32.totalorder %v1991, 128
          %vm2536 = vcmp.lt.s32.totalorder %v2004, 128
          %vm2537 = vcmp.lt.s32.totalorder %v2017, 128
          %vm2538 = vcmp.lt.s32.totalorder %v2030, 128
          %vm2539 = vcmp.lt.s32.totalorder %v2043, 128
          %vm2540 = vcmp.lt.s32.totalorder %v2056, 128
          %vm2541 = vcmp.lt.s32.totalorder %v2069, 128
          %vm2542 = vcmp.lt.s32.totalorder %v2082, 128
          %vm2543 = vcmp.lt.s32.totalorder %v2095, 128
          %vm2544 = vcmp.lt.s32.totalorder %v2108, 128
          %vm2545 = vcmp.lt.s32.totalorder %v2121, 128
          %vm2546 = vcmp.lt.s32.totalorder %v2134, 128
          %vm2547 = vcmp.lt.s32.totalorder %v2147, 128
          %vm2548 = vcmp.lt.s32.totalorder %v2160, 128
          %vm2549 = vcmp.lt.s32.totalorder %v2173, 128
          %vm2550 = vcmp.lt.s32.totalorder %v2186, 128
          %vm2551 = vcmp.lt.s32.totalorder %v2199, 128
          %vm2552 = vcmp.lt.s32.totalorder %v2212, 128
          %vm2553 = vcmp.lt.s32.totalorder %v2225, 128
          %vm2554 = vcmp.lt.s32.totalorder %v2238, 128
          %vm2555 = vcmp.lt.s32.totalorder %v2251, 128
          %vm2556 = vcmp.lt.s32.totalorder %v2264, 128
          %vm2557 = vcmp.lt.s32.totalorder %v2277, 128
          %vm2558 = vcmp.lt.s32.totalorder %v2290, 128
          %vm2559 = vcmp.lt.s32.totalorder %v2303, 128
          %vm2560 = vcmp.lt.s32.totalorder %v2316, 128
          %vm2561 = vcmp.lt.s32.totalorder %v2329, 128
          %vm2562 = vcmp.lt.s32.totalorder %v2342, 128
          %vm2563 = vcmp.lt.s32.totalorder %v2355, 128
          %vm2564 = vcmp.lt.s32.totalorder %v2368, 128
          %vm2565 = vcmp.lt.s32.totalorder %v2381, 128
          %vm2566 = vcmp.lt.s32.totalorder %v2394, 128
          %vm2567 = vcmp.lt.s32.totalorder %v2407, 128
          %vm2568 = vcmp.lt.s32.totalorder %v2420, 128
          %vm2569 = vcmp.lt.s32.totalorder %v2433, 128
          %vm2570 = vcmp.lt.s32.totalorder %v2446, 128
          %vm2571 = vcmp.lt.s32.totalorder %v2459, 128
          %vm2572 = vcmp.lt.s32.totalorder %v2472, 128
          %vm2573 = vcmp.lt.s32.totalorder %v2485, 128
          %vm2574 = vcmp.lt.s32.totalorder %v2498, 128
          %vm2575 = vcmp.lt.s32.totalorder %v2511, 128
          %v2576 = vlaneseq
          %v2577 = vshrl.u32 %v2576, 7
          %v2578 = vsub.s32 0, %v2577
          %v2579 = vrot.slane %v496, %v2578
          %2581 = vbcast.lane.b32.xlu0 %v2579, 256
          %v2582 = vpop.permute.xlu0 %2581
          %s2584 = sor.u32 256, 8
          %2585 = vbcast.lane.b32.xlu0 %v2579, %s2584
          %v2586 = vpop.permute.xlu0 %2585
          %s2588 = sor.u32 256, 16
          %2589 = vbcast.lane.b32.xlu0 %v2579, %s2588
          %v2590 = vpop.permute.xlu0 %2589
          %s2592 = sor.u32 256, 24
          %2593 = vbcast.lane.b32.xlu0 %v2579, %s2592
          %v2594 = vpop.permute.xlu0 %2593
          %s2596 = sor.u32 256, 32
          %2597 = vbcast.lane.b32.xlu0 %v2579, %s2596
          %v2598 = vpop.permute.xlu0 %2597
          %s2600 = sor.u32 256, 40
          %2601 = vbcast.lane.b32.xlu0 %v2579, %s2600
          %v2602 = vpop.permute.xlu0 %2601
          %s2604 = sor.u32 256, 48
          %2605 = vbcast.lane.b32.xlu0 %v2579, %s2604
          %v2606 = vpop.permute.xlu0 %2605
          %s2608 = sor.u32 256, 56
          %2609 = vbcast.lane.b32.xlu0 %v2579, %s2608
          %v2610 = vpop.permute.xlu0 %2609
          %s2612 = sor.u32 256, 64
          %2613 = vbcast.lane.b32.xlu0 %v2579, %s2612
          %v2614 = vpop.permute.xlu0 %2613
          %s2616 = sor.u32 256, 72
          %2617 = vbcast.lane.b32.xlu0 %v2579, %s2616
          %v2618 = vpop.permute.xlu0 %2617
          %s2620 = sor.u32 256, 80
          %2621 = vbcast.lane.b32.xlu0 %v2579, %s2620
          %v2622 = vpop.permute.xlu0 %2621
          %s2624 = sor.u32 256, 88
          %2625 = vbcast.lane.b32.xlu0 %v2579, %s2624
          %v2626 = vpop.permute.xlu0 %2625
          %s2628 = sor.u32 256, 96
          %2629 = vbcast.lane.b32.xlu0 %v2579, %s2628
          %v2630 = vpop.permute.xlu0 %2629
          %s2632 = sor.u32 256, 104
          %2633 = vbcast.lane.b32.xlu0 %v2579, %s2632
          %v2634 = vpop.permute.xlu0 %2633
          %s2636 = sor.u32 256, 112
          %2637 = vbcast.lane.b32.xlu0 %v2579, %s2636
          %v2638 = vpop.permute.xlu0 %2637
          %s2640 = sor.u32 256, 120
          %2641 = vbcast.lane.b32.xlu0 %v2579, %s2640
          %v2642 = vpop.permute.xlu0 %2641
          %v2643 = vlaneseq
          %v2644 = vshrl.u32 %v2643, 7
          %v2645 = vsub.s32 0, %v2644
          %v2646 = vrot.slane %v498, %v2645
          %2648 = vbcast.lane.b32.xlu0 %v2646, 256
          %v2649 = vpop.permute.xlu0 %2648
          %s2651 = sor.u32 256, 8
          %2652 = vbcast.lane.b32.xlu0 %v2646, %s2651
          %v2653 = vpop.permute.xlu0 %2652
          %s2655 = sor.u32 256, 16
          %2656 = vbcast.lane.b32.xlu0 %v2646, %s2655
          %v2657 = vpop.permute.xlu0 %2656
          %s2659 = sor.u32 256, 24
          %2660 = vbcast.lane.b32.xlu0 %v2646, %s2659
          %v2661 = vpop.permute.xlu0 %2660
          %s2663 = sor.u32 256, 32
          %2664 = vbcast.lane.b32.xlu0 %v2646, %s2663
          %v2665 = vpop.permute.xlu0 %2664
          %s2667 = sor.u32 256, 40
          %2668 = vbcast.lane.b32.xlu0 %v2646, %s2667
          %v2669 = vpop.permute.xlu0 %2668
          %s2671 = sor.u32 256, 48
          %2672 = vbcast.lane.b32.xlu0 %v2646, %s2671
          %v2673 = vpop.permute.xlu0 %2672
          %s2675 = sor.u32 256, 56
          %2676 = vbcast.lane.b32.xlu0 %v2646, %s2675
          %v2677 = vpop.permute.xlu0 %2676
          %s2679 = sor.u32 256, 64
          %2680 = vbcast.lane.b32.xlu0 %v2646, %s2679
          %v2681 = vpop.permute.xlu0 %2680
          %s2683 = sor.u32 256, 72
          %2684 = vbcast.lane.b32.xlu0 %v2646, %s2683
          %v2685 = vpop.permute.xlu0 %2684
          %s2687 = sor.u32 256, 80
          %2688 = vbcast.lane.b32.xlu0 %v2646, %s2687
          %v2689 = vpop.permute.xlu0 %2688
          %s2691 = sor.u32 256, 88
          %2692 = vbcast.lane.b32.xlu0 %v2646, %s2691
          %v2693 = vpop.permute.xlu0 %2692
          %s2695 = sor.u32 256, 96
          %2696 = vbcast.lane.b32.xlu0 %v2646, %s2695
          %v2697 = vpop.permute.xlu0 %2696
          %s2699 = sor.u32 256, 104
          %2700 = vbcast.lane.b32.xlu0 %v2646, %s2699
          %v2701 = vpop.permute.xlu0 %2700
          %s2703 = sor.u32 256, 112
          %2704 = vbcast.lane.b32.xlu0 %v2646, %s2703
          %v2705 = vpop.permute.xlu0 %2704
          %s2707 = sor.u32 256, 120
          %2708 = vbcast.lane.b32.xlu0 %v2646, %s2707
          %v2709 = vpop.permute.xlu0 %2708
          %v2710 = vlaneseq
          %v2711 = vshrl.u32 %v2710, 7
          %v2712 = vsub.s32 1, %v2711
          %v2713 = vrot.slane %v496, %v2712
          %2715 = vbcast.lane.b32.xlu0 %v2713, 256
          %v2716 = vpop.permute.xlu0 %2715
          %s2718 = sor.u32 256, 8
          %2719 = vbcast.lane.b32.xlu0 %v2713, %s2718
          %v2720 = vpop.permute.xlu0 %2719
          %s2722 = sor.u32 256, 16
          %2723 = vbcast.lane.b32.xlu0 %v2713, %s2722
          %v2724 = vpop.permute.xlu0 %2723
          %s2726 = sor.u32 256, 24
          %2727 = vbcast.lane.b32.xlu0 %v2713, %s2726
          %v2728 = vpop.permute.xlu0 %2727
          %s2730 = sor.u32 256, 32
          %2731 = vbcast.lane.b32.xlu0 %v2713, %s2730
          %v2732 = vpop.permute.xlu0 %2731
          %s2734 = sor.u32 256, 40
          %2735 = vbcast.lane.b32.xlu0 %v2713, %s2734
          %v2736 = vpop.permute.xlu0 %2735
          %s2738 = sor.u32 256, 48
          %2739 = vbcast.lane.b32.xlu0 %v2713, %s2738
          %v2740 = vpop.permute.xlu0 %2739
          %s2742 = sor.u32 256, 56
          %2743 = vbcast.lane.b32.xlu0 %v2713, %s2742
          %v2744 = vpop.permute.xlu0 %2743
          %s2746 = sor.u32 256, 64
          %2747 = vbcast.lane.b32.xlu0 %v2713, %s2746
          %v2748 = vpop.permute.xlu0 %2747
          %s2750 = sor.u32 256, 72
          %2751 = vbcast.lane.b32.xlu0 %v2713, %s2750
          %v2752 = vpop.permute.xlu0 %2751
          %s2754 = sor.u32 256, 80
          %2755 = vbcast.lane.b32.xlu0 %v2713, %s2754
          %v2756 = vpop.permute.xlu0 %2755
          %s2758 = sor.u32 256, 88
          %2759 = vbcast.lane.b32.xlu0 %v2713, %s2758
          %v2760 = vpop.permute.xlu0 %2759
          %s2762 = sor.u32 256, 96
          %2763 = vbcast.lane.b32.xlu0 %v2713, %s2762
          %v2764 = vpop.permute.xlu0 %2763
          %s2766 = sor.u32 256, 104
          %2767 = vbcast.lane.b32.xlu0 %v2713, %s2766
          %v2768 = vpop.permute.xlu0 %2767
          %s2770 = sor.u32 256, 112
          %2771 = vbcast.lane.b32.xlu0 %v2713, %s2770
          %v2772 = vpop.permute.xlu0 %2771
          %s2774 = sor.u32 256, 120
          %2775 = vbcast.lane.b32.xlu0 %v2713, %s2774
          %v2776 = vpop.permute.xlu0 %2775
          %v2777 = vlaneseq
          %v2778 = vshrl.u32 %v2777, 7
          %v2779 = vsub.s32 1, %v2778
          %v2780 = vrot.slane %v498, %v2779
          %2782 = vbcast.lane.b32.xlu0 %v2780, 256
          %v2783 = vpop.permute.xlu0 %2782
          %s2785 = sor.u32 256, 8
          %2786 = vbcast.lane.b32.xlu0 %v2780, %s2785
          %v2787 = vpop.permute.xlu0 %2786
          %s2789 = sor.u32 256, 16
          %2790 = vbcast.lane.b32.xlu0 %v2780, %s2789
          %v2791 = vpop.permute.xlu0 %2790
          %s2793 = sor.u32 256, 24
          %2794 = vbcast.lane.b32.xlu0 %v2780, %s2793
          %v2795 = vpop.permute.xlu0 %2794
          %s2797 = sor.u32 256, 32
          %2798 = vbcast.lane.b32.xlu0 %v2780, %s2797
          %v2799 = vpop.permute.xlu0 %2798
          %s2801 = sor.u32 256, 40
          %2802 = vbcast.lane.b32.xlu0 %v2780, %s2801
          %v2803 = vpop.permute.xlu0 %2802
          %s2805 = sor.u32 256, 48
          %2806 = vbcast.lane.b32.xlu0 %v2780, %s2805
          %v2807 = vpop.permute.xlu0 %2806
          %s2809 = sor.u32 256, 56
          %2810 = vbcast.lane.b32.xlu0 %v2780, %s2809
          %v2811 = vpop.permute.xlu0 %2810
          %s2813 = sor.u32 256, 64
          %2814 = vbcast.lane.b32.xlu0 %v2780, %s2813
          %v2815 = vpop.permute.xlu0 %2814
          %s2817 = sor.u32 256, 72
          %2818 = vbcast.lane.b32.xlu0 %v2780, %s2817
          %v2819 = vpop.permute.xlu0 %2818
          %s2821 = sor.u32 256, 80
          %2822 = vbcast.lane.b32.xlu0 %v2780, %s2821
          %v2823 = vpop.permute.xlu0 %2822
          %s2825 = sor.u32 256, 88
          %2826 = vbcast.lane.b32.xlu0 %v2780, %s2825
          %v2827 = vpop.permute.xlu0 %2826
          %s2829 = sor.u32 256, 96
          %2830 = vbcast.lane.b32.xlu0 %v2780, %s2829
          %v2831 = vpop.permute.xlu0 %2830
          %s2833 = sor.u32 256, 104
          %2834 = vbcast.lane.b32.xlu0 %v2780, %s2833
          %v2835 = vpop.permute.xlu0 %2834
          %s2837 = sor.u32 256, 112
          %2838 = vbcast.lane.b32.xlu0 %v2780, %s2837
          %v2839 = vpop.permute.xlu0 %2838
          %s2841 = sor.u32 256, 120
          %2842 = vbcast.lane.b32.xlu0 %v2780, %s2841
          %v2843 = vpop.permute.xlu0 %2842
          %v2908 = vsel %vm2512, %v2582, 0.0
          %v2909 = vsel %vm2513, %v2586, 0.0
          %v2910 = vsel %vm2514, %v2590, 0.0
          %v2911 = vsel %vm2515, %v2594, 0.0
          %v2912 = vsel %vm2516, %v2598, 0.0
          %v2913 = vsel %vm2517, %v2602, 0.0
          %v2914 = vsel %vm2518, %v2606, 0.0
          %v2915 = vsel %vm2519, %v2610, 0.0
          %v2916 = vsel %vm2520, %v2614, 0.0
          %v2917 = vsel %vm2521, %v2618, 0.0
          %v2918 = vsel %vm2522, %v2622, 0.0
          %v2919 = vsel %vm2523, %v2626, 0.0
          %v2920 = vsel %vm2524, %v2630, 0.0
          %v2921 = vsel %vm2525, %v2634, 0.0
          %v2922 = vsel %vm2526, %v2638, 0.0
          %v2923 = vsel %vm2527, %v2642, 0.0
          %v2924 = vsel %vm2528, %v2649, 0.0
          %v2925 = vsel %vm2529, %v2653, 0.0
          %v2926 = vsel %vm2530, %v2657, 0.0
          %v2927 = vsel %vm2531, %v2661, 0.0
          %v2928 = vsel %vm2532, %v2665, 0.0
          %v2929 = vsel %vm2533, %v2669, 0.0
          %v2930 = vsel %vm2534, %v2673, 0.0
          %v2931 = vsel %vm2535, %v2677, 0.0
          %v2932 = vsel %vm2536, %v2681, 0.0
          %v2933 = vsel %vm2537, %v2685, 0.0
          %v2934 = vsel %vm2538, %v2689, 0.0
          %v2935 = vsel %vm2539, %v2693, 0.0
          %v2936 = vsel %vm2540, %v2697, 0.0
          %v2937 = vsel %vm2541, %v2701, 0.0
          %v2938 = vsel %vm2542, %v2705, 0.0
          %v2939 = vsel %vm2543, %v2709, 0.0
          %v2940 = vsel %vm2544, %v2716, 0.0
          %v2941 = vsel %vm2545, %v2720, 0.0
          %v2942 = vsel %vm2546, %v2724, 0.0
          %v2943 = vsel %vm2547, %v2728, 0.0
          %v2944 = vsel %vm2548, %v2732, 0.0
          %v2945 = vsel %vm2549, %v2736, 0.0
          %v2946 = vsel %vm2550, %v2740, 0.0
          %v2947 = vsel %vm2551, %v2744, 0.0
          %v2948 = vsel %vm2552, %v2748, 0.0
          %v2949 = vsel %vm2553, %v2752, 0.0
          %v2950 = vsel %vm2554, %v2756, 0.0
          %v2951 = vsel %vm2555, %v2760, 0.0
          %v2952 = vsel %vm2556, %v2764, 0.0
          %v2953 = vsel %vm2557, %v2768, 0.0
          %v2954 = vsel %vm2558, %v2772, 0.0
          %v2955 = vsel %vm2559, %v2776, 0.0
          %v2956 = vsel %vm2560, %v2783, 0.0
          %v2957 = vsel %vm2561, %v2787, 0.0
          %v2958 = vsel %vm2562, %v2791, 0.0
          %v2959 = vsel %vm2563, %v2795, 0.0
          %v2960 = vsel %vm2564, %v2799, 0.0
          %v2961 = vsel %vm2565, %v2803, 0.0
          %v2962 = vsel %vm2566, %v2807, 0.0
          %v2963 = vsel %vm2567, %v2811, 0.0
          %v2964 = vsel %vm2568, %v2815, 0.0
          %v2965 = vsel %vm2569, %v2819, 0.0
          %v2966 = vsel %vm2570, %v2823, 0.0
          %v2967 = vsel %vm2571, %v2827, 0.0
          %v2968 = vsel %vm2572, %v2831, 0.0
          %v2969 = vsel %vm2573, %v2835, 0.0
          %v2970 = vsel %vm2574, %v2839, 0.0
          %v2971 = vsel %vm2575, %v2843, 0.0
          %v3036 = vcombine.high %v2908, %v2908
          %v3038 = vunpack.c.l.s4 1983009808
          %v3039 = vunpack.c.0.s8 %v3038
          %v3040 = vlaneseq
          %v3041 = vshrl.u32 %v3040, 7
          %v3042 = vsub.s32 %v3039, %v3041
          %v3043 = vrot.slane %v2908, %v3042
          %v3045 = vunpack.c.l.s4 1983009808
          %v3046 = vunpack.c.0.s8 %v3045
          %v3047 = vlaneseq
          %v3048 = vshrl.u32 %v3047, 7
          %v3049 = vsub.s32 %v3046, %v3048
          %v3050 = vrot.slane %v3036, %v3049
          %v3051 = vcombine.high %v3043, %v3043
          %v3052 = vcombine.high %v3050, %v3050
          %v3053 = vcombine.high %v2909, %v2909
          %v3055 = vunpack.c.l.s4 1983009808
          %v3056 = vunpack.c.0.s8 %v3055
          %v3057 = vlaneseq
          %v3058 = vshrl.u32 %v3057, 7
          %v3059 = vsub.s32 %v3056, %v3058
          %v3060 = vrot.slane %v2909, %v3059
          %v3062 = vunpack.c.l.s4 1983009808
          %v3063 = vunpack.c.0.s8 %v3062
          %v3064 = vlaneseq
          %v3065 = vshrl.u32 %v3064, 7
          %v3066 = vsub.s32 %v3063, %v3065
          %v3067 = vrot.slane %v3053, %v3066
          %v3068 = vcombine.high %v3060, %v3060
          %v3069 = vcombine.high %v3067, %v3067
          %v3070 = vcombine.high %v2910, %v2910
          %v3072 = vunpack.c.l.s4 1983009808
          %v3073 = vunpack.c.0.s8 %v3072
          %v3074 = vlaneseq
          %v3075 = vshrl.u32 %v3074, 7
          %v3076 = vsub.s32 %v3073, %v3075
          %v3077 = vrot.slane %v2910, %v3076
          %v3079 = vunpack.c.l.s4 1983009808
          %v3080 = vunpack.c.0.s8 %v3079
          %v3081 = vlaneseq
          %v3082 = vshrl.u32 %v3081, 7
          %v3083 = vsub.s32 %v3080, %v3082
          %v3084 = vrot.slane %v3070, %v3083
          %v3085 = vcombine.high %v3077, %v3077
          %v3086 = vcombine.high %v3084, %v3084
          %v3087 = vcombine.high %v2911, %v2911
          %v3089 = vunpack.c.l.s4 1983009808
          %v3090 = vunpack.c.0.s8 %v3089
          %v3091 = vlaneseq
          %v3092 = vshrl.u32 %v3091, 7
          %v3093 = vsub.s32 %v3090, %v3092
          %v3094 = vrot.slane %v2911, %v3093
          %v3096 = vunpack.c.l.s4 1983009808
          %v3097 = vunpack.c.0.s8 %v3096
          %v3098 = vlaneseq
          %v3099 = vshrl.u32 %v3098, 7
          %v3100 = vsub.s32 %v3097, %v3099
          %v3101 = vrot.slane %v3087, %v3100
          %v3102 = vcombine.high %v3094, %v3094
          %v3103 = vcombine.high %v3101, %v3101
          %v3104 = vcombine.high %v2912, %v2912
          %v3106 = vunpack.c.l.s4 1983009808
          %v3107 = vunpack.c.0.s8 %v3106
          %v3108 = vlaneseq
          %v3109 = vshrl.u32 %v3108, 7
          %v3110 = vsub.s32 %v3107, %v3109
          %v3111 = vrot.slane %v2912, %v3110
          %v3113 = vunpack.c.l.s4 1983009808
          %v3114 = vunpack.c.0.s8 %v3113
          %v3115 = vlaneseq
          %v3116 = vshrl.u32 %v3115, 7
          %v3117 = vsub.s32 %v3114, %v3116
          %v3118 = vrot.slane %v3104, %v3117
          %v3119 = vcombine.high %v3111, %v3111
          %v3120 = vcombine.high %v3118, %v3118
          %v3121 = vcombine.high %v2913, %v2913
          %v3123 = vunpack.c.l.s4 1983009808
          %v3124 = vunpack.c.0.s8 %v3123
          %v3125 = vlaneseq
          %v3126 = vshrl.u32 %v3125, 7
          %v3127 = vsub.s32 %v3124, %v3126
          %v3128 = vrot.slane %v2913, %v3127
          %v3130 = vunpack.c.l.s4 1983009808
          %v3131 = vunpack.c.0.s8 %v3130
          %v3132 = vlaneseq
          %v3133 = vshrl.u32 %v3132, 7
          %v3134 = vsub.s32 %v3131, %v3133
          %v3135 = vrot.slane %v3121, %v3134
          %v3136 = vcombine.high %v3128, %v3128
          %v3137 = vcombine.high %v3135, %v3135
          %v3138 = vcombine.high %v2914, %v2914
          %v3140 = vunpack.c.l.s4 1983009808
          %v3141 = vunpack.c.0.s8 %v3140
          %v3142 = vlaneseq
          %v3143 = vshrl.u32 %v3142, 7
          %v3144 = vsub.s32 %v3141, %v3143
          %v3145 = vrot.slane %v2914, %v3144
          %v3147 = vunpack.c.l.s4 1983009808
          %v3148 = vunpack.c.0.s8 %v3147
          %v3149 = vlaneseq
          %v3150 = vshrl.u32 %v3149, 7
          %v3151 = vsub.s32 %v3148, %v3150
          %v3152 = vrot.slane %v3138, %v3151
          %v3153 = vcombine.high %v3145, %v3145
          %v3154 = vcombine.high %v3152, %v3152
          %v3155 = vcombine.high %v2915, %v2915
          %v3157 = vunpack.c.l.s4 1983009808
          %v3158 = vunpack.c.0.s8 %v3157
          %v3159 = vlaneseq
          %v3160 = vshrl.u32 %v3159, 7
          %v3161 = vsub.s32 %v3158, %v3160
          %v3162 = vrot.slane %v2915, %v3161
          %v3164 = vunpack.c.l.s4 1983009808
          %v3165 = vunpack.c.0.s8 %v3164
          %v3166 = vlaneseq
          %v3167 = vshrl.u32 %v3166, 7
          %v3168 = vsub.s32 %v3165, %v3167
          %v3169 = vrot.slane %v3155, %v3168
          %v3170 = vcombine.high %v3162, %v3162
          %v3171 = vcombine.high %v3169, %v3169
          %v3172 = vcombine.high %v2916, %v2916
          %v3174 = vunpack.c.l.s4 1983009808
          %v3175 = vunpack.c.0.s8 %v3174
          %v3176 = vlaneseq
          %v3177 = vshrl.u32 %v3176, 7
          %v3178 = vsub.s32 %v3175, %v3177
          %v3179 = vrot.slane %v2916, %v3178
          %v3181 = vunpack.c.l.s4 1983009808
          %v3182 = vunpack.c.0.s8 %v3181
          %v3183 = vlaneseq
          %v3184 = vshrl.u32 %v3183, 7
          %v3185 = vsub.s32 %v3182, %v3184
          %v3186 = vrot.slane %v3172, %v3185
          %v3187 = vcombine.high %v3179, %v3179
          %v3188 = vcombine.high %v3186, %v3186
          %v3189 = vcombine.high %v2917, %v2917
          %v3191 = vunpack.c.l.s4 1983009808
          %v3192 = vunpack.c.0.s8 %v3191
          %v3193 = vlaneseq
          %v3194 = vshrl.u32 %v3193, 7
          %v3195 = vsub.s32 %v3192, %v3194
          %v3196 = vrot.slane %v2917, %v3195
          %v3198 = vunpack.c.l.s4 1983009808
          %v3199 = vunpack.c.0.s8 %v3198
          %v3200 = vlaneseq
          %v3201 = vshrl.u32 %v3200, 7
          %v3202 = vsub.s32 %v3199, %v3201
          %v3203 = vrot.slane %v3189, %v3202
          %v3204 = vcombine.high %v3196, %v3196
          %v3205 = vcombine.high %v3203, %v3203
          %v3206 = vcombine.high %v2918, %v2918
          %v3208 = vunpack.c.l.s4 1983009808
          %v3209 = vunpack.c.0.s8 %v3208
          %v3210 = vlaneseq
          %v3211 = vshrl.u32 %v3210, 7
          %v3212 = vsub.s32 %v3209, %v3211
          %v3213 = vrot.slane %v2918, %v3212
          %v3215 = vunpack.c.l.s4 1983009808
          %v3216 = vunpack.c.0.s8 %v3215
          %v3217 = vlaneseq
          %v3218 = vshrl.u32 %v3217, 7
          %v3219 = vsub.s32 %v3216, %v3218
          %v3220 = vrot.slane %v3206, %v3219
          %v3221 = vcombine.high %v3213, %v3213
          %v3222 = vcombine.high %v3220, %v3220
          %v3223 = vcombine.high %v2919, %v2919
          %v3225 = vunpack.c.l.s4 1983009808
          %v3226 = vunpack.c.0.s8 %v3225
          %v3227 = vlaneseq
          %v3228 = vshrl.u32 %v3227, 7
          %v3229 = vsub.s32 %v3226, %v3228
          %v3230 = vrot.slane %v2919, %v3229
          %v3232 = vunpack.c.l.s4 1983009808
          %v3233 = vunpack.c.0.s8 %v3232
          %v3234 = vlaneseq
          %v3235 = vshrl.u32 %v3234, 7
          %v3236 = vsub.s32 %v3233, %v3235
          %v3237 = vrot.slane %v3223, %v3236
          %v3238 = vcombine.high %v3230, %v3230
          %v3239 = vcombine.high %v3237, %v3237
          %v3240 = vcombine.high %v2920, %v2920
          %v3242 = vunpack.c.l.s4 1983009808
          %v3243 = vunpack.c.0.s8 %v3242
          %v3244 = vlaneseq
          %v3245 = vshrl.u32 %v3244, 7
          %v3246 = vsub.s32 %v3243, %v3245
          %v3247 = vrot.slane %v2920, %v3246
          %v3249 = vunpack.c.l.s4 1983009808
          %v3250 = vunpack.c.0.s8 %v3249
          %v3251 = vlaneseq
          %v3252 = vshrl.u32 %v3251, 7
          %v3253 = vsub.s32 %v3250, %v3252
          %v3254 = vrot.slane %v3240, %v3253
          %v3255 = vcombine.high %v3247, %v3247
          %v3256 = vcombine.high %v3254, %v3254
          %v3257 = vcombine.high %v2921, %v2921
          %v3259 = vunpack.c.l.s4 1983009808
          %v3260 = vunpack.c.0.s8 %v3259
          %v3261 = vlaneseq
          %v3262 = vshrl.u32 %v3261, 7
          %v3263 = vsub.s32 %v3260, %v3262
          %v3264 = vrot.slane %v2921, %v3263
          %v3266 = vunpack.c.l.s4 1983009808
          %v3267 = vunpack.c.0.s8 %v3266
          %v3268 = vlaneseq
          %v3269 = vshrl.u32 %v3268, 7
          %v3270 = vsub.s32 %v3267, %v3269
          %v3271 = vrot.slane %v3257, %v3270
          %v3272 = vcombine.high %v3264, %v3264
          %v3273 = vcombine.high %v3271, %v3271
          %v3274 = vcombine.high %v2922, %v2922
          %v3276 = vunpack.c.l.s4 1983009808
          %v3277 = vunpack.c.0.s8 %v3276
          %v3278 = vlaneseq
          %v3279 = vshrl.u32 %v3278, 7
          %v3280 = vsub.s32 %v3277, %v3279
          %v3281 = vrot.slane %v2922, %v3280
          %v3283 = vunpack.c.l.s4 1983009808
          %v3284 = vunpack.c.0.s8 %v3283
          %v3285 = vlaneseq
          %v3286 = vshrl.u32 %v3285, 7
          %v3287 = vsub.s32 %v3284, %v3286
          %v3288 = vrot.slane %v3274, %v3287
          %v3289 = vcombine.high %v3281, %v3281
          %v3290 = vcombine.high %v3288, %v3288
          %v3291 = vcombine.high %v2923, %v2923
          %v3293 = vunpack.c.l.s4 1983009808
          %v3294 = vunpack.c.0.s8 %v3293
          %v3295 = vlaneseq
          %v3296 = vshrl.u32 %v3295, 7
          %v3297 = vsub.s32 %v3294, %v3296
          %v3298 = vrot.slane %v2923, %v3297
          %v3300 = vunpack.c.l.s4 1983009808
          %v3301 = vunpack.c.0.s8 %v3300
          %v3302 = vlaneseq
          %v3303 = vshrl.u32 %v3302, 7
          %v3304 = vsub.s32 %v3301, %v3303
          %v3305 = vrot.slane %v3291, %v3304
          %v3306 = vcombine.high %v3298, %v3298
          %v3307 = vcombine.high %v3305, %v3305
          %v3308 = vcombine.high %v2924, %v2924
          %v3310 = vunpack.c.l.s4 1983009808
          %v3311 = vunpack.c.0.s8 %v3310
          %v3312 = vlaneseq
          %v3313 = vshrl.u32 %v3312, 7
          %v3314 = vsub.s32 %v3311, %v3313
          %v3315 = vrot.slane %v2924, %v3314
          %v3317 = vunpack.c.l.s4 1983009808
          %v3318 = vunpack.c.0.s8 %v3317
          %v3319 = vlaneseq
          %v3320 = vshrl.u32 %v3319, 7
          %v3321 = vsub.s32 %v3318, %v3320
          %v3322 = vrot.slane %v3308, %v3321
          %v3323 = vcombine.high %v3315, %v3315
          %v3324 = vcombine.high %v3322, %v3322
          %v3325 = vcombine.high %v2925, %v2925
          %v3327 = vunpack.c.l.s4 1983009808
          %v3328 = vunpack.c.0.s8 %v3327
          %v3329 = vlaneseq
          %v3330 = vshrl.u32 %v3329, 7
          %v3331 = vsub.s32 %v3328, %v3330
          %v3332 = vrot.slane %v2925, %v3331
          %v3334 = vunpack.c.l.s4 1983009808
          %v3335 = vunpack.c.0.s8 %v3334
          %v3336 = vlaneseq
          %v3337 = vshrl.u32 %v3336, 7
          %v3338 = vsub.s32 %v3335, %v3337
          %v3339 = vrot.slane %v3325, %v3338
          %v3340 = vcombine.high %v3332, %v3332
          %v3341 = vcombine.high %v3339, %v3339
          %v3342 = vcombine.high %v2926, %v2926
          %v3344 = vunpack.c.l.s4 1983009808
          %v3345 = vunpack.c.0.s8 %v3344
          %v3346 = vlaneseq
          %v3347 = vshrl.u32 %v3346, 7
          %v3348 = vsub.s32 %v3345, %v3347
          %v3349 = vrot.slane %v2926, %v3348
          %v3351 = vunpack.c.l.s4 1983009808
          %v3352 = vunpack.c.0.s8 %v3351
          %v3353 = vlaneseq
          %v3354 = vshrl.u32 %v3353, 7
          %v3355 = vsub.s32 %v3352, %v3354
          %v3356 = vrot.slane %v3342, %v3355
          %v3357 = vcombine.high %v3349, %v3349
          %v3358 = vcombine.high %v3356, %v3356
          %v3359 = vcombine.high %v2927, %v2927
          %v3361 = vunpack.c.l.s4 1983009808
          %v3362 = vunpack.c.0.s8 %v3361
          %v3363 = vlaneseq
          %v3364 = vshrl.u32 %v3363, 7
          %v3365 = vsub.s32 %v3362, %v3364
          %v3366 = vrot.slane %v2927, %v3365
          %v3368 = vunpack.c.l.s4 1983009808
          %v3369 = vunpack.c.0.s8 %v3368
          %v3370 = vlaneseq
          %v3371 = vshrl.u32 %v3370, 7
          %v3372 = vsub.s32 %v3369, %v3371
          %v3373 = vrot.slane %v3359, %v3372
          %v3374 = vcombine.high %v3366, %v3366
          %v3375 = vcombine.high %v3373, %v3373
          %v3376 = vcombine.high %v2928, %v2928
          %v3378 = vunpack.c.l.s4 1983009808
          %v3379 = vunpack.c.0.s8 %v3378
          %v3380 = vlaneseq
          %v3381 = vshrl.u32 %v3380, 7
          %v3382 = vsub.s32 %v3379, %v3381
          %v3383 = vrot.slane %v2928, %v3382
          %v3385 = vunpack.c.l.s4 1983009808
          %v3386 = vunpack.c.0.s8 %v3385
          %v3387 = vlaneseq
          %v3388 = vshrl.u32 %v3387, 7
          %v3389 = vsub.s32 %v3386, %v3388
          %v3390 = vrot.slane %v3376, %v3389
          %v3391 = vcombine.high %v3383, %v3383
          %v3392 = vcombine.high %v3390, %v3390
          %v3393 = vcombine.high %v2929, %v2929
          %v3395 = vunpack.c.l.s4 1983009808
          %v3396 = vunpack.c.0.s8 %v3395
          %v3397 = vlaneseq
          %v3398 = vshrl.u32 %v3397, 7
          %v3399 = vsub.s32 %v3396, %v3398
          %v3400 = vrot.slane %v2929, %v3399
          %v3402 = vunpack.c.l.s4 1983009808
          %v3403 = vunpack.c.0.s8 %v3402
          %v3404 = vlaneseq
          %v3405 = vshrl.u32 %v3404, 7
          %v3406 = vsub.s32 %v3403, %v3405
          %v3407 = vrot.slane %v3393, %v3406
          %v3408 = vcombine.high %v3400, %v3400
          %v3409 = vcombine.high %v3407, %v3407
          %v3410 = vcombine.high %v2930, %v2930
          %v3412 = vunpack.c.l.s4 1983009808
          %v3413 = vunpack.c.0.s8 %v3412
          %v3414 = vlaneseq
          %v3415 = vshrl.u32 %v3414, 7
          %v3416 = vsub.s32 %v3413, %v3415
          %v3417 = vrot.slane %v2930, %v3416
          %v3419 = vunpack.c.l.s4 1983009808
          %v3420 = vunpack.c.0.s8 %v3419
          %v3421 = vlaneseq
          %v3422 = vshrl.u32 %v3421, 7
          %v3423 = vsub.s32 %v3420, %v3422
          %v3424 = vrot.slane %v3410, %v3423
          %v3425 = vcombine.high %v3417, %v3417
          %v3426 = vcombine.high %v3424, %v3424
          %v3427 = vcombine.high %v2931, %v2931
          %v3429 = vunpack.c.l.s4 1983009808
          %v3430 = vunpack.c.0.s8 %v3429
          %v3431 = vlaneseq
          %v3432 = vshrl.u32 %v3431, 7
          %v3433 = vsub.s32 %v3430, %v3432
          %v3434 = vrot.slane %v2931, %v3433
          %v3436 = vunpack.c.l.s4 1983009808
          %v3437 = vunpack.c.0.s8 %v3436
          %v3438 = vlaneseq
          %v3439 = vshrl.u32 %v3438, 7
          %v3440 = vsub.s32 %v3437, %v3439
          %v3441 = vrot.slane %v3427, %v3440
          %v3442 = vcombine.high %v3434, %v3434
          %v3443 = vcombine.high %v3441, %v3441
          %v3444 = vcombine.high %v2932, %v2932
          %v3446 = vunpack.c.l.s4 1983009808
          %v3447 = vunpack.c.0.s8 %v3446
          %v3448 = vlaneseq
          %v3449 = vshrl.u32 %v3448, 7
          %v3450 = vsub.s32 %v3447, %v3449
          %v3451 = vrot.slane %v2932, %v3450
          %v3453 = vunpack.c.l.s4 1983009808
          %v3454 = vunpack.c.0.s8 %v3453
          %v3455 = vlaneseq
          %v3456 = vshrl.u32 %v3455, 7
          %v3457 = vsub.s32 %v3454, %v3456
          %v3458 = vrot.slane %v3444, %v3457
          %v3459 = vcombine.high %v3451, %v3451
          %v3460 = vcombine.high %v3458, %v3458
          %v3461 = vcombine.high %v2933, %v2933
          %v3463 = vunpack.c.l.s4 1983009808
          %v3464 = vunpack.c.0.s8 %v3463
          %v3465 = vlaneseq
          %v3466 = vshrl.u32 %v3465, 7
          %v3467 = vsub.s32 %v3464, %v3466
          %v3468 = vrot.slane %v2933, %v3467
          %v3470 = vunpack.c.l.s4 1983009808
          %v3471 = vunpack.c.0.s8 %v3470
          %v3472 = vlaneseq
          %v3473 = vshrl.u32 %v3472, 7
          %v3474 = vsub.s32 %v3471, %v3473
          %v3475 = vrot.slane %v3461, %v3474
          %v3476 = vcombine.high %v3468, %v3468
          %v3477 = vcombine.high %v3475, %v3475
          %v3478 = vcombine.high %v2934, %v2934
          %v3480 = vunpack.c.l.s4 1983009808
          %v3481 = vunpack.c.0.s8 %v3480
          %v3482 = vlaneseq
          %v3483 = vshrl.u32 %v3482, 7
          %v3484 = vsub.s32 %v3481, %v3483
          %v3485 = vrot.slane %v2934, %v3484
          %v3487 = vunpack.c.l.s4 1983009808
          %v3488 = vunpack.c.0.s8 %v3487
          %v3489 = vlaneseq
          %v3490 = vshrl.u32 %v3489, 7
          %v3491 = vsub.s32 %v3488, %v3490
          %v3492 = vrot.slane %v3478, %v3491
          %v3493 = vcombine.high %v3485, %v3485
          %v3494 = vcombine.high %v3492, %v3492
          %v3495 = vcombine.high %v2935, %v2935
          %v3497 = vunpack.c.l.s4 1983009808
          %v3498 = vunpack.c.0.s8 %v3497
          %v3499 = vlaneseq
          %v3500 = vshrl.u32 %v3499, 7
          %v3501 = vsub.s32 %v3498, %v3500
          %v3502 = vrot.slane %v2935, %v3501
          %v3504 = vunpack.c.l.s4 1983009808
          %v3505 = vunpack.c.0.s8 %v3504
          %v3506 = vlaneseq
          %v3507 = vshrl.u32 %v3506, 7
          %v3508 = vsub.s32 %v3505, %v3507
          %v3509 = vrot.slane %v3495, %v3508
          %v3510 = vcombine.high %v3502, %v3502
          %v3511 = vcombine.high %v3509, %v3509
          %v3512 = vcombine.high %v2936, %v2936
          %v3514 = vunpack.c.l.s4 1983009808
          %v3515 = vunpack.c.0.s8 %v3514
          %v3516 = vlaneseq
          %v3517 = vshrl.u32 %v3516, 7
          %v3518 = vsub.s32 %v3515, %v3517
          %v3519 = vrot.slane %v2936, %v3518
          %v3521 = vunpack.c.l.s4 1983009808
          %v3522 = vunpack.c.0.s8 %v3521
          %v3523 = vlaneseq
          %v3524 = vshrl.u32 %v3523, 7
          %v3525 = vsub.s32 %v3522, %v3524
          %v3526 = vrot.slane %v3512, %v3525
          %v3527 = vcombine.high %v3519, %v3519
          %v3528 = vcombine.high %v3526, %v3526
          %v3529 = vcombine.high %v2937, %v2937
          %v3531 = vunpack.c.l.s4 1983009808
          %v3532 = vunpack.c.0.s8 %v3531
          %v3533 = vlaneseq
          %v3534 = vshrl.u32 %v3533, 7
          %v3535 = vsub.s32 %v3532, %v3534
          %v3536 = vrot.slane %v2937, %v3535
          %v3538 = vunpack.c.l.s4 1983009808
          %v3539 = vunpack.c.0.s8 %v3538
          %v3540 = vlaneseq
          %v3541 = vshrl.u32 %v3540, 7
          %v3542 = vsub.s32 %v3539, %v3541
          %v3543 = vrot.slane %v3529, %v3542
          %v3544 = vcombine.high %v3536, %v3536
          %v3545 = vcombine.high %v3543, %v3543
          %v3546 = vcombine.high %v2938, %v2938
          %v3548 = vunpack.c.l.s4 1983009808
          %v3549 = vunpack.c.0.s8 %v3548
          %v3550 = vlaneseq
          %v3551 = vshrl.u32 %v3550, 7
          %v3552 = vsub.s32 %v3549, %v3551
          %v3553 = vrot.slane %v2938, %v3552
          %v3555 = vunpack.c.l.s4 1983009808
          %v3556 = vunpack.c.0.s8 %v3555
          %v3557 = vlaneseq
          %v3558 = vshrl.u32 %v3557, 7
          %v3559 = vsub.s32 %v3556, %v3558
          %v3560 = vrot.slane %v3546, %v3559
          %v3561 = vcombine.high %v3553, %v3553
          %v3562 = vcombine.high %v3560, %v3560
          %v3563 = vcombine.high %v2939, %v2939
          %v3565 = vunpack.c.l.s4 1983009808
          %v3566 = vunpack.c.0.s8 %v3565
          %v3567 = vlaneseq
          %v3568 = vshrl.u32 %v3567, 7
          %v3569 = vsub.s32 %v3566, %v3568
          %v3570 = vrot.slane %v2939, %v3569
          %v3572 = vunpack.c.l.s4 1983009808
          %v3573 = vunpack.c.0.s8 %v3572
          %v3574 = vlaneseq
          %v3575 = vshrl.u32 %v3574, 7
          %v3576 = vsub.s32 %v3573, %v3575
          %v3577 = vrot.slane %v3563, %v3576
          %v3578 = vcombine.high %v3570, %v3570
          %v3579 = vcombine.high %v3577, %v3577
          %v3580 = vcombine.high %v2940, %v2940
          %v3582 = vunpack.c.l.s4 1983009808
          %v3583 = vunpack.c.0.s8 %v3582
          %v3584 = vlaneseq
          %v3585 = vshrl.u32 %v3584, 7
          %v3586 = vsub.s32 %v3583, %v3585
          %v3587 = vrot.slane %v2940, %v3586
          %v3589 = vunpack.c.l.s4 1983009808
          %v3590 = vunpack.c.0.s8 %v3589
          %v3591 = vlaneseq
          %v3592 = vshrl.u32 %v3591, 7
          %v3593 = vsub.s32 %v3590, %v3592
          %v3594 = vrot.slane %v3580, %v3593
          %v3595 = vcombine.high %v3587, %v3587
          %v3596 = vcombine.high %v3594, %v3594
          %v3597 = vcombine.high %v2941, %v2941
          %v3599 = vunpack.c.l.s4 1983009808
          %v3600 = vunpack.c.0.s8 %v3599
          %v3601 = vlaneseq
          %v3602 = vshrl.u32 %v3601, 7
          %v3603 = vsub.s32 %v3600, %v3602
          %v3604 = vrot.slane %v2941, %v3603
          %v3606 = vunpack.c.l.s4 1983009808
          %v3607 = vunpack.c.0.s8 %v3606
          %v3608 = vlaneseq
          %v3609 = vshrl.u32 %v3608, 7
          %v3610 = vsub.s32 %v3607, %v3609
          %v3611 = vrot.slane %v3597, %v3610
          %v3612 = vcombine.high %v3604, %v3604
          %v3613 = vcombine.high %v3611, %v3611
          %v3614 = vcombine.high %v2942, %v2942
          %v3616 = vunpack.c.l.s4 1983009808
          %v3617 = vunpack.c.0.s8 %v3616
          %v3618 = vlaneseq
          %v3619 = vshrl.u32 %v3618, 7
          %v3620 = vsub.s32 %v3617, %v3619
          %v3621 = vrot.slane %v2942, %v3620
          %v3623 = vunpack.c.l.s4 1983009808
          %v3624 = vunpack.c.0.s8 %v3623
          %v3625 = vlaneseq
          %v3626 = vshrl.u32 %v3625, 7
          %v3627 = vsub.s32 %v3624, %v3626
          %v3628 = vrot.slane %v3614, %v3627
          %v3629 = vcombine.high %v3621, %v3621
          %v3630 = vcombine.high %v3628, %v3628
          %v3631 = vcombine.high %v2943, %v2943
          %v3633 = vunpack.c.l.s4 1983009808
          %v3634 = vunpack.c.0.s8 %v3633
          %v3635 = vlaneseq
          %v3636 = vshrl.u32 %v3635, 7
          %v3637 = vsub.s32 %v3634, %v3636
          %v3638 = vrot.slane %v2943, %v3637
          %v3640 = vunpack.c.l.s4 1983009808
          %v3641 = vunpack.c.0.s8 %v3640
          %v3642 = vlaneseq
          %v3643 = vshrl.u32 %v3642, 7
          %v3644 = vsub.s32 %v3641, %v3643
          %v3645 = vrot.slane %v3631, %v3644
          %v3646 = vcombine.high %v3638, %v3638
          %v3647 = vcombine.high %v3645, %v3645
          %v3648 = vcombine.high %v2944, %v2944
          %v3650 = vunpack.c.l.s4 1983009808
          %v3651 = vunpack.c.0.s8 %v3650
          %v3652 = vlaneseq
          %v3653 = vshrl.u32 %v3652, 7
          %v3654 = vsub.s32 %v3651, %v3653
          %v3655 = vrot.slane %v2944, %v3654
          %v3657 = vunpack.c.l.s4 1983009808
          %v3658 = vunpack.c.0.s8 %v3657
          %v3659 = vlaneseq
          %v3660 = vshrl.u32 %v3659, 7
          %v3661 = vsub.s32 %v3658, %v3660
          %v3662 = vrot.slane %v3648, %v3661
          %v3663 = vcombine.high %v3655, %v3655
          %v3664 = vcombine.high %v3662, %v3662
          %v3665 = vcombine.high %v2945, %v2945
          %v3667 = vunpack.c.l.s4 1983009808
          %v3668 = vunpack.c.0.s8 %v3667
          %v3669 = vlaneseq
          %v3670 = vshrl.u32 %v3669, 7
          %v3671 = vsub.s32 %v3668, %v3670
          %v3672 = vrot.slane %v2945, %v3671
          %v3674 = vunpack.c.l.s4 1983009808
          %v3675 = vunpack.c.0.s8 %v3674
          %v3676 = vlaneseq
          %v3677 = vshrl.u32 %v3676, 7
          %v3678 = vsub.s32 %v3675, %v3677
          %v3679 = vrot.slane %v3665, %v3678
          %v3680 = vcombine.high %v3672, %v3672
          %v3681 = vcombine.high %v3679, %v3679
          %v3682 = vcombine.high %v2946, %v2946
          %v3684 = vunpack.c.l.s4 1983009808
          %v3685 = vunpack.c.0.s8 %v3684
          %v3686 = vlaneseq
          %v3687 = vshrl.u32 %v3686, 7
          %v3688 = vsub.s32 %v3685, %v3687
          %v3689 = vrot.slane %v2946, %v3688
          %v3691 = vunpack.c.l.s4 1983009808
          %v3692 = vunpack.c.0.s8 %v3691
          %v3693 = vlaneseq
          %v3694 = vshrl.u32 %v3693, 7
          %v3695 = vsub.s32 %v3692, %v3694
          %v3696 = vrot.slane %v3682, %v3695
          %v3697 = vcombine.high %v3689, %v3689
          %v3698 = vcombine.high %v3696, %v3696
          %v3699 = vcombine.high %v2947, %v2947
          %v3701 = vunpack.c.l.s4 1983009808
          %v3702 = vunpack.c.0.s8 %v3701
          %v3703 = vlaneseq
          %v3704 = vshrl.u32 %v3703, 7
          %v3705 = vsub.s32 %v3702, %v3704
          %v3706 = vrot.slane %v2947, %v3705
          %v3708 = vunpack.c.l.s4 1983009808
          %v3709 = vunpack.c.0.s8 %v3708
          %v3710 = vlaneseq
          %v3711 = vshrl.u32 %v3710, 7
          %v3712 = vsub.s32 %v3709, %v3711
          %v3713 = vrot.slane %v3699, %v3712
          %v3714 = vcombine.high %v3706, %v3706
          %v3715 = vcombine.high %v3713, %v3713
          %v3716 = vcombine.high %v2948, %v2948
          %v3718 = vunpack.c.l.s4 1983009808
          %v3719 = vunpack.c.0.s8 %v3718
          %v3720 = vlaneseq
          %v3721 = vshrl.u32 %v3720, 7
          %v3722 = vsub.s32 %v3719, %v3721
          %v3723 = vrot.slane %v2948, %v3722
          %v3725 = vunpack.c.l.s4 1983009808
          %v3726 = vunpack.c.0.s8 %v3725
          %v3727 = vlaneseq
          %v3728 = vshrl.u32 %v3727, 7
          %v3729 = vsub.s32 %v3726, %v3728
          %v3730 = vrot.slane %v3716, %v3729
          %v3731 = vcombine.high %v3723, %v3723
          %v3732 = vcombine.high %v3730, %v3730
          %v3733 = vcombine.high %v2949, %v2949
          %v3735 = vunpack.c.l.s4 1983009808
          %v3736 = vunpack.c.0.s8 %v3735
          %v3737 = vlaneseq
          %v3738 = vshrl.u32 %v3737, 7
          %v3739 = vsub.s32 %v3736, %v3738
          %v3740 = vrot.slane %v2949, %v3739
          %v3742 = vunpack.c.l.s4 1983009808
          %v3743 = vunpack.c.0.s8 %v3742
          %v3744 = vlaneseq
          %v3745 = vshrl.u32 %v3744, 7
          %v3746 = vsub.s32 %v3743, %v3745
          %v3747 = vrot.slane %v3733, %v3746
          %v3748 = vcombine.high %v3740, %v3740
          %v3749 = vcombine.high %v3747, %v3747
          %v3750 = vcombine.high %v2950, %v2950
          %v3752 = vunpack.c.l.s4 1983009808
          %v3753 = vunpack.c.0.s8 %v3752
          %v3754 = vlaneseq
          %v3755 = vshrl.u32 %v3754, 7
          %v3756 = vsub.s32 %v3753, %v3755
          %v3757 = vrot.slane %v2950, %v3756
          %v3759 = vunpack.c.l.s4 1983009808
          %v3760 = vunpack.c.0.s8 %v3759
          %v3761 = vlaneseq
          %v3762 = vshrl.u32 %v3761, 7
          %v3763 = vsub.s32 %v3760, %v3762
          %v3764 = vrot.slane %v3750, %v3763
          %v3765 = vcombine.high %v3757, %v3757
          %v3766 = vcombine.high %v3764, %v3764
          %v3767 = vcombine.high %v2951, %v2951
          %v3769 = vunpack.c.l.s4 1983009808
          %v3770 = vunpack.c.0.s8 %v3769
          %v3771 = vlaneseq
          %v3772 = vshrl.u32 %v3771, 7
          %v3773 = vsub.s32 %v3770, %v3772
          %v3774 = vrot.slane %v2951, %v3773
          %v3776 = vunpack.c.l.s4 1983009808
          %v3777 = vunpack.c.0.s8 %v3776
          %v3778 = vlaneseq
          %v3779 = vshrl.u32 %v3778, 7
          %v3780 = vsub.s32 %v3777, %v3779
          %v3781 = vrot.slane %v3767, %v3780
          %v3782 = vcombine.high %v3774, %v3774
          %v3783 = vcombine.high %v3781, %v3781
          %v3784 = vcombine.high %v2952, %v2952
          %v3786 = vunpack.c.l.s4 1983009808
          %v3787 = vunpack.c.0.s8 %v3786
          %v3788 = vlaneseq
          %v3789 = vshrl.u32 %v3788, 7
          %v3790 = vsub.s32 %v3787, %v3789
          %v3791 = vrot.slane %v2952, %v3790
          %v3793 = vunpack.c.l.s4 1983009808
          %v3794 = vunpack.c.0.s8 %v3793
          %v3795 = vlaneseq
          %v3796 = vshrl.u32 %v3795, 7
          %v3797 = vsub.s32 %v3794, %v3796
          %v3798 = vrot.slane %v3784, %v3797
          %v3799 = vcombine.high %v3791, %v3791
          %v3800 = vcombine.high %v3798, %v3798
          %v3801 = vcombine.high %v2953, %v2953
          %v3803 = vunpack.c.l.s4 1983009808
          %v3804 = vunpack.c.0.s8 %v3803
          %v3805 = vlaneseq
          %v3806 = vshrl.u32 %v3805, 7
          %v3807 = vsub.s32 %v3804, %v3806
          %v3808 = vrot.slane %v2953, %v3807
          %v3810 = vunpack.c.l.s4 1983009808
          %v3811 = vunpack.c.0.s8 %v3810
          %v3812 = vlaneseq
          %v3813 = vshrl.u32 %v3812, 7
          %v3814 = vsub.s32 %v3811, %v3813
          %v3815 = vrot.slane %v3801, %v3814
          %v3816 = vcombine.high %v3808, %v3808
          %v3817 = vcombine.high %v3815, %v3815
          %v3818 = vcombine.high %v2954, %v2954
          %v3820 = vunpack.c.l.s4 1983009808
          %v3821 = vunpack.c.0.s8 %v3820
          %v3822 = vlaneseq
          %v3823 = vshrl.u32 %v3822, 7
          %v3824 = vsub.s32 %v3821, %v3823
          %v3825 = vrot.slane %v2954, %v3824
          %v3827 = vunpack.c.l.s4 1983009808
          %v3828 = vunpack.c.0.s8 %v3827
          %v3829 = vlaneseq
          %v3830 = vshrl.u32 %v3829, 7
          %v3831 = vsub.s32 %v3828, %v3830
          %v3832 = vrot.slane %v3818, %v3831
          %v3833 = vcombine.high %v3825, %v3825
          %v3834 = vcombine.high %v3832, %v3832
          %v3835 = vcombine.high %v2955, %v2955
          %v3837 = vunpack.c.l.s4 1983009808
          %v3838 = vunpack.c.0.s8 %v3837
          %v3839 = vlaneseq
          %v3840 = vshrl.u32 %v3839, 7
          %v3841 = vsub.s32 %v3838, %v3840
          %v3842 = vrot.slane %v2955, %v3841
          %v3844 = vunpack.c.l.s4 1983009808
          %v3845 = vunpack.c.0.s8 %v3844
          %v3846 = vlaneseq
          %v3847 = vshrl.u32 %v3846, 7
          %v3848 = vsub.s32 %v3845, %v3847
          %v3849 = vrot.slane %v3835, %v3848
          %v3850 = vcombine.high %v3842, %v3842
          %v3851 = vcombine.high %v3849, %v3849
          %v3852 = vcombine.high %v2956, %v2956
          %v3854 = vunpack.c.l.s4 1983009808
          %v3855 = vunpack.c.0.s8 %v3854
          %v3856 = vlaneseq
          %v3857 = vshrl.u32 %v3856, 7
          %v3858 = vsub.s32 %v3855, %v3857
          %v3859 = vrot.slane %v2956, %v3858
          %v3861 = vunpack.c.l.s4 1983009808
          %v3862 = vunpack.c.0.s8 %v3861
          %v3863 = vlaneseq
          %v3864 = vshrl.u32 %v3863, 7
          %v3865 = vsub.s32 %v3862, %v3864
          %v3866 = vrot.slane %v3852, %v3865
          %v3867 = vcombine.high %v3859, %v3859
          %v3868 = vcombine.high %v3866, %v3866
          %v3869 = vcombine.high %v2957, %v2957
          %v3871 = vunpack.c.l.s4 1983009808
          %v3872 = vunpack.c.0.s8 %v3871
          %v3873 = vlaneseq
          %v3874 = vshrl.u32 %v3873, 7
          %v3875 = vsub.s32 %v3872, %v3874
          %v3876 = vrot.slane %v2957, %v3875
          %v3878 = vunpack.c.l.s4 1983009808
          %v3879 = vunpack.c.0.s8 %v3878
          %v3880 = vlaneseq
          %v3881 = vshrl.u32 %v3880, 7
          %v3882 = vsub.s32 %v3879, %v3881
          %v3883 = vrot.slane %v3869, %v3882
          %v3884 = vcombine.high %v3876, %v3876
          %v3885 = vcombine.high %v3883, %v3883
          %v3886 = vcombine.high %v2958, %v2958
          %v3888 = vunpack.c.l.s4 1983009808
          %v3889 = vunpack.c.0.s8 %v3888
          %v3890 = vlaneseq
          %v3891 = vshrl.u32 %v3890, 7
          %v3892 = vsub.s32 %v3889, %v3891
          %v3893 = vrot.slane %v2958, %v3892
          %v3895 = vunpack.c.l.s4 1983009808
          %v3896 = vunpack.c.0.s8 %v3895
          %v3897 = vlaneseq
          %v3898 = vshrl.u32 %v3897, 7
          %v3899 = vsub.s32 %v3896, %v3898
          %v3900 = vrot.slane %v3886, %v3899
          %v3901 = vcombine.high %v3893, %v3893
          %v3902 = vcombine.high %v3900, %v3900
          %v3903 = vcombine.high %v2959, %v2959
          %v3905 = vunpack.c.l.s4 1983009808
          %v3906 = vunpack.c.0.s8 %v3905
          %v3907 = vlaneseq
          %v3908 = vshrl.u32 %v3907, 7
          %v3909 = vsub.s32 %v3906, %v3908
          %v3910 = vrot.slane %v2959, %v3909
          %v3912 = vunpack.c.l.s4 1983009808
          %v3913 = vunpack.c.0.s8 %v3912
          %v3914 = vlaneseq
          %v3915 = vshrl.u32 %v3914, 7
          %v3916 = vsub.s32 %v3913, %v3915
          %v3917 = vrot.slane %v3903, %v3916
          %v3918 = vcombine.high %v3910, %v3910
          %v3919 = vcombine.high %v3917, %v3917
          %v3920 = vcombine.high %v2960, %v2960
          %v3922 = vunpack.c.l.s4 1983009808
          %v3923 = vunpack.c.0.s8 %v3922
          %v3924 = vlaneseq
          %v3925 = vshrl.u32 %v3924, 7
          %v3926 = vsub.s32 %v3923, %v3925
          %v3927 = vrot.slane %v2960, %v3926
          %v3929 = vunpack.c.l.s4 1983009808
          %v3930 = vunpack.c.0.s8 %v3929
          %v3931 = vlaneseq
          %v3932 = vshrl.u32 %v3931, 7
          %v3933 = vsub.s32 %v3930, %v3932
          %v3934 = vrot.slane %v3920, %v3933
          %v3935 = vcombine.high %v3927, %v3927
          %v3936 = vcombine.high %v3934, %v3934
          %v3937 = vcombine.high %v2961, %v2961
          %v3939 = vunpack.c.l.s4 1983009808
          %v3940 = vunpack.c.0.s8 %v3939
          %v3941 = vlaneseq
          %v3942 = vshrl.u32 %v3941, 7
          %v3943 = vsub.s32 %v3940, %v3942
          %v3944 = vrot.slane %v2961, %v3943
          %v3946 = vunpack.c.l.s4 1983009808
          %v3947 = vunpack.c.0.s8 %v3946
          %v3948 = vlaneseq
          %v3949 = vshrl.u32 %v3948, 7
          %v3950 = vsub.s32 %v3947, %v3949
          %v3951 = vrot.slane %v3937, %v3950
          %v3952 = vcombine.high %v3944, %v3944
          %v3953 = vcombine.high %v3951, %v3951
          %v3954 = vcombine.high %v2962, %v2962
          %v3956 = vunpack.c.l.s4 1983009808
          %v3957 = vunpack.c.0.s8 %v3956
          %v3958 = vlaneseq
          %v3959 = vshrl.u32 %v3958, 7
          %v3960 = vsub.s32 %v3957, %v3959
          %v3961 = vrot.slane %v2962, %v3960
          %v3963 = vunpack.c.l.s4 1983009808
          %v3964 = vunpack.c.0.s8 %v3963
          %v3965 = vlaneseq
          %v3966 = vshrl.u32 %v3965, 7
          %v3967 = vsub.s32 %v3964, %v3966
          %v3968 = vrot.slane %v3954, %v3967
          %v3969 = vcombine.high %v3961, %v3961
          %v3970 = vcombine.high %v3968, %v3968
          %v3971 = vcombine.high %v2963, %v2963
          %v3973 = vunpack.c.l.s4 1983009808
          %v3974 = vunpack.c.0.s8 %v3973
          %v3975 = vlaneseq
          %v3976 = vshrl.u32 %v3975, 7
          %v3977 = vsub.s32 %v3974, %v3976
          %v3978 = vrot.slane %v2963, %v3977
          %v3980 = vunpack.c.l.s4 1983009808
          %v3981 = vunpack.c.0.s8 %v3980
          %v3982 = vlaneseq
          %v3983 = vshrl.u32 %v3982, 7
          %v3984 = vsub.s32 %v3981, %v3983
          %v3985 = vrot.slane %v3971, %v3984
          %v3986 = vcombine.high %v3978, %v3978
          %v3987 = vcombine.high %v3985, %v3985
          %v3988 = vcombine.high %v2964, %v2964
          %v3990 = vunpack.c.l.s4 1983009808
          %v3991 = vunpack.c.0.s8 %v3990
          %v3992 = vlaneseq
          %v3993 = vshrl.u32 %v3992, 7
          %v3994 = vsub.s32 %v3991, %v3993
          %v3995 = vrot.slane %v2964, %v3994
          %v3997 = vunpack.c.l.s4 1983009808
          %v3998 = vunpack.c.0.s8 %v3997
          %v3999 = vlaneseq
          %v4000 = vshrl.u32 %v3999, 7
          %v4001 = vsub.s32 %v3998, %v4000
          %v4002 = vrot.slane %v3988, %v4001
          %v4003 = vcombine.high %v3995, %v3995
          %v4004 = vcombine.high %v4002, %v4002
          %v4005 = vcombine.high %v2965, %v2965
          %v4007 = vunpack.c.l.s4 1983009808
          %v4008 = vunpack.c.0.s8 %v4007
          %v4009 = vlaneseq
          %v4010 = vshrl.u32 %v4009, 7
          %v4011 = vsub.s32 %v4008, %v4010
          %v4012 = vrot.slane %v2965, %v4011
          %v4014 = vunpack.c.l.s4 1983009808
          %v4015 = vunpack.c.0.s8 %v4014
          %v4016 = vlaneseq
          %v4017 = vshrl.u32 %v4016, 7
          %v4018 = vsub.s32 %v4015, %v4017
          %v4019 = vrot.slane %v4005, %v4018
          %v4020 = vcombine.high %v4012, %v4012
          %v4021 = vcombine.high %v4019, %v4019
          %v4022 = vcombine.high %v2966, %v2966
          %v4024 = vunpack.c.l.s4 1983009808
          %v4025 = vunpack.c.0.s8 %v4024
          %v4026 = vlaneseq
          %v4027 = vshrl.u32 %v4026, 7
          %v4028 = vsub.s32 %v4025, %v4027
          %v4029 = vrot.slane %v2966, %v4028
          %v4031 = vunpack.c.l.s4 1983009808
          %v4032 = vunpack.c.0.s8 %v4031
          %v4033 = vlaneseq
          %v4034 = vshrl.u32 %v4033, 7
          %v4035 = vsub.s32 %v4032, %v4034
          %v4036 = vrot.slane %v4022, %v4035
          %v4037 = vcombine.high %v4029, %v4029
          %v4038 = vcombine.high %v4036, %v4036
          %v4039 = vcombine.high %v2967, %v2967
          %v4041 = vunpack.c.l.s4 1983009808
          %v4042 = vunpack.c.0.s8 %v4041
          %v4043 = vlaneseq
          %v4044 = vshrl.u32 %v4043, 7
          %v4045 = vsub.s32 %v4042, %v4044
          %v4046 = vrot.slane %v2967, %v4045
          %v4048 = vunpack.c.l.s4 1983009808
          %v4049 = vunpack.c.0.s8 %v4048
          %v4050 = vlaneseq
          %v4051 = vshrl.u32 %v4050, 7
          %v4052 = vsub.s32 %v4049, %v4051
          %v4053 = vrot.slane %v4039, %v4052
          %v4054 = vcombine.high %v4046, %v4046
          %v4055 = vcombine.high %v4053, %v4053
          %v4056 = vcombine.high %v2968, %v2968
          %v4058 = vunpack.c.l.s4 1983009808
          %v4059 = vunpack.c.0.s8 %v4058
          %v4060 = vlaneseq
          %v4061 = vshrl.u32 %v4060, 7
          %v4062 = vsub.s32 %v4059, %v4061
          %v4063 = vrot.slane %v2968, %v4062
          %v4065 = vunpack.c.l.s4 1983009808
          %v4066 = vunpack.c.0.s8 %v4065
          %v4067 = vlaneseq
          %v4068 = vshrl.u32 %v4067, 7
          %v4069 = vsub.s32 %v4066, %v4068
          %v4070 = vrot.slane %v4056, %v4069
          %v4071 = vcombine.high %v4063, %v4063
          %v4072 = vcombine.high %v4070, %v4070
          %v4073 = vcombine.high %v2969, %v2969
          %v4075 = vunpack.c.l.s4 1983009808
          %v4076 = vunpack.c.0.s8 %v4075
          %v4077 = vlaneseq
          %v4078 = vshrl.u32 %v4077, 7
          %v4079 = vsub.s32 %v4076, %v4078
          %v4080 = vrot.slane %v2969, %v4079
          %v4082 = vunpack.c.l.s4 1983009808
          %v4083 = vunpack.c.0.s8 %v4082
          %v4084 = vlaneseq
          %v4085 = vshrl.u32 %v4084, 7
          %v4086 = vsub.s32 %v4083, %v4085
          %v4087 = vrot.slane %v4073, %v4086
          %v4088 = vcombine.high %v4080, %v4080
          %v4089 = vcombine.high %v4087, %v4087
          %v4090 = vcombine.high %v2970, %v2970
          %v4092 = vunpack.c.l.s4 1983009808
          %v4093 = vunpack.c.0.s8 %v4092
          %v4094 = vlaneseq
          %v4095 = vshrl.u32 %v4094, 7
          %v4096 = vsub.s32 %v4093, %v4095
          %v4097 = vrot.slane %v2970, %v4096
          %v4099 = vunpack.c.l.s4 1983009808
          %v4100 = vunpack.c.0.s8 %v4099
          %v4101 = vlaneseq
          %v4102 = vshrl.u32 %v4101, 7
          %v4103 = vsub.s32 %v4100, %v4102
          %v4104 = vrot.slane %v4090, %v4103
          %v4105 = vcombine.high %v4097, %v4097
          %v4106 = vcombine.high %v4104, %v4104
          %v4107 = vcombine.high %v2971, %v2971
          %v4109 = vunpack.c.l.s4 1983009808
          %v4110 = vunpack.c.0.s8 %v4109
          %v4111 = vlaneseq
          %v4112 = vshrl.u32 %v4111, 7
          %v4113 = vsub.s32 %v4110, %v4112
          %v4114 = vrot.slane %v2971, %v4113
          %v4116 = vunpack.c.l.s4 1983009808
          %v4117 = vunpack.c.0.s8 %v4116
          %v4118 = vlaneseq
          %v4119 = vshrl.u32 %v4118, 7
          %v4120 = vsub.s32 %v4117, %v4119
          %v4121 = vrot.slane %v4107, %v4120
          %v4122 = vcombine.high %v4114, %v4114
          %v4123 = vcombine.high %v4121, %v4121
          %v4124 = vcombine.low %v3043, %v3051
          %v4125 = vcombine.low %v3050, %v3052
          %v4127 = vunpack.c.l.s4 1983009808
          %v4128 = vunpack.c.0.s8 %v4127
          %v4129 = vlaneseq
          %v4130 = vshrl.u32 %v4129, 7
          %v4131 = vsub.s32 %v4128, %v4130
          %v4132 = vrot.slane %v4124, %v4131
          %v4134 = vunpack.c.l.s4 1983009808
          %v4135 = vunpack.c.0.s8 %v4134
          %v4136 = vlaneseq
          %v4137 = vshrl.u32 %v4136, 7
          %v4138 = vsub.s32 %v4135, %v4137
          %v4139 = vrot.slane %v4125, %v4138
          %v4140 = vcombine.low %v4132, %v4139
          %v4141 = vcombine.low %v3060, %v3068
          %v4142 = vcombine.low %v3067, %v3069
          %v4144 = vunpack.c.l.s4 1983009808
          %v4145 = vunpack.c.0.s8 %v4144
          %v4146 = vlaneseq
          %v4147 = vshrl.u32 %v4146, 7
          %v4148 = vsub.s32 %v4145, %v4147
          %v4149 = vrot.slane %v4141, %v4148
          %v4151 = vunpack.c.l.s4 1983009808
          %v4152 = vunpack.c.0.s8 %v4151
          %v4153 = vlaneseq
          %v4154 = vshrl.u32 %v4153, 7
          %v4155 = vsub.s32 %v4152, %v4154
          %v4156 = vrot.slane %v4142, %v4155
          %v4157 = vcombine.low %v4149, %v4156
          %v4158 = vcombine.low %v3077, %v3085
          %v4159 = vcombine.low %v3084, %v3086
          %v4161 = vunpack.c.l.s4 1983009808
          %v4162 = vunpack.c.0.s8 %v4161
          %v4163 = vlaneseq
          %v4164 = vshrl.u32 %v4163, 7
          %v4165 = vsub.s32 %v4162, %v4164
          %v4166 = vrot.slane %v4158, %v4165
          %v4168 = vunpack.c.l.s4 1983009808
          %v4169 = vunpack.c.0.s8 %v4168
          %v4170 = vlaneseq
          %v4171 = vshrl.u32 %v4170, 7
          %v4172 = vsub.s32 %v4169, %v4171
          %v4173 = vrot.slane %v4159, %v4172
          %v4174 = vcombine.low %v4166, %v4173
          %v4175 = vcombine.low %v3094, %v3102
          %v4176 = vcombine.low %v3101, %v3103
          %v4178 = vunpack.c.l.s4 1983009808
          %v4179 = vunpack.c.0.s8 %v4178
          %v4180 = vlaneseq
          %v4181 = vshrl.u32 %v4180, 7
          %v4182 = vsub.s32 %v4179, %v4181
          %v4183 = vrot.slane %v4175, %v4182
          %v4185 = vunpack.c.l.s4 1983009808
          %v4186 = vunpack.c.0.s8 %v4185
          %v4187 = vlaneseq
          %v4188 = vshrl.u32 %v4187, 7
          %v4189 = vsub.s32 %v4186, %v4188
          %v4190 = vrot.slane %v4176, %v4189
          %v4191 = vcombine.low %v4183, %v4190
          %v4192 = vcombine.low %v3111, %v3119
          %v4193 = vcombine.low %v3118, %v3120
          %v4195 = vunpack.c.l.s4 1983009808
          %v4196 = vunpack.c.0.s8 %v4195
          %v4197 = vlaneseq
          %v4198 = vshrl.u32 %v4197, 7
          %v4199 = vsub.s32 %v4196, %v4198
          %v4200 = vrot.slane %v4192, %v4199
          %v4202 = vunpack.c.l.s4 1983009808
          %v4203 = vunpack.c.0.s8 %v4202
          %v4204 = vlaneseq
          %v4205 = vshrl.u32 %v4204, 7
          %v4206 = vsub.s32 %v4203, %v4205
          %v4207 = vrot.slane %v4193, %v4206
          %v4208 = vcombine.low %v4200, %v4207
          %v4209 = vcombine.low %v3128, %v3136
          %v4210 = vcombine.low %v3135, %v3137
          %v4212 = vunpack.c.l.s4 1983009808
          %v4213 = vunpack.c.0.s8 %v4212
          %v4214 = vlaneseq
          %v4215 = vshrl.u32 %v4214, 7
          %v4216 = vsub.s32 %v4213, %v4215
          %v4217 = vrot.slane %v4209, %v4216
          %v4219 = vunpack.c.l.s4 1983009808
          %v4220 = vunpack.c.0.s8 %v4219
          %v4221 = vlaneseq
          %v4222 = vshrl.u32 %v4221, 7
          %v4223 = vsub.s32 %v4220, %v4222
          %v4224 = vrot.slane %v4210, %v4223
          %v4225 = vcombine.low %v4217, %v4224
          %v4226 = vcombine.low %v3145, %v3153
          %v4227 = vcombine.low %v3152, %v3154
          %v4229 = vunpack.c.l.s4 1983009808
          %v4230 = vunpack.c.0.s8 %v4229
          %v4231 = vlaneseq
          %v4232 = vshrl.u32 %v4231, 7
          %v4233 = vsub.s32 %v4230, %v4232
          %v4234 = vrot.slane %v4226, %v4233
          %v4236 = vunpack.c.l.s4 1983009808
          %v4237 = vunpack.c.0.s8 %v4236
          %v4238 = vlaneseq
          %v4239 = vshrl.u32 %v4238, 7
          %v4240 = vsub.s32 %v4237, %v4239
          %v4241 = vrot.slane %v4227, %v4240
          %v4242 = vcombine.low %v4234, %v4241
          %v4243 = vcombine.low %v3162, %v3170
          %v4244 = vcombine.low %v3169, %v3171
          %v4246 = vunpack.c.l.s4 1983009808
          %v4247 = vunpack.c.0.s8 %v4246
          %v4248 = vlaneseq
          %v4249 = vshrl.u32 %v4248, 7
          %v4250 = vsub.s32 %v4247, %v4249
          %v4251 = vrot.slane %v4243, %v4250
          %v4253 = vunpack.c.l.s4 1983009808
          %v4254 = vunpack.c.0.s8 %v4253
          %v4255 = vlaneseq
          %v4256 = vshrl.u32 %v4255, 7
          %v4257 = vsub.s32 %v4254, %v4256
          %v4258 = vrot.slane %v4244, %v4257
          %v4259 = vcombine.low %v4251, %v4258
          %v4260 = vcombine.low %v3179, %v3187
          %v4261 = vcombine.low %v3186, %v3188
          %v4263 = vunpack.c.l.s4 1983009808
          %v4264 = vunpack.c.0.s8 %v4263
          %v4265 = vlaneseq
          %v4266 = vshrl.u32 %v4265, 7
          %v4267 = vsub.s32 %v4264, %v4266
          %v4268 = vrot.slane %v4260, %v4267
          %v4270 = vunpack.c.l.s4 1983009808
          %v4271 = vunpack.c.0.s8 %v4270
          %v4272 = vlaneseq
          %v4273 = vshrl.u32 %v4272, 7
          %v4274 = vsub.s32 %v4271, %v4273
          %v4275 = vrot.slane %v4261, %v4274
          %v4276 = vcombine.low %v4268, %v4275
          %v4277 = vcombine.low %v3196, %v3204
          %v4278 = vcombine.low %v3203, %v3205
          %v4280 = vunpack.c.l.s4 1983009808
          %v4281 = vunpack.c.0.s8 %v4280
          %v4282 = vlaneseq
          %v4283 = vshrl.u32 %v4282, 7
          %v4284 = vsub.s32 %v4281, %v4283
          %v4285 = vrot.slane %v4277, %v4284
          %v4287 = vunpack.c.l.s4 1983009808
          %v4288 = vunpack.c.0.s8 %v4287
          %v4289 = vlaneseq
          %v4290 = vshrl.u32 %v4289, 7
          %v4291 = vsub.s32 %v4288, %v4290
          %v4292 = vrot.slane %v4278, %v4291
          %v4293 = vcombine.low %v4285, %v4292
          %v4294 = vcombine.low %v3213, %v3221
          %v4295 = vcombine.low %v3220, %v3222
          %v4297 = vunpack.c.l.s4 1983009808
          %v4298 = vunpack.c.0.s8 %v4297
          %v4299 = vlaneseq
          %v4300 = vshrl.u32 %v4299, 7
          %v4301 = vsub.s32 %v4298, %v4300
          %v4302 = vrot.slane %v4294, %v4301
          %v4304 = vunpack.c.l.s4 1983009808
          %v4305 = vunpack.c.0.s8 %v4304
          %v4306 = vlaneseq
          %v4307 = vshrl.u32 %v4306, 7
          %v4308 = vsub.s32 %v4305, %v4307
          %v4309 = vrot.slane %v4295, %v4308
          %v4310 = vcombine.low %v4302, %v4309
          %v4311 = vcombine.low %v3230, %v3238
          %v4312 = vcombine.low %v3237, %v3239
          %v4314 = vunpack.c.l.s4 1983009808
          %v4315 = vunpack.c.0.s8 %v4314
          %v4316 = vlaneseq
          %v4317 = vshrl.u32 %v4316, 7
          %v4318 = vsub.s32 %v4315, %v4317
          %v4319 = vrot.slane %v4311, %v4318
          %v4321 = vunpack.c.l.s4 1983009808
          %v4322 = vunpack.c.0.s8 %v4321
          %v4323 = vlaneseq
          %v4324 = vshrl.u32 %v4323, 7
          %v4325 = vsub.s32 %v4322, %v4324
          %v4326 = vrot.slane %v4312, %v4325
          %v4327 = vcombine.low %v4319, %v4326
          %v4328 = vcombine.low %v3247, %v3255
          %v4329 = vcombine.low %v3254, %v3256
          %v4331 = vunpack.c.l.s4 1983009808
          %v4332 = vunpack.c.0.s8 %v4331
          %v4333 = vlaneseq
          %v4334 = vshrl.u32 %v4333, 7
          %v4335 = vsub.s32 %v4332, %v4334
          %v4336 = vrot.slane %v4328, %v4335
          %v4338 = vunpack.c.l.s4 1983009808
          %v4339 = vunpack.c.0.s8 %v4338
          %v4340 = vlaneseq
          %v4341 = vshrl.u32 %v4340, 7
          %v4342 = vsub.s32 %v4339, %v4341
          %v4343 = vrot.slane %v4329, %v4342
          %v4344 = vcombine.low %v4336, %v4343
          %v4345 = vcombine.low %v3264, %v3272
          %v4346 = vcombine.low %v3271, %v3273
          %v4348 = vunpack.c.l.s4 1983009808
          %v4349 = vunpack.c.0.s8 %v4348
          %v4350 = vlaneseq
          %v4351 = vshrl.u32 %v4350, 7
          %v4352 = vsub.s32 %v4349, %v4351
          %v4353 = vrot.slane %v4345, %v4352
          %v4355 = vunpack.c.l.s4 1983009808
          %v4356 = vunpack.c.0.s8 %v4355
          %v4357 = vlaneseq
          %v4358 = vshrl.u32 %v4357, 7
          %v4359 = vsub.s32 %v4356, %v4358
          %v4360 = vrot.slane %v4346, %v4359
          %v4361 = vcombine.low %v4353, %v4360
          %v4362 = vcombine.low %v3281, %v3289
          %v4363 = vcombine.low %v3288, %v3290
          %v4365 = vunpack.c.l.s4 1983009808
          %v4366 = vunpack.c.0.s8 %v4365
          %v4367 = vlaneseq
          %v4368 = vshrl.u32 %v4367, 7
          %v4369 = vsub.s32 %v4366, %v4368
          %v4370 = vrot.slane %v4362, %v4369
          %v4372 = vunpack.c.l.s4 1983009808
          %v4373 = vunpack.c.0.s8 %v4372
          %v4374 = vlaneseq
          %v4375 = vshrl.u32 %v4374, 7
          %v4376 = vsub.s32 %v4373, %v4375
          %v4377 = vrot.slane %v4363, %v4376
          %v4378 = vcombine.low %v4370, %v4377
          %v4379 = vcombine.low %v3298, %v3306
          %v4380 = vcombine.low %v3305, %v3307
          %v4382 = vunpack.c.l.s4 1983009808
          %v4383 = vunpack.c.0.s8 %v4382
          %v4384 = vlaneseq
          %v4385 = vshrl.u32 %v4384, 7
          %v4386 = vsub.s32 %v4383, %v4385
          %v4387 = vrot.slane %v4379, %v4386
          %v4389 = vunpack.c.l.s4 1983009808
          %v4390 = vunpack.c.0.s8 %v4389
          %v4391 = vlaneseq
          %v4392 = vshrl.u32 %v4391, 7
          %v4393 = vsub.s32 %v4390, %v4392
          %v4394 = vrot.slane %v4380, %v4393
          %v4395 = vcombine.low %v4387, %v4394
          %v4396 = vcombine.low %v3315, %v3323
          %v4397 = vcombine.low %v3322, %v3324
          %v4399 = vunpack.c.l.s4 1983009808
          %v4400 = vunpack.c.0.s8 %v4399
          %v4401 = vlaneseq
          %v4402 = vshrl.u32 %v4401, 7
          %v4403 = vsub.s32 %v4400, %v4402
          %v4404 = vrot.slane %v4396, %v4403
          %v4406 = vunpack.c.l.s4 1983009808
          %v4407 = vunpack.c.0.s8 %v4406
          %v4408 = vlaneseq
          %v4409 = vshrl.u32 %v4408, 7
          %v4410 = vsub.s32 %v4407, %v4409
          %v4411 = vrot.slane %v4397, %v4410
          %v4412 = vcombine.low %v4404, %v4411
          %v4413 = vcombine.low %v3332, %v3340
          %v4414 = vcombine.low %v3339, %v3341
          %v4416 = vunpack.c.l.s4 1983009808
          %v4417 = vunpack.c.0.s8 %v4416
          %v4418 = vlaneseq
          %v4419 = vshrl.u32 %v4418, 7
          %v4420 = vsub.s32 %v4417, %v4419
          %v4421 = vrot.slane %v4413, %v4420
          %v4423 = vunpack.c.l.s4 1983009808
          %v4424 = vunpack.c.0.s8 %v4423
          %v4425 = vlaneseq
          %v4426 = vshrl.u32 %v4425, 7
          %v4427 = vsub.s32 %v4424, %v4426
          %v4428 = vrot.slane %v4414, %v4427
          %v4429 = vcombine.low %v4421, %v4428
          %v4430 = vcombine.low %v3349, %v3357
          %v4431 = vcombine.low %v3356, %v3358
          %v4433 = vunpack.c.l.s4 1983009808
          %v4434 = vunpack.c.0.s8 %v4433
          %v4435 = vlaneseq
          %v4436 = vshrl.u32 %v4435, 7
          %v4437 = vsub.s32 %v4434, %v4436
          %v4438 = vrot.slane %v4430, %v4437
          %v4440 = vunpack.c.l.s4 1983009808
          %v4441 = vunpack.c.0.s8 %v4440
          %v4442 = vlaneseq
          %v4443 = vshrl.u32 %v4442, 7
          %v4444 = vsub.s32 %v4441, %v4443
          %v4445 = vrot.slane %v4431, %v4444
          %v4446 = vcombine.low %v4438, %v4445
          %v4447 = vcombine.low %v3366, %v3374
          %v4448 = vcombine.low %v3373, %v3375
          %v4450 = vunpack.c.l.s4 1983009808
          %v4451 = vunpack.c.0.s8 %v4450
          %v4452 = vlaneseq
          %v4453 = vshrl.u32 %v4452, 7
          %v4454 = vsub.s32 %v4451, %v4453
          %v4455 = vrot.slane %v4447, %v4454
          %v4457 = vunpack.c.l.s4 1983009808
          %v4458 = vunpack.c.0.s8 %v4457
          %v4459 = vlaneseq
          %v4460 = vshrl.u32 %v4459, 7
          %v4461 = vsub.s32 %v4458, %v4460
          %v4462 = vrot.slane %v4448, %v4461
          %v4463 = vcombine.low %v4455, %v4462
          %v4464 = vcombine.low %v3383, %v3391
          %v4465 = vcombine.low %v3390, %v3392
          %v4467 = vunpack.c.l.s4 1983009808
          %v4468 = vunpack.c.0.s8 %v4467
          %v4469 = vlaneseq
          %v4470 = vshrl.u32 %v4469, 7
          %v4471 = vsub.s32 %v4468, %v4470
          %v4472 = vrot.slane %v4464, %v4471
          %v4474 = vunpack.c.l.s4 1983009808
          %v4475 = vunpack.c.0.s8 %v4474
          %v4476 = vlaneseq
          %v4477 = vshrl.u32 %v4476, 7
          %v4478 = vsub.s32 %v4475, %v4477
          %v4479 = vrot.slane %v4465, %v4478
          %v4480 = vcombine.low %v4472, %v4479
          %v4481 = vcombine.low %v3400, %v3408
          %v4482 = vcombine.low %v3407, %v3409
          %v4484 = vunpack.c.l.s4 1983009808
          %v4485 = vunpack.c.0.s8 %v4484
          %v4486 = vlaneseq
          %v4487 = vshrl.u32 %v4486, 7
          %v4488 = vsub.s32 %v4485, %v4487
          %v4489 = vrot.slane %v4481, %v4488
          %v4491 = vunpack.c.l.s4 1983009808
          %v4492 = vunpack.c.0.s8 %v4491
          %v4493 = vlaneseq
          %v4494 = vshrl.u32 %v4493, 7
          %v4495 = vsub.s32 %v4492, %v4494
          %v4496 = vrot.slane %v4482, %v4495
          %v4497 = vcombine.low %v4489, %v4496
          %v4498 = vcombine.low %v3417, %v3425
          %v4499 = vcombine.low %v3424, %v3426
          %v4501 = vunpack.c.l.s4 1983009808
          %v4502 = vunpack.c.0.s8 %v4501
          %v4503 = vlaneseq
          %v4504 = vshrl.u32 %v4503, 7
          %v4505 = vsub.s32 %v4502, %v4504
          %v4506 = vrot.slane %v4498, %v4505
          %v4508 = vunpack.c.l.s4 1983009808
          %v4509 = vunpack.c.0.s8 %v4508
          %v4510 = vlaneseq
          %v4511 = vshrl.u32 %v4510, 7
          %v4512 = vsub.s32 %v4509, %v4511
          %v4513 = vrot.slane %v4499, %v4512
          %v4514 = vcombine.low %v4506, %v4513
          %v4515 = vcombine.low %v3434, %v3442
          %v4516 = vcombine.low %v3441, %v3443
          %v4518 = vunpack.c.l.s4 1983009808
          %v4519 = vunpack.c.0.s8 %v4518
          %v4520 = vlaneseq
          %v4521 = vshrl.u32 %v4520, 7
          %v4522 = vsub.s32 %v4519, %v4521
          %v4523 = vrot.slane %v4515, %v4522
          %v4525 = vunpack.c.l.s4 1983009808
          %v4526 = vunpack.c.0.s8 %v4525
          %v4527 = vlaneseq
          %v4528 = vshrl.u32 %v4527, 7
          %v4529 = vsub.s32 %v4526, %v4528
          %v4530 = vrot.slane %v4516, %v4529
          %v4531 = vcombine.low %v4523, %v4530
          %v4532 = vcombine.low %v3451, %v3459
          %v4533 = vcombine.low %v3458, %v3460
          %v4535 = vunpack.c.l.s4 1983009808
          %v4536 = vunpack.c.0.s8 %v4535
          %v4537 = vlaneseq
          %v4538 = vshrl.u32 %v4537, 7
          %v4539 = vsub.s32 %v4536, %v4538
          %v4540 = vrot.slane %v4532, %v4539
          %v4542 = vunpack.c.l.s4 1983009808
          %v4543 = vunpack.c.0.s8 %v4542
          %v4544 = vlaneseq
          %v4545 = vshrl.u32 %v4544, 7
          %v4546 = vsub.s32 %v4543, %v4545
          %v4547 = vrot.slane %v4533, %v4546
          %v4548 = vcombine.low %v4540, %v4547
          %v4549 = vcombine.low %v3468, %v3476
          %v4550 = vcombine.low %v3475, %v3477
          %v4552 = vunpack.c.l.s4 1983009808
          %v4553 = vunpack.c.0.s8 %v4552
          %v4554 = vlaneseq
          %v4555 = vshrl.u32 %v4554, 7
          %v4556 = vsub.s32 %v4553, %v4555
          %v4557 = vrot.slane %v4549, %v4556
          %v4559 = vunpack.c.l.s4 1983009808
          %v4560 = vunpack.c.0.s8 %v4559
          %v4561 = vlaneseq
          %v4562 = vshrl.u32 %v4561, 7
          %v4563 = vsub.s32 %v4560, %v4562
          %v4564 = vrot.slane %v4550, %v4563
          %v4565 = vcombine.low %v4557, %v4564
          %v4566 = vcombine.low %v3485, %v3493
          %v4567 = vcombine.low %v3492, %v3494
          %v4569 = vunpack.c.l.s4 1983009808
          %v4570 = vunpack.c.0.s8 %v4569
          %v4571 = vlaneseq
          %v4572 = vshrl.u32 %v4571, 7
          %v4573 = vsub.s32 %v4570, %v4572
          %v4574 = vrot.slane %v4566, %v4573
          %v4576 = vunpack.c.l.s4 1983009808
          %v4577 = vunpack.c.0.s8 %v4576
          %v4578 = vlaneseq
          %v4579 = vshrl.u32 %v4578, 7
          %v4580 = vsub.s32 %v4577, %v4579
          %v4581 = vrot.slane %v4567, %v4580
          %v4582 = vcombine.low %v4574, %v4581
          %v4583 = vcombine.low %v3502, %v3510
          %v4584 = vcombine.low %v3509, %v3511
          %v4586 = vunpack.c.l.s4 1983009808
          %v4587 = vunpack.c.0.s8 %v4586
          %v4588 = vlaneseq
          %v4589 = vshrl.u32 %v4588, 7
          %v4590 = vsub.s32 %v4587, %v4589
          %v4591 = vrot.slane %v4583, %v4590
          %v4593 = vunpack.c.l.s4 1983009808
          %v4594 = vunpack.c.0.s8 %v4593
          %v4595 = vlaneseq
          %v4596 = vshrl.u32 %v4595, 7
          %v4597 = vsub.s32 %v4594, %v4596
          %v4598 = vrot.slane %v4584, %v4597
          %v4599 = vcombine.low %v4591, %v4598
          %v4600 = vcombine.low %v3519, %v3527
          %v4601 = vcombine.low %v3526, %v3528
          %v4603 = vunpack.c.l.s4 1983009808
          %v4604 = vunpack.c.0.s8 %v4603
          %v4605 = vlaneseq
          %v4606 = vshrl.u32 %v4605, 7
          %v4607 = vsub.s32 %v4604, %v4606
          %v4608 = vrot.slane %v4600, %v4607
          %v4610 = vunpack.c.l.s4 1983009808
          %v4611 = vunpack.c.0.s8 %v4610
          %v4612 = vlaneseq
          %v4613 = vshrl.u32 %v4612, 7
          %v4614 = vsub.s32 %v4611, %v4613
          %v4615 = vrot.slane %v4601, %v4614
          %v4616 = vcombine.low %v4608, %v4615
          %v4617 = vcombine.low %v3536, %v3544
          %v4618 = vcombine.low %v3543, %v3545
          %v4620 = vunpack.c.l.s4 1983009808
          %v4621 = vunpack.c.0.s8 %v4620
          %v4622 = vlaneseq
          %v4623 = vshrl.u32 %v4622, 7
          %v4624 = vsub.s32 %v4621, %v4623
          %v4625 = vrot.slane %v4617, %v4624
          %v4627 = vunpack.c.l.s4 1983009808
          %v4628 = vunpack.c.0.s8 %v4627
          %v4629 = vlaneseq
          %v4630 = vshrl.u32 %v4629, 7
          %v4631 = vsub.s32 %v4628, %v4630
          %v4632 = vrot.slane %v4618, %v4631
          %v4633 = vcombine.low %v4625, %v4632
          %v4634 = vcombine.low %v3553, %v3561
          %v4635 = vcombine.low %v3560, %v3562
          %v4637 = vunpack.c.l.s4 1983009808
          %v4638 = vunpack.c.0.s8 %v4637
          %v4639 = vlaneseq
          %v4640 = vshrl.u32 %v4639, 7
          %v4641 = vsub.s32 %v4638, %v4640
          %v4642 = vrot.slane %v4634, %v4641
          %v4644 = vunpack.c.l.s4 1983009808
          %v4645 = vunpack.c.0.s8 %v4644
          %v4646 = vlaneseq
          %v4647 = vshrl.u32 %v4646, 7
          %v4648 = vsub.s32 %v4645, %v4647
          %v4649 = vrot.slane %v4635, %v4648
          %v4650 = vcombine.low %v4642, %v4649
          %v4651 = vcombine.low %v3570, %v3578
          %v4652 = vcombine.low %v3577, %v3579
          %v4654 = vunpack.c.l.s4 1983009808
          %v4655 = vunpack.c.0.s8 %v4654
          %v4656 = vlaneseq
          %v4657 = vshrl.u32 %v4656, 7
          %v4658 = vsub.s32 %v4655, %v4657
          %v4659 = vrot.slane %v4651, %v4658
          %v4661 = vunpack.c.l.s4 1983009808
          %v4662 = vunpack.c.0.s8 %v4661
          %v4663 = vlaneseq
          %v4664 = vshrl.u32 %v4663, 7
          %v4665 = vsub.s32 %v4662, %v4664
          %v4666 = vrot.slane %v4652, %v4665
          %v4667 = vcombine.low %v4659, %v4666
          %v4668 = vcombine.low %v3587, %v3595
          %v4669 = vcombine.low %v3594, %v3596
          %v4671 = vunpack.c.l.s4 1983009808
          %v4672 = vunpack.c.0.s8 %v4671
          %v4673 = vlaneseq
          %v4674 = vshrl.u32 %v4673, 7
          %v4675 = vsub.s32 %v4672, %v4674
          %v4676 = vrot.slane %v4668, %v4675
          %v4678 = vunpack.c.l.s4 1983009808
          %v4679 = vunpack.c.0.s8 %v4678
          %v4680 = vlaneseq
          %v4681 = vshrl.u32 %v4680, 7
          %v4682 = vsub.s32 %v4679, %v4681
          %v4683 = vrot.slane %v4669, %v4682
          %v4684 = vcombine.low %v4676, %v4683
          %v4685 = vcombine.low %v3604, %v3612
          %v4686 = vcombine.low %v3611, %v3613
          %v4688 = vunpack.c.l.s4 1983009808
          %v4689 = vunpack.c.0.s8 %v4688
          %v4690 = vlaneseq
          %v4691 = vshrl.u32 %v4690, 7
          %v4692 = vsub.s32 %v4689, %v4691
          %v4693 = vrot.slane %v4685, %v4692
          %v4695 = vunpack.c.l.s4 1983009808
          %v4696 = vunpack.c.0.s8 %v4695
          %v4697 = vlaneseq
          %v4698 = vshrl.u32 %v4697, 7
          %v4699 = vsub.s32 %v4696, %v4698
          %v4700 = vrot.slane %v4686, %v4699
          %v4701 = vcombine.low %v4693, %v4700
          %v4702 = vcombine.low %v3621, %v3629
          %v4703 = vcombine.low %v3628, %v3630
          %v4705 = vunpack.c.l.s4 1983009808
          %v4706 = vunpack.c.0.s8 %v4705
          %v4707 = vlaneseq
          %v4708 = vshrl.u32 %v4707, 7
          %v4709 = vsub.s32 %v4706, %v4708
          %v4710 = vrot.slane %v4702, %v4709
          %v4712 = vunpack.c.l.s4 1983009808
          %v4713 = vunpack.c.0.s8 %v4712
          %v4714 = vlaneseq
          %v4715 = vshrl.u32 %v4714, 7
          %v4716 = vsub.s32 %v4713, %v4715
          %v4717 = vrot.slane %v4703, %v4716
          %v4718 = vcombine.low %v4710, %v4717
          %v4719 = vcombine.low %v3638, %v3646
          %v4720 = vcombine.low %v3645, %v3647
          %v4722 = vunpack.c.l.s4 1983009808
          %v4723 = vunpack.c.0.s8 %v4722
          %v4724 = vlaneseq
          %v4725 = vshrl.u32 %v4724, 7
          %v4726 = vsub.s32 %v4723, %v4725
          %v4727 = vrot.slane %v4719, %v4726
          %v4729 = vunpack.c.l.s4 1983009808
          %v4730 = vunpack.c.0.s8 %v4729
          %v4731 = vlaneseq
          %v4732 = vshrl.u32 %v4731, 7
          %v4733 = vsub.s32 %v4730, %v4732
          %v4734 = vrot.slane %v4720, %v4733
          %v4735 = vcombine.low %v4727, %v4734
          %v4736 = vcombine.low %v3655, %v3663
          %v4737 = vcombine.low %v3662, %v3664
          %v4739 = vunpack.c.l.s4 1983009808
          %v4740 = vunpack.c.0.s8 %v4739
          %v4741 = vlaneseq
          %v4742 = vshrl.u32 %v4741, 7
          %v4743 = vsub.s32 %v4740, %v4742
          %v4744 = vrot.slane %v4736, %v4743
          %v4746 = vunpack.c.l.s4 1983009808
          %v4747 = vunpack.c.0.s8 %v4746
          %v4748 = vlaneseq
          %v4749 = vshrl.u32 %v4748, 7
          %v4750 = vsub.s32 %v4747, %v4749
          %v4751 = vrot.slane %v4737, %v4750
          %v4752 = vcombine.low %v4744, %v4751
          %v4753 = vcombine.low %v3672, %v3680
          %v4754 = vcombine.low %v3679, %v3681
          %v4756 = vunpack.c.l.s4 1983009808
          %v4757 = vunpack.c.0.s8 %v4756
          %v4758 = vlaneseq
          %v4759 = vshrl.u32 %v4758, 7
          %v4760 = vsub.s32 %v4757, %v4759
          %v4761 = vrot.slane %v4753, %v4760
          %v4763 = vunpack.c.l.s4 1983009808
          %v4764 = vunpack.c.0.s8 %v4763
          %v4765 = vlaneseq
          %v4766 = vshrl.u32 %v4765, 7
          %v4767 = vsub.s32 %v4764, %v4766
          %v4768 = vrot.slane %v4754, %v4767
          %v4769 = vcombine.low %v4761, %v4768
          %v4770 = vcombine.low %v3689, %v3697
          %v4771 = vcombine.low %v3696, %v3698
          %v4773 = vunpack.c.l.s4 1983009808
          %v4774 = vunpack.c.0.s8 %v4773
          %v4775 = vlaneseq
          %v4776 = vshrl.u32 %v4775, 7
          %v4777 = vsub.s32 %v4774, %v4776
          %v4778 = vrot.slane %v4770, %v4777
          %v4780 = vunpack.c.l.s4 1983009808
          %v4781 = vunpack.c.0.s8 %v4780
          %v4782 = vlaneseq
          %v4783 = vshrl.u32 %v4782, 7
          %v4784 = vsub.s32 %v4781, %v4783
          %v4785 = vrot.slane %v4771, %v4784
          %v4786 = vcombine.low %v4778, %v4785
          %v4787 = vcombine.low %v3706, %v3714
          %v4788 = vcombine.low %v3713, %v3715
          %v4790 = vunpack.c.l.s4 1983009808
          %v4791 = vunpack.c.0.s8 %v4790
          %v4792 = vlaneseq
          %v4793 = vshrl.u32 %v4792, 7
          %v4794 = vsub.s32 %v4791, %v4793
          %v4795 = vrot.slane %v4787, %v4794
          %v4797 = vunpack.c.l.s4 1983009808
          %v4798 = vunpack.c.0.s8 %v4797
          %v4799 = vlaneseq
          %v4800 = vshrl.u32 %v4799, 7
          %v4801 = vsub.s32 %v4798, %v4800
          %v4802 = vrot.slane %v4788, %v4801
          %v4803 = vcombine.low %v4795, %v4802
          %v4804 = vcombine.low %v3723, %v3731
          %v4805 = vcombine.low %v3730, %v3732
          %v4807 = vunpack.c.l.s4 1983009808
          %v4808 = vunpack.c.0.s8 %v4807
          %v4809 = vlaneseq
          %v4810 = vshrl.u32 %v4809, 7
          %v4811 = vsub.s32 %v4808, %v4810
          %v4812 = vrot.slane %v4804, %v4811
          %v4814 = vunpack.c.l.s4 1983009808
          %v4815 = vunpack.c.0.s8 %v4814
          %v4816 = vlaneseq
          %v4817 = vshrl.u32 %v4816, 7
          %v4818 = vsub.s32 %v4815, %v4817
          %v4819 = vrot.slane %v4805, %v4818
          %v4820 = vcombine.low %v4812, %v4819
          %v4821 = vcombine.low %v3740, %v3748
          %v4822 = vcombine.low %v3747, %v3749
          %v4824 = vunpack.c.l.s4 1983009808
          %v4825 = vunpack.c.0.s8 %v4824
          %v4826 = vlaneseq
          %v4827 = vshrl.u32 %v4826, 7
          %v4828 = vsub.s32 %v4825, %v4827
          %v4829 = vrot.slane %v4821, %v4828
          %v4831 = vunpack.c.l.s4 1983009808
          %v4832 = vunpack.c.0.s8 %v4831
          %v4833 = vlaneseq
          %v4834 = vshrl.u32 %v4833, 7
          %v4835 = vsub.s32 %v4832, %v4834
          %v4836 = vrot.slane %v4822, %v4835
          %v4837 = vcombine.low %v4829, %v4836
          %v4838 = vcombine.low %v3757, %v3765
          %v4839 = vcombine.low %v3764, %v3766
          %v4841 = vunpack.c.l.s4 1983009808
          %v4842 = vunpack.c.0.s8 %v4841
          %v4843 = vlaneseq
          %v4844 = vshrl.u32 %v4843, 7
          %v4845 = vsub.s32 %v4842, %v4844
          %v4846 = vrot.slane %v4838, %v4845
          %v4848 = vunpack.c.l.s4 1983009808
          %v4849 = vunpack.c.0.s8 %v4848
          %v4850 = vlaneseq
          %v4851 = vshrl.u32 %v4850, 7
          %v4852 = vsub.s32 %v4849, %v4851
          %v4853 = vrot.slane %v4839, %v4852
          %v4854 = vcombine.low %v4846, %v4853
          %v4855 = vcombine.low %v3774, %v3782
          %v4856 = vcombine.low %v3781, %v3783
          %v4858 = vunpack.c.l.s4 1983009808
          %v4859 = vunpack.c.0.s8 %v4858
          %v4860 = vlaneseq
          %v4861 = vshrl.u32 %v4860, 7
          %v4862 = vsub.s32 %v4859, %v4861
          %v4863 = vrot.slane %v4855, %v4862
          %v4865 = vunpack.c.l.s4 1983009808
          %v4866 = vunpack.c.0.s8 %v4865
          %v4867 = vlaneseq
          %v4868 = vshrl.u32 %v4867, 7
          %v4869 = vsub.s32 %v4866, %v4868
          %v4870 = vrot.slane %v4856, %v4869
          %v4871 = vcombine.low %v4863, %v4870
          %v4872 = vcombine.low %v3791, %v3799
          %v4873 = vcombine.low %v3798, %v3800
          %v4875 = vunpack.c.l.s4 1983009808
          %v4876 = vunpack.c.0.s8 %v4875
          %v4877 = vlaneseq
          %v4878 = vshrl.u32 %v4877, 7
          %v4879 = vsub.s32 %v4876, %v4878
          %v4880 = vrot.slane %v4872, %v4879
          %v4882 = vunpack.c.l.s4 1983009808
          %v4883 = vunpack.c.0.s8 %v4882
          %v4884 = vlaneseq
          %v4885 = vshrl.u32 %v4884, 7
          %v4886 = vsub.s32 %v4883, %v4885
          %v4887 = vrot.slane %v4873, %v4886
          %v4888 = vcombine.low %v4880, %v4887
          %v4889 = vcombine.low %v3808, %v3816
          %v4890 = vcombine.low %v3815, %v3817
          %v4892 = vunpack.c.l.s4 1983009808
          %v4893 = vunpack.c.0.s8 %v4892
          %v4894 = vlaneseq
          %v4895 = vshrl.u32 %v4894, 7
          %v4896 = vsub.s32 %v4893, %v4895
          %v4897 = vrot.slane %v4889, %v4896
          %v4899 = vunpack.c.l.s4 1983009808
          %v4900 = vunpack.c.0.s8 %v4899
          %v4901 = vlaneseq
          %v4902 = vshrl.u32 %v4901, 7
          %v4903 = vsub.s32 %v4900, %v4902
          %v4904 = vrot.slane %v4890, %v4903
          %v4905 = vcombine.low %v4897, %v4904
          %v4906 = vcombine.low %v3825, %v3833
          %v4907 = vcombine.low %v3832, %v3834
          %v4909 = vunpack.c.l.s4 1983009808
          %v4910 = vunpack.c.0.s8 %v4909
          %v4911 = vlaneseq
          %v4912 = vshrl.u32 %v4911, 7
          %v4913 = vsub.s32 %v4910, %v4912
          %v4914 = vrot.slane %v4906, %v4913
          %v4916 = vunpack.c.l.s4 1983009808
          %v4917 = vunpack.c.0.s8 %v4916
          %v4918 = vlaneseq
          %v4919 = vshrl.u32 %v4918, 7
          %v4920 = vsub.s32 %v4917, %v4919
          %v4921 = vrot.slane %v4907, %v4920
          %v4922 = vcombine.low %v4914, %v4921
          %v4923 = vcombine.low %v3842, %v3850
          %v4924 = vcombine.low %v3849, %v3851
          %v4926 = vunpack.c.l.s4 1983009808
          %v4927 = vunpack.c.0.s8 %v4926
          %v4928 = vlaneseq
          %v4929 = vshrl.u32 %v4928, 7
          %v4930 = vsub.s32 %v4927, %v4929
          %v4931 = vrot.slane %v4923, %v4930
          %v4933 = vunpack.c.l.s4 1983009808
          %v4934 = vunpack.c.0.s8 %v4933
          %v4935 = vlaneseq
          %v4936 = vshrl.u32 %v4935, 7
          %v4937 = vsub.s32 %v4934, %v4936
          %v4938 = vrot.slane %v4924, %v4937
          %v4939 = vcombine.low %v4931, %v4938
          %v4940 = vcombine.low %v3859, %v3867
          %v4941 = vcombine.low %v3866, %v3868
          %v4943 = vunpack.c.l.s4 1983009808
          %v4944 = vunpack.c.0.s8 %v4943
          %v4945 = vlaneseq
          %v4946 = vshrl.u32 %v4945, 7
          %v4947 = vsub.s32 %v4944, %v4946
          %v4948 = vrot.slane %v4940, %v4947
          %v4950 = vunpack.c.l.s4 1983009808
          %v4951 = vunpack.c.0.s8 %v4950
          %v4952 = vlaneseq
          %v4953 = vshrl.u32 %v4952, 7
          %v4954 = vsub.s32 %v4951, %v4953
          %v4955 = vrot.slane %v4941, %v4954
          %v4956 = vcombine.low %v4948, %v4955
          %v4957 = vcombine.low %v3876, %v3884
          %v4958 = vcombine.low %v3883, %v3885
          %v4960 = vunpack.c.l.s4 1983009808
          %v4961 = vunpack.c.0.s8 %v4960
          %v4962 = vlaneseq
          %v4963 = vshrl.u32 %v4962, 7
          %v4964 = vsub.s32 %v4961, %v4963
          %v4965 = vrot.slane %v4957, %v4964
          %v4967 = vunpack.c.l.s4 1983009808
          %v4968 = vunpack.c.0.s8 %v4967
          %v4969 = vlaneseq
          %v4970 = vshrl.u32 %v4969, 7
          %v4971 = vsub.s32 %v4968, %v4970
          %v4972 = vrot.slane %v4958, %v4971
          %v4973 = vcombine.low %v4965, %v4972
          %v4974 = vcombine.low %v3893, %v3901
          %v4975 = vcombine.low %v3900, %v3902
          %v4977 = vunpack.c.l.s4 1983009808
          %v4978 = vunpack.c.0.s8 %v4977
          %v4979 = vlaneseq
          %v4980 = vshrl.u32 %v4979, 7
          %v4981 = vsub.s32 %v4978, %v4980
          %v4982 = vrot.slane %v4974, %v4981
          %v4984 = vunpack.c.l.s4 1983009808
          %v4985 = vunpack.c.0.s8 %v4984
          %v4986 = vlaneseq
          %v4987 = vshrl.u32 %v4986, 7
          %v4988 = vsub.s32 %v4985, %v4987
          %v4989 = vrot.slane %v4975, %v4988
          %v4990 = vcombine.low %v4982, %v4989
          %v4991 = vcombine.low %v3910, %v3918
          %v4992 = vcombine.low %v3917, %v3919
          %v4994 = vunpack.c.l.s4 1983009808
          %v4995 = vunpack.c.0.s8 %v4994
          %v4996 = vlaneseq
          %v4997 = vshrl.u32 %v4996, 7
          %v4998 = vsub.s32 %v4995, %v4997
          %v4999 = vrot.slane %v4991, %v4998
          %v5001 = vunpack.c.l.s4 1983009808
          %v5002 = vunpack.c.0.s8 %v5001
          %v5003 = vlaneseq
          %v5004 = vshrl.u32 %v5003, 7
          %v5005 = vsub.s32 %v5002, %v5004
          %v5006 = vrot.slane %v4992, %v5005
          %v5007 = vcombine.low %v4999, %v5006
          %v5008 = vcombine.low %v3927, %v3935
          %v5009 = vcombine.low %v3934, %v3936
          %v5011 = vunpack.c.l.s4 1983009808
          %v5012 = vunpack.c.0.s8 %v5011
          %v5013 = vlaneseq
          %v5014 = vshrl.u32 %v5013, 7
          %v5015 = vsub.s32 %v5012, %v5014
          %v5016 = vrot.slane %v5008, %v5015
          %v5018 = vunpack.c.l.s4 1983009808
          %v5019 = vunpack.c.0.s8 %v5018
          %v5020 = vlaneseq
          %v5021 = vshrl.u32 %v5020, 7
          %v5022 = vsub.s32 %v5019, %v5021
          %v5023 = vrot.slane %v5009, %v5022
          %v5024 = vcombine.low %v5016, %v5023
          %v5025 = vcombine.low %v3944, %v3952
          %v5026 = vcombine.low %v3951, %v3953
          %v5028 = vunpack.c.l.s4 1983009808
          %v5029 = vunpack.c.0.s8 %v5028
          %v5030 = vlaneseq
          %v5031 = vshrl.u32 %v5030, 7
          %v5032 = vsub.s32 %v5029, %v5031
          %v5033 = vrot.slane %v5025, %v5032
          %v5035 = vunpack.c.l.s4 1983009808
          %v5036 = vunpack.c.0.s8 %v5035
          %v5037 = vlaneseq
          %v5038 = vshrl.u32 %v5037, 7
          %v5039 = vsub.s32 %v5036, %v5038
          %v5040 = vrot.slane %v5026, %v5039
          %v5041 = vcombine.low %v5033, %v5040
          %v5042 = vcombine.low %v3961, %v3969
          %v5043 = vcombine.low %v3968, %v3970
          %v5045 = vunpack.c.l.s4 1983009808
          %v5046 = vunpack.c.0.s8 %v5045
          %v5047 = vlaneseq
          %v5048 = vshrl.u32 %v5047, 7
          %v5049 = vsub.s32 %v5046, %v5048
          %v5050 = vrot.slane %v5042, %v5049
          %v5052 = vunpack.c.l.s4 1983009808
          %v5053 = vunpack.c.0.s8 %v5052
          %v5054 = vlaneseq
          %v5055 = vshrl.u32 %v5054, 7
          %v5056 = vsub.s32 %v5053, %v5055
          %v5057 = vrot.slane %v5043, %v5056
          %v5058 = vcombine.low %v5050, %v5057
          %v5059 = vcombine.low %v3978, %v3986
          %v5060 = vcombine.low %v3985, %v3987
          %v5062 = vunpack.c.l.s4 1983009808
          %v5063 = vunpack.c.0.s8 %v5062
          %v5064 = vlaneseq
          %v5065 = vshrl.u32 %v5064, 7
          %v5066 = vsub.s32 %v5063, %v5065
          %v5067 = vrot.slane %v5059, %v5066
          %v5069 = vunpack.c.l.s4 1983009808
          %v5070 = vunpack.c.0.s8 %v5069
          %v5071 = vlaneseq
          %v5072 = vshrl.u32 %v5071, 7
          %v5073 = vsub.s32 %v5070, %v5072
          %v5074 = vrot.slane %v5060, %v5073
          %v5075 = vcombine.low %v5067, %v5074
          %v5076 = vcombine.low %v3995, %v4003
          %v5077 = vcombine.low %v4002, %v4004
          %v5079 = vunpack.c.l.s4 1983009808
          %v5080 = vunpack.c.0.s8 %v5079
          %v5081 = vlaneseq
          %v5082 = vshrl.u32 %v5081, 7
          %v5083 = vsub.s32 %v5080, %v5082
          %v5084 = vrot.slane %v5076, %v5083
          %v5086 = vunpack.c.l.s4 1983009808
          %v5087 = vunpack.c.0.s8 %v5086
          %v5088 = vlaneseq
          %v5089 = vshrl.u32 %v5088, 7
          %v5090 = vsub.s32 %v5087, %v5089
          %v5091 = vrot.slane %v5077, %v5090
          %v5092 = vcombine.low %v5084, %v5091
          %v5093 = vcombine.low %v4012, %v4020
          %v5094 = vcombine.low %v4019, %v4021
          %v5096 = vunpack.c.l.s4 1983009808
          %v5097 = vunpack.c.0.s8 %v5096
          %v5098 = vlaneseq
          %v5099 = vshrl.u32 %v5098, 7
          %v5100 = vsub.s32 %v5097, %v5099
          %v5101 = vrot.slane %v5093, %v5100
          %v5103 = vunpack.c.l.s4 1983009808
          %v5104 = vunpack.c.0.s8 %v5103
          %v5105 = vlaneseq
          %v5106 = vshrl.u32 %v5105, 7
          %v5107 = vsub.s32 %v5104, %v5106
          %v5108 = vrot.slane %v5094, %v5107
          %v5109 = vcombine.low %v5101, %v5108
          %v5110 = vcombine.low %v4029, %v4037
          %v5111 = vcombine.low %v4036, %v4038
          %v5113 = vunpack.c.l.s4 1983009808
          %v5114 = vunpack.c.0.s8 %v5113
          %v5115 = vlaneseq
          %v5116 = vshrl.u32 %v5115, 7
          %v5117 = vsub.s32 %v5114, %v5116
          %v5118 = vrot.slane %v5110, %v5117
          %v5120 = vunpack.c.l.s4 1983009808
          %v5121 = vunpack.c.0.s8 %v5120
          %v5122 = vlaneseq
          %v5123 = vshrl.u32 %v5122, 7
          %v5124 = vsub.s32 %v5121, %v5123
          %v5125 = vrot.slane %v5111, %v5124
          %v5126 = vcombine.low %v5118, %v5125
          %v5127 = vcombine.low %v4046, %v4054
          %v5128 = vcombine.low %v4053, %v4055
          %v5130 = vunpack.c.l.s4 1983009808
          %v5131 = vunpack.c.0.s8 %v5130
          %v5132 = vlaneseq
          %v5133 = vshrl.u32 %v5132, 7
          %v5134 = vsub.s32 %v5131, %v5133
          %v5135 = vrot.slane %v5127, %v5134
          %v5137 = vunpack.c.l.s4 1983009808
          %v5138 = vunpack.c.0.s8 %v5137
          %v5139 = vlaneseq
          %v5140 = vshrl.u32 %v5139, 7
          %v5141 = vsub.s32 %v5138, %v5140
          %v5142 = vrot.slane %v5128, %v5141
          %v5143 = vcombine.low %v5135, %v5142
          %v5144 = vcombine.low %v4063, %v4071
          %v5145 = vcombine.low %v4070, %v4072
          %v5147 = vunpack.c.l.s4 1983009808
          %v5148 = vunpack.c.0.s8 %v5147
          %v5149 = vlaneseq
          %v5150 = vshrl.u32 %v5149, 7
          %v5151 = vsub.s32 %v5148, %v5150
          %v5152 = vrot.slane %v5144, %v5151
          %v5154 = vunpack.c.l.s4 1983009808
          %v5155 = vunpack.c.0.s8 %v5154
          %v5156 = vlaneseq
          %v5157 = vshrl.u32 %v5156, 7
          %v5158 = vsub.s32 %v5155, %v5157
          %v5159 = vrot.slane %v5145, %v5158
          %v5160 = vcombine.low %v5152, %v5159
          %v5161 = vcombine.low %v4080, %v4088
          %v5162 = vcombine.low %v4087, %v4089
          %v5164 = vunpack.c.l.s4 1983009808
          %v5165 = vunpack.c.0.s8 %v5164
          %v5166 = vlaneseq
          %v5167 = vshrl.u32 %v5166, 7
          %v5168 = vsub.s32 %v5165, %v5167
          %v5169 = vrot.slane %v5161, %v5168
          %v5171 = vunpack.c.l.s4 1983009808
          %v5172 = vunpack.c.0.s8 %v5171
          %v5173 = vlaneseq
          %v5174 = vshrl.u32 %v5173, 7
          %v5175 = vsub.s32 %v5172, %v5174
          %v5176 = vrot.slane %v5162, %v5175
          %v5177 = vcombine.low %v5169, %v5176
          %v5178 = vcombine.low %v4097, %v4105
          %v5179 = vcombine.low %v4104, %v4106
          %v5181 = vunpack.c.l.s4 1983009808
          %v5182 = vunpack.c.0.s8 %v5181
          %v5183 = vlaneseq
          %v5184 = vshrl.u32 %v5183, 7
          %v5185 = vsub.s32 %v5182, %v5184
          %v5186 = vrot.slane %v5178, %v5185
          %v5188 = vunpack.c.l.s4 1983009808
          %v5189 = vunpack.c.0.s8 %v5188
          %v5190 = vlaneseq
          %v5191 = vshrl.u32 %v5190, 7
          %v5192 = vsub.s32 %v5189, %v5191
          %v5193 = vrot.slane %v5179, %v5192
          %v5194 = vcombine.low %v5186, %v5193
          %v5195 = vcombine.low %v4114, %v4122
          %v5196 = vcombine.low %v4121, %v4123
          %v5198 = vunpack.c.l.s4 1983009808
          %v5199 = vunpack.c.0.s8 %v5198
          %v5200 = vlaneseq
          %v5201 = vshrl.u32 %v5200, 7
          %v5202 = vsub.s32 %v5199, %v5201
          %v5203 = vrot.slane %v5195, %v5202
          %v5205 = vunpack.c.l.s4 1983009808
          %v5206 = vunpack.c.0.s8 %v5205
          %v5207 = vlaneseq
          %v5208 = vshrl.u32 %v5207, 7
          %v5209 = vsub.s32 %v5206, %v5208
          %v5210 = vrot.slane %v5196, %v5209
          %v5211 = vcombine.low %v5203, %v5210
          %5212 = vset.pattern.permute.xlu0 0
          %5213 = vperm.xlu0 %5212, %v4140
          %v5214 = vpop.permute.xlu0 %5213
          %5215 = vset.pattern.permute.xlu0 0
          %5216 = vperm.xlu0 %5215, %v4157
          %v5217 = vpop.permute.xlu0 %5216
          %5218 = vset.pattern.permute.xlu0 0
          %5219 = vperm.xlu0 %5218, %v4174
          %v5220 = vpop.permute.xlu0 %5219
          %5221 = vset.pattern.permute.xlu0 0
          %5222 = vperm.xlu0 %5221, %v4191
          %v5223 = vpop.permute.xlu0 %5222
          %5224 = vset.pattern.permute.xlu0 0
          %5225 = vperm.xlu0 %5224, %v4208
          %v5226 = vpop.permute.xlu0 %5225
          %5227 = vset.pattern.permute.xlu0 0
          %5228 = vperm.xlu0 %5227, %v4225
          %v5229 = vpop.permute.xlu0 %5228
          %5230 = vset.pattern.permute.xlu0 0
          %5231 = vperm.xlu0 %5230, %v4242
          %v5232 = vpop.permute.xlu0 %5231
          %5233 = vset.pattern.permute.xlu0 0
          %5234 = vperm.xlu0 %5233, %v4259
          %v5235 = vpop.permute.xlu0 %5234
          %5236 = vset.pattern.permute.xlu0 0
          %5237 = vperm.xlu0 %5236, %v4276
          %v5238 = vpop.permute.xlu0 %5237
          %5239 = vset.pattern.permute.xlu0 0
          %5240 = vperm.xlu0 %5239, %v4293
          %v5241 = vpop.permute.xlu0 %5240
          %5242 = vset.pattern.permute.xlu0 0
          %5243 = vperm.xlu0 %5242, %v4310
          %v5244 = vpop.permute.xlu0 %5243
          %5245 = vset.pattern.permute.xlu0 0
          %5246 = vperm.xlu0 %5245, %v4327
          %v5247 = vpop.permute.xlu0 %5246
          %5248 = vset.pattern.permute.xlu0 0
          %5249 = vperm.xlu0 %5248, %v4344
          %v5250 = vpop.permute.xlu0 %5249
          %5251 = vset.pattern.permute.xlu0 0
          %5252 = vperm.xlu0 %5251, %v4361
          %v5253 = vpop.permute.xlu0 %5252
          %5254 = vset.pattern.permute.xlu0 0
          %5255 = vperm.xlu0 %5254, %v4378
          %v5256 = vpop.permute.xlu0 %5255
          %5257 = vset.pattern.permute.xlu0 0
          %5258 = vperm.xlu0 %5257, %v4395
          %v5259 = vpop.permute.xlu0 %5258
          %5260 = vset.pattern.permute.xlu0 0
          %5261 = vperm.xlu0 %5260, %v4412
          %v5262 = vpop.permute.xlu0 %5261
          %5263 = vset.pattern.permute.xlu0 0
          %5264 = vperm.xlu0 %5263, %v4429
          %v5265 = vpop.permute.xlu0 %5264
          %5266 = vset.pattern.permute.xlu0 0
          %5267 = vperm.xlu0 %5266, %v4446
          %v5268 = vpop.permute.xlu0 %5267
          %5269 = vset.pattern.permute.xlu0 0
          %5270 = vperm.xlu0 %5269, %v4463
          %v5271 = vpop.permute.xlu0 %5270
          %5272 = vset.pattern.permute.xlu0 0
          %5273 = vperm.xlu0 %5272, %v4480
          %v5274 = vpop.permute.xlu0 %5273
          %5275 = vset.pattern.permute.xlu0 0
          %5276 = vperm.xlu0 %5275, %v4497
          %v5277 = vpop.permute.xlu0 %5276
          %5278 = vset.pattern.permute.xlu0 0
          %5279 = vperm.xlu0 %5278, %v4514
          %v5280 = vpop.permute.xlu0 %5279
          %5281 = vset.pattern.permute.xlu0 0
          %5282 = vperm.xlu0 %5281, %v4531
          %v5283 = vpop.permute.xlu0 %5282
          %5284 = vset.pattern.permute.xlu0 0
          %5285 = vperm.xlu0 %5284, %v4548
          %v5286 = vpop.permute.xlu0 %5285
          %5287 = vset.pattern.permute.xlu0 0
          %5288 = vperm.xlu0 %5287, %v4565
          %v5289 = vpop.permute.xlu0 %5288
          %5290 = vset.pattern.permute.xlu0 0
          %5291 = vperm.xlu0 %5290, %v4582
          %v5292 = vpop.permute.xlu0 %5291
          %5293 = vset.pattern.permute.xlu0 0
          %5294 = vperm.xlu0 %5293, %v4599
          %v5295 = vpop.permute.xlu0 %5294
          %5296 = vset.pattern.permute.xlu0 0
          %5297 = vperm.xlu0 %5296, %v4616
          %v5298 = vpop.permute.xlu0 %5297
          %5299 = vset.pattern.permute.xlu0 0
          %5300 = vperm.xlu0 %5299, %v4633
          %v5301 = vpop.permute.xlu0 %5300
          %5302 = vset.pattern.permute.xlu0 0
          %5303 = vperm.xlu0 %5302, %v4650
          %v5304 = vpop.permute.xlu0 %5303
          %5305 = vset.pattern.permute.xlu0 0
          %5306 = vperm.xlu0 %5305, %v4667
          %v5307 = vpop.permute.xlu0 %5306
          %5308 = vset.pattern.permute.xlu0 0
          %5309 = vperm.xlu0 %5308, %v4684
          %v5310 = vpop.permute.xlu0 %5309
          %5311 = vset.pattern.permute.xlu0 0
          %5312 = vperm.xlu0 %5311, %v4701
          %v5313 = vpop.permute.xlu0 %5312
          %5314 = vset.pattern.permute.xlu0 0
          %5315 = vperm.xlu0 %5314, %v4718
          %v5316 = vpop.permute.xlu0 %5315
          %5317 = vset.pattern.permute.xlu0 0
          %5318 = vperm.xlu0 %5317, %v4735
          %v5319 = vpop.permute.xlu0 %5318
          %5320 = vset.pattern.permute.xlu0 0
          %5321 = vperm.xlu0 %5320, %v4752
          %v5322 = vpop.permute.xlu0 %5321
          %5323 = vset.pattern.permute.xlu0 0
          %5324 = vperm.xlu0 %5323, %v4769
          %v5325 = vpop.permute.xlu0 %5324
          %5326 = vset.pattern.permute.xlu0 0
          %5327 = vperm.xlu0 %5326, %v4786
          %v5328 = vpop.permute.xlu0 %5327
          %5329 = vset.pattern.permute.xlu0 0
          %5330 = vperm.xlu0 %5329, %v4803
          %v5331 = vpop.permute.xlu0 %5330
          %5332 = vset.pattern.permute.xlu0 0
          %5333 = vperm.xlu0 %5332, %v4820
          %v5334 = vpop.permute.xlu0 %5333
          %5335 = vset.pattern.permute.xlu0 0
          %5336 = vperm.xlu0 %5335, %v4837
          %v5337 = vpop.permute.xlu0 %5336
          %5338 = vset.pattern.permute.xlu0 0
          %5339 = vperm.xlu0 %5338, %v4854
          %v5340 = vpop.permute.xlu0 %5339
          %5341 = vset.pattern.permute.xlu0 0
          %5342 = vperm.xlu0 %5341, %v4871
          %v5343 = vpop.permute.xlu0 %5342
          %5344 = vset.pattern.permute.xlu0 0
          %5345 = vperm.xlu0 %5344, %v4888
          %v5346 = vpop.permute.xlu0 %5345
          %5347 = vset.pattern.permute.xlu0 0
          %5348 = vperm.xlu0 %5347, %v4905
          %v5349 = vpop.permute.xlu0 %5348
          %5350 = vset.pattern.permute.xlu0 0
          %5351 = vperm.xlu0 %5350, %v4922
          %v5352 = vpop.permute.xlu0 %5351
          %5353 = vset.pattern.permute.xlu0 0
          %5354 = vperm.xlu0 %5353, %v4939
          %v5355 = vpop.permute.xlu0 %5354
          %5356 = vset.pattern.permute.xlu0 0
          %5357 = vperm.xlu0 %5356, %v4956
          %v5358 = vpop.permute.xlu0 %5357
          %5359 = vset.pattern.permute.xlu0 0
          %5360 = vperm.xlu0 %5359, %v4973
          %v5361 = vpop.permute.xlu0 %5360
          %5362 = vset.pattern.permute.xlu0 0
          %5363 = vperm.xlu0 %5362, %v4990
          %v5364 = vpop.permute.xlu0 %5363
          %5365 = vset.pattern.permute.xlu0 0
          %5366 = vperm.xlu0 %5365, %v5007
          %v5367 = vpop.permute.xlu0 %5366
          %5368 = vset.pattern.permute.xlu0 0
          %5369 = vperm.xlu0 %5368, %v5024
          %v5370 = vpop.permute.xlu0 %5369
          %5371 = vset.pattern.permute.xlu0 0
          %5372 = vperm.xlu0 %5371, %v5041
          %v5373 = vpop.permute.xlu0 %5372
          %5374 = vset.pattern.permute.xlu0 0
          %5375 = vperm.xlu0 %5374, %v5058
          %v5376 = vpop.permute.xlu0 %5375
          %5377 = vset.pattern.permute.xlu0 0
          %5378 = vperm.xlu0 %5377, %v5075
          %v5379 = vpop.permute.xlu0 %5378
          %5380 = vset.pattern.permute.xlu0 0
          %5381 = vperm.xlu0 %5380, %v5092
          %v5382 = vpop.permute.xlu0 %5381
          %5383 = vset.pattern.permute.xlu0 0
          %5384 = vperm.xlu0 %5383, %v5109
          %v5385 = vpop.permute.xlu0 %5384
          %5386 = vset.pattern.permute.xlu0 0
          %5387 = vperm.xlu0 %5386, %v5126
          %v5388 = vpop.permute.xlu0 %5387
          %5389 = vset.pattern.permute.xlu0 0
          %5390 = vperm.xlu0 %5389, %v5143
          %v5391 = vpop.permute.xlu0 %5390
          %5392 = vset.pattern.permute.xlu0 0
          %5393 = vperm.xlu0 %5392, %v5160
          %v5394 = vpop.permute.xlu0 %5393
          %5395 = vset.pattern.permute.xlu0 0
          %5396 = vperm.xlu0 %5395, %v5177
          %v5397 = vpop.permute.xlu0 %5396
          %5398 = vset.pattern.permute.xlu0 0
          %5399 = vperm.xlu0 %5398, %v5194
          %v5400 = vpop.permute.xlu0 %5399
          %5401 = vset.pattern.permute.xlu0 0
          %5402 = vperm.xlu0 %5401, %v5211
          %v5403 = vpop.permute.xlu0 %5402
          %v5404 = vlaneseq
          %v5405 = vshrl.u32 %v5404, 7
          %v5406 = vsub.s32 %v826, %v5405
          %v5407 = vrot.slane %v5214, %v5406
          %v5408 = vadd.s32 %v826, 4294967288
          %v5409 = vlaneseq
          %v5410 = vshrl.u32 %v5409, 7
          %v5411 = vsub.s32 %v5408, %v5410
          %v5412 = vrot.slane %v5217, %v5411
          %vm5413 = vcmask 130112
          %v5414 = vsel %vm5413, %v5412, %v5407
          %v5415 = vadd.s32 %v826, 4294967280
          %v5416 = vlaneseq
          %v5417 = vshrl.u32 %v5416, 7
          %v5418 = vsub.s32 %v5415, %v5417
          %v5419 = vrot.slane %v5220, %v5418
          %vm5420 = vcmask 195712
          %v5421 = vsel %vm5420, %v5419, %v5414
          %v5422 = vadd.s32 %v826, 4294967272
          %v5423 = vlaneseq
          %v5424 = vshrl.u32 %v5423, 7
          %v5425 = vsub.s32 %v5422, %v5424
          %v5426 = vrot.slane %v5223, %v5425
          %vm5427 = vcmask 261312
          %v5428 = vsel %vm5427, %v5426, %v5421
          %v5429 = vadd.s32 %v826, 4294967264
          %v5430 = vlaneseq
          %v5431 = vshrl.u32 %v5430, 7
          %v5432 = vsub.s32 %v5429, %v5431
          %v5433 = vrot.slane %v5226, %v5432
          %vm5434 = vcmask 326912
          %v5435 = vsel %vm5434, %v5433, %v5428
          %v5436 = vadd.s32 %v826, 4294967256
          %v5437 = vlaneseq
          %v5438 = vshrl.u32 %v5437, 7
          %v5439 = vsub.s32 %v5436, %v5438
          %v5440 = vrot.slane %v5229, %v5439
          %vm5441 = vcmask 392512
          %v5442 = vsel %vm5441, %v5440, %v5435
          %v5443 = vadd.s32 %v826, 4294967248
          %v5444 = vlaneseq
          %v5445 = vshrl.u32 %v5444, 7
          %v5446 = vsub.s32 %v5443, %v5445
          %v5447 = vrot.slane %v5232, %v5446
          %vm5448 = vcmask 458112
          %v5449 = vsel %vm5448, %v5447, %v5442
          %v5450 = vadd.s32 %v826, 4294967240
          %v5451 = vlaneseq
          %v5452 = vshrl.u32 %v5451, 7
          %v5453 = vsub.s32 %v5450, %v5452
          %v5454 = vrot.slane %v5235, %v5453
          %vm5455 = vcmask 523712
          %v5456 = vsel %vm5455, %v5454, %v5449
          %v5457 = vadd.s32 %v826, 4294967232
          %v5458 = vlaneseq
          %v5459 = vshrl.u32 %v5458, 7
          %v5460 = vsub.s32 %v5457, %v5459
          %v5461 = vrot.slane %v5238, %v5460
          %vm5462 = vcmask 589312
          %v5463 = vsel %vm5462, %v5461, %v5456
          %v5464 = vadd.s32 %v826, 4294967224
          %v5465 = vlaneseq
          %v5466 = vshrl.u32 %v5465, 7
          %v5467 = vsub.s32 %v5464, %v5466
          %v5468 = vrot.slane %v5241, %v5467
          %vm5469 = vcmask 654912
          %v5470 = vsel %vm5469, %v5468, %v5463
          %v5471 = vadd.s32 %v826, 4294967216
          %v5472 = vlaneseq
          %v5473 = vshrl.u32 %v5472, 7
          %v5474 = vsub.s32 %v5471, %v5473
          %v5475 = vrot.slane %v5244, %v5474
          %vm5476 = vcmask 720512
          %v5477 = vsel %vm5476, %v5475, %v5470
          %v5478 = vadd.s32 %v826, 4294967208
          %v5479 = vlaneseq
          %v5480 = vshrl.u32 %v5479, 7
          %v5481 = vsub.s32 %v5478, %v5480
          %v5482 = vrot.slane %v5247, %v5481
          %vm5483 = vcmask 786112
          %v5484 = vsel %vm5483, %v5482, %v5477
          %v5485 = vadd.s32 %v826, 4294967200
          %v5486 = vlaneseq
          %v5487 = vshrl.u32 %v5486, 7
          %v5488 = vsub.s32 %v5485, %v5487
          %v5489 = vrot.slane %v5250, %v5488
          %vm5490 = vcmask 851712
          %v5491 = vsel %vm5490, %v5489, %v5484
          %v5492 = vadd.s32 %v826, 4294967192
          %v5493 = vlaneseq
          %v5494 = vshrl.u32 %v5493, 7
          %v5495 = vsub.s32 %v5492, %v5494
          %v5496 = vrot.slane %v5253, %v5495
          %vm5497 = vcmask 917312
          %v5498 = vsel %vm5497, %v5496, %v5491
          %v5499 = vadd.s32 %v826, 4294967184
          %v5500 = vlaneseq
          %v5501 = vshrl.u32 %v5500, 7
          %v5502 = vsub.s32 %v5499, %v5501
          %v5503 = vrot.slane %v5256, %v5502
          %vm5504 = vcmask 982912
          %v5505 = vsel %vm5504, %v5503, %v5498
          %v5506 = vadd.s32 %v826, 4294967176
          %v5507 = vlaneseq
          %v5508 = vshrl.u32 %v5507, 7
          %v5509 = vsub.s32 %v5506, %v5508
          %v5510 = vrot.slane %v5259, %v5509
          %vm5511 = vcmask 1048512
          %v5512 = vsel %vm5511, %v5510, %v5505
          %v5513 = vlaneseq
          %v5514 = vshrl.u32 %v5513, 7
          %v5515 = vsub.s32 %v826, %v5514
          %v5516 = vrot.slane %v5262, %v5515
          %v5517 = vlaneseq
          %v5518 = vshrl.u32 %v5517, 7
          %v5519 = vsub.s32 %v5408, %v5518
          %v5520 = vrot.slane %v5265, %v5519
          %v5521 = vsel %vm5413, %v5520, %v5516
          %v5522 = vlaneseq
          %v5523 = vshrl.u32 %v5522, 7
          %v5524 = vsub.s32 %v5415, %v5523
          %v5525 = vrot.slane %v5268, %v5524
          %v5526 = vsel %vm5420, %v5525, %v5521
          %v5527 = vlaneseq
          %v5528 = vshrl.u32 %v5527, 7
          %v5529 = vsub.s32 %v5422, %v5528
          %v5530 = vrot.slane %v5271, %v5529
          %v5531 = vsel %vm5427, %v5530, %v5526
          %v5532 = vlaneseq
          %v5533 = vshrl.u32 %v5532, 7
          %v5534 = vsub.s32 %v5429, %v5533
          %v5535 = vrot.slane %v5274, %v5534
          %v5536 = vsel %vm5434, %v5535, %v5531
          %v5537 = vlaneseq
          %v5538 = vshrl.u32 %v5537, 7
          %v5539 = vsub.s32 %v5436, %v5538
          %v5540 = vrot.slane %v5277, %v5539
          %v5541 = vsel %vm5441, %v5540, %v5536
          %v5542 = vlaneseq
          %v5543 = vshrl.u32 %v5542, 7
          %v5544 = vsub.s32 %v5443, %v5543
          %v5545 = vrot.slane %v5280, %v5544
          %v5546 = vsel %vm5448, %v5545, %v5541
          %v5547 = vlaneseq
          %v5548 = vshrl.u32 %v5547, 7
          %v5549 = vsub.s32 %v5450, %v5548
          %v5550 = vrot.slane %v5283, %v5549
          %v5551 = vsel %vm5455, %v5550, %v5546
          %v5552 = vlaneseq
          %v5553 = vshrl.u32 %v5552, 7
          %v5554 = vsub.s32 %v5457, %v5553
          %v5555 = vrot.slane %v5286, %v5554
          %v5556 = vsel %vm5462, %v5555, %v5551
          %v5557 = vlaneseq
          %v5558 = vshrl.u32 %v5557, 7
          %v5559 = vsub.s32 %v5464, %v5558
          %v5560 = vrot.slane %v5289, %v5559
          %v5561 = vsel %vm5469, %v5560, %v5556
          %v5562 = vlaneseq
          %v5563 = vshrl.u32 %v5562, 7
          %v5564 = vsub.s32 %v5471, %v5563
          %v5565 = vrot.slane %v5292, %v5564
          %v5566 = vsel %vm5476, %v5565, %v5561
          %v5567 = vlaneseq
          %v5568 = vshrl.u32 %v5567, 7
          %v5569 = vsub.s32 %v5478, %v5568
          %v5570 = vrot.slane %v5295, %v5569
          %v5571 = vsel %vm5483, %v5570, %v5566
          %v5572 = vlaneseq
          %v5573 = vshrl.u32 %v5572, 7
          %v5574 = vsub.s32 %v5485, %v5573
          %v5575 = vrot.slane %v5298, %v5574
          %v5576 = vsel %vm5490, %v5575, %v5571
          %v5577 = vlaneseq
          %v5578 = vshrl.u32 %v5577, 7
          %v5579 = vsub.s32 %v5492, %v5578
          %v5580 = vrot.slane %v5301, %v5579
          %v5581 = vsel %vm5497, %v5580, %v5576
          %v5582 = vlaneseq
          %v5583 = vshrl.u32 %v5582, 7
          %v5584 = vsub.s32 %v5499, %v5583
          %v5585 = vrot.slane %v5304, %v5584
          %v5586 = vsel %vm5504, %v5585, %v5581
          %v5587 = vlaneseq
          %v5588 = vshrl.u32 %v5587, 7
          %v5589 = vsub.s32 %v5506, %v5588
          %v5590 = vrot.slane %v5307, %v5589
          %v5591 = vsel %vm5511, %v5590, %v5586
          %v5592 = vlaneseq
          %v5593 = vshrl.u32 %v5592, 7
          %v5594 = vsub.s32 %v826, %v5593
          %v5595 = vrot.slane %v5310, %v5594
          %v5596 = vlaneseq
          %v5597 = vshrl.u32 %v5596, 7
          %v5598 = vsub.s32 %v5408, %v5597
          %v5599 = vrot.slane %v5313, %v5598
          %v5600 = vsel %vm5413, %v5599, %v5595
          %v5601 = vlaneseq
          %v5602 = vshrl.u32 %v5601, 7
          %v5603 = vsub.s32 %v5415, %v5602
          %v5604 = vrot.slane %v5316, %v5603
          %v5605 = vsel %vm5420, %v5604, %v5600
          %v5606 = vlaneseq
          %v5607 = vshrl.u32 %v5606, 7
          %v5608 = vsub.s32 %v5422, %v5607
          %v5609 = vrot.slane %v5319, %v5608
          %v5610 = vsel %vm5427, %v5609, %v5605
          %v5611 = vlaneseq
          %v5612 = vshrl.u32 %v5611, 7
          %v5613 = vsub.s32 %v5429, %v5612
          %v5614 = vrot.slane %v5322, %v5613
          %v5615 = vsel %vm5434, %v5614, %v5610
          %v5616 = vlaneseq
          %v5617 = vshrl.u32 %v5616, 7
          %v5618 = vsub.s32 %v5436, %v5617
          %v5619 = vrot.slane %v5325, %v5618
          %v5620 = vsel %vm5441, %v5619, %v5615
          %v5621 = vlaneseq
          %v5622 = vshrl.u32 %v5621, 7
          %v5623 = vsub.s32 %v5443, %v5622
          %v5624 = vrot.slane %v5328, %v5623
          %v5625 = vsel %vm5448, %v5624, %v5620
          %v5626 = vlaneseq
          %v5627 = vshrl.u32 %v5626, 7
          %v5628 = vsub.s32 %v5450, %v5627
          %v5629 = vrot.slane %v5331, %v5628
          %v5630 = vsel %vm5455, %v5629, %v5625
          %v5631 = vlaneseq
          %v5632 = vshrl.u32 %v5631, 7
          %v5633 = vsub.s32 %v5457, %v5632
          %v5634 = vrot.slane %v5334, %v5633
          %v5635 = vsel %vm5462, %v5634, %v5630
          %v5636 = vlaneseq
          %v5637 = vshrl.u32 %v5636, 7
          %v5638 = vsub.s32 %v5464, %v5637
          %v5639 = vrot.slane %v5337, %v5638
          %v5640 = vsel %vm5469, %v5639, %v5635
          %v5641 = vlaneseq
          %v5642 = vshrl.u32 %v5641, 7
          %v5643 = vsub.s32 %v5471, %v5642
          %v5644 = vrot.slane %v5340, %v5643
          %v5645 = vsel %vm5476, %v5644, %v5640
          %v5646 = vlaneseq
          %v5647 = vshrl.u32 %v5646, 7
          %v5648 = vsub.s32 %v5478, %v5647
          %v5649 = vrot.slane %v5343, %v5648
          %v5650 = vsel %vm5483, %v5649, %v5645
          %v5651 = vlaneseq
          %v5652 = vshrl.u32 %v5651, 7
          %v5653 = vsub.s32 %v5485, %v5652
          %v5654 = vrot.slane %v5346, %v5653
          %v5655 = vsel %vm5490, %v5654, %v5650
          %v5656 = vlaneseq
          %v5657 = vshrl.u32 %v5656, 7
          %v5658 = vsub.s32 %v5492, %v5657
          %v5659 = vrot.slane %v5349, %v5658
          %v5660 = vsel %vm5497, %v5659, %v5655
          %v5661 = vlaneseq
          %v5662 = vshrl.u32 %v5661, 7
          %v5663 = vsub.s32 %v5499, %v5662
          %v5664 = vrot.slane %v5352, %v5663
          %v5665 = vsel %vm5504, %v5664, %v5660
          %v5666 = vlaneseq
          %v5667 = vshrl.u32 %v5666, 7
          %v5668 = vsub.s32 %v5506, %v5667
          %v5669 = vrot.slane %v5355, %v5668
          %v5670 = vsel %vm5511, %v5669, %v5665
          %v5671 = vlaneseq
          %v5672 = vshrl.u32 %v5671, 7
          %v5673 = vsub.s32 %v826, %v5672
          %v5674 = vrot.slane %v5358, %v5673
          %v5675 = vlaneseq
          %v5676 = vshrl.u32 %v5675, 7
          %v5677 = vsub.s32 %v5408, %v5676
          %v5678 = vrot.slane %v5361, %v5677
          %v5679 = vsel %vm5413, %v5678, %v5674
          %v5680 = vlaneseq
          %v5681 = vshrl.u32 %v5680, 7
          %v5682 = vsub.s32 %v5415, %v5681
          %v5683 = vrot.slane %v5364, %v5682
          %v5684 = vsel %vm5420, %v5683, %v5679
          %v5685 = vlaneseq
          %v5686 = vshrl.u32 %v5685, 7
          %v5687 = vsub.s32 %v5422, %v5686
          %v5688 = vrot.slane %v5367, %v5687
          %v5689 = vsel %vm5427, %v5688, %v5684
          %v5690 = vlaneseq
          %v5691 = vshrl.u32 %v5690, 7
          %v5692 = vsub.s32 %v5429, %v5691
          %v5693 = vrot.slane %v5370, %v5692
          %v5694 = vsel %vm5434, %v5693, %v5689
          %v5695 = vlaneseq
          %v5696 = vshrl.u32 %v5695, 7
          %v5697 = vsub.s32 %v5436, %v5696
          %v5698 = vrot.slane %v5373, %v5697
          %v5699 = vsel %vm5441, %v5698, %v5694
          %v5700 = vlaneseq
          %v5701 = vshrl.u32 %v5700, 7
          %v5702 = vsub.s32 %v5443, %v5701
          %v5703 = vrot.slane %v5376, %v5702
          %v5704 = vsel %vm5448, %v5703, %v5699
          %v5705 = vlaneseq
          %v5706 = vshrl.u32 %v5705, 7
          %v5707 = vsub.s32 %v5450, %v5706
          %v5708 = vrot.slane %v5379, %v5707
          %v5709 = vsel %vm5455, %v5708, %v5704
          %v5710 = vlaneseq
          %v5711 = vshrl.u32 %v5710, 7
          %v5712 = vsub.s32 %v5457, %v5711
          %v5713 = vrot.slane %v5382, %v5712
          %v5714 = vsel %vm5462, %v5713, %v5709
          %v5715 = vlaneseq
          %v5716 = vshrl.u32 %v5715, 7
          %v5717 = vsub.s32 %v5464, %v5716
          %v5718 = vrot.slane %v5385, %v5717
          %v5719 = vsel %vm5469, %v5718, %v5714
          %v5720 = vlaneseq
          %v5721 = vshrl.u32 %v5720, 7
          %v5722 = vsub.s32 %v5471, %v5721
          %v5723 = vrot.slane %v5388, %v5722
          %v5724 = vsel %vm5476, %v5723, %v5719
          %v5725 = vlaneseq
          %v5726 = vshrl.u32 %v5725, 7
          %v5727 = vsub.s32 %v5478, %v5726
          %v5728 = vrot.slane %v5391, %v5727
          %v5729 = vsel %vm5483, %v5728, %v5724
          %v5730 = vlaneseq
          %v5731 = vshrl.u32 %v5730, 7
          %v5732 = vsub.s32 %v5485, %v5731
          %v5733 = vrot.slane %v5394, %v5732
          %v5734 = vsel %vm5490, %v5733, %v5729
          %v5735 = vlaneseq
          %v5736 = vshrl.u32 %v5735, 7
          %v5737 = vsub.s32 %v5492, %v5736
          %v5738 = vrot.slane %v5397, %v5737
          %v5739 = vsel %vm5497, %v5738, %v5734
          %v5740 = vlaneseq
          %v5741 = vshrl.u32 %v5740, 7
          %v5742 = vsub.s32 %v5499, %v5741
          %v5743 = vrot.slane %v5400, %v5742
          %v5744 = vsel %vm5504, %v5743, %v5739
          %v5745 = vlaneseq
          %v5746 = vshrl.u32 %v5745, 7
          %v5747 = vsub.s32 %v5506, %v5746
          %v5748 = vrot.slane %v5403, %v5747
          %v5749 = vsel %vm5511, %v5748, %v5744
          %v5750 = vsel %vm265, %v5670, %v5512
          %v5751 = vsel %vm265, %v5749, %v5591
          %v5752 = vcombine.low %v5750, %v5751
          %v5754 = vunpack.c.l.s4 1983009808
          %v5755 = vunpack.c.0.s8 %v5754
          %v5756 = vlaneseq
          %v5757 = vshrl.u32 %v5756, 7
          %v5758 = vsub.s32 %v5755, %v5757
          %v5759 = vrot.slane %v5752, %v5758
          %5761 = vst [vmem:[#allocation4] sm:$0xf] %v5759
        $region63: #{tpu_custom_call.1} parent=50 // pred_fallthru
          _
        // Predicated region
        $region64: #{tpu_custom_call.1} parent=50 // pred_check
          %p5762 = pneg %p115
        $region65: #{tpu_custom_call.1} parent=50 // pred_check_branch
          %5764 = sbr.rel (%p5762) target = $region67
        $region66: #{tpu_custom_call.1} parent=50 // pred_region
          %s5766 = ssub.s32 64, 64
          %5767 = vsyncadd [#allocation5], %s5766
          %s5768 = smul.addr %s19, 2
          %s5769 = smul.addr %s5768, 32
          %s5770 = scalar_lea.hbm %s3, %s5769
          %s5772 = sshll.u32 [#allocation4], 4
          %s5773 = int_to_ptr.vmem [resolvable:$true] %s5772
          %5775 = dma.vmem_to_hbm [thread:$0]  %s5773, 64, %s5770, [#allocation5]
        $region67: #{tpu_custom_call.1} parent=50 // pred_fallthru
          _
        // Predicated region
        $region68: #{tpu_custom_call.1} parent=50 // pred_check
          %p5776 = pneg %p115
        $region69: #{tpu_custom_call.1} parent=50 // pred_check_branch
          %5778 = sbr.rel (%p5776) target = $region71
        $region70: #{tpu_custom_call.1} parent=50 // pred_region
          %5779 = dma.done [#allocation5], 64
        $region71: #{tpu_custom_call.1} parent=50 // pred_fallthru
          _
      $region51: #{tpu_custom_call.1} parent=5 // pred_fallthru
        _
      %p5780 = scmp.le.s32.totalorder 2, %s10
      // Predicated region
      $region72: #{tpu_custom_call.1} parent=5 // pred_check
        %p5781 = pneg %p5780
      $region73: #{tpu_custom_call.1} parent=5 // pred_check_branch
        %5783 = sbr.rel (%p5781) target = $region75
      $region74: #{tpu_custom_call.1} parent=5 // pred_region
        %s5784 = ssub.s32 %s10, 2
      $region75: #{tpu_custom_call.1} parent=5 // pred_fallthru
        _
    $region6: #{tpu_custom_call.1} parent=1 // loop_footer
      %s14 = sadd.s32 1, %s10
    $region7: #{tpu_custom_call.1} parent=1 // loop_footer_branch
      %9 = sbr.rel target = $region3
    $region8: #{tpu_custom_call.1} parent=1 // loop_exit
      _
    %5785 = vsyncpa [#allocation5], 1
    %s5786 = scalar_lea.sflag [#allocation5], 1
    %5787 = vsyncpa %s5786, 1

</llo_original>
